<compile_context>
chip_gen: v7x
topology: tpu7x:2x2x1
jax: 0.10.0
libtpu: 0.0.40
codegen_flags: <defaults>
</compile_context>

<pallas_src>
import functools
import math

import jax
import jax.numpy as jnp
from jax import lax
from jax.experimental import pallas as pl
from jax.experimental.pallas import tpu as pltpu


# ----------------------------------------------------------------------------
# Helpers
# ----------------------------------------------------------------------------

_DEF_TILE_N = 1024          # target rows per grid step for pointwise kernels
_VMEM_ROW_BUDGET = 8 << 20  # bytes for the (double-buffered) row-streamed operands


def _round_up(x, m):
    return ((x + m - 1) // m) * m


def _pick_row_tile(n, streamed_cols):
    """Pick a row-tile (multiple of 8) under a VMEM budget; return (tile, n_padded)."""
    per_row = 4 * max(streamed_cols, 1) * 2  # f32, double-buffered
    cap = max(8, _VMEM_ROW_BUDGET // per_row)
    tile = min(_DEF_TILE_N, cap, _round_up(n, 8))
    tile = max(8, (tile // 8) * 8)
    n_pad = _round_up(n, tile)
    return tile, n_pad


def _gelu_exact(x):
    # Matches torch.nn.functional.gelu (erf form, not tanh approximation).
    return 0.5 * x * (1.0 + lax.erf(x / jnp.sqrt(2.0).astype(x.dtype)))


# ----------------------------------------------------------------------------
# Pallas kernels
# ----------------------------------------------------------------------------

def _fc0_kernel(h_ref, g_ref, w_ref, b_ref, o_ref):
    # Fused concat((h, x), -1) + Linear(3, width); cin=3 is handled on the VPU
    # as three broadcast FMAs (avoids a degenerate K=3 MXU pass).
    w = w_ref[...]
    y = (h_ref[...] * w[0:1, :]
         + g_ref[:, 0:1] * w[1:2, :]
         + g_ref[:, 1:2] * w[2:3, :]
         + b_ref[...])
    o_ref[...] = y.astype(o_ref.dtype)


def _wlayer_kernel(x_ref, add_ref, w_ref, b_ref, o_ref, *, apply_gelu):
    # 1x1 conv (per-pixel linear) + residual add of the spectral branch (+ GELU).
    y = jnp.dot(x_ref[...], w_ref[...], preferred_element_type=jnp.float32)
    y = y + b_ref[...] + add_ref[...]
    if apply_gelu:
        y = _gelu_exact(y)
    o_ref[...] = y.astype(o_ref.dtype)


def _head_kernel(x_ref, w1_ref, b1_ref, w2_ref, b2_ref, o_ref):
    # Fused fc1 + GELU + fc2; both weight matrices stay resident in VMEM.
    h = jnp.dot(x_ref[...], w1_ref[...], preferred_element_type=jnp.float32)
    h = _gelu_exact(h + b1_ref[...])
    y = jnp.dot(h, w2_ref[...], preferred_element_type=jnp.float32) + b2_ref[...]
    o_ref[...] = y.astype(o_ref.dtype)


def _spectral_mix_kernel(act_ref, w_ref, o_ref, *, nb, mco):
    # act_ref : (2, 2B, M*ci)   rows = [real; imag], leading dim = corner
    # w_ref   : (2, M*ci, 2*M*co) columns = [Wr | Wi] (block-diagonal over modes)
    # o_ref   : (2, 2B, M*co)   rows = [real out; imag out]
    for c in range(2):
        y = jnp.dot(act_ref[c], w_ref[c], preferred_element_type=jnp.float32)
        yr = y[:nb, :mco] - y[nb:, mco:]   # ar@Wr - ai@Wi
        yi = y[:nb, mco:] + y[nb:, :mco]   # ar@Wi + ai@Wr
        o_ref[c] = jnp.concatenate([yr, yi], axis=0).astype(o_ref.dtype)


# ----------------------------------------------------------------------------
# Pallas wrappers
# ----------------------------------------------------------------------------

def fc0_lift(h, g, w, b):
    """x = Linear(3, width)(cat([h, g], -1)), fused (no HBM concat)."""
    B, S1, S2, ch = h.shape
    cg = g.shape[-1]
    cout = w.shape[1]
    n = B * S1 * S2
    tile, n_pad = _pick_row_tile(n, ch + cg + cout)
    hf = h.reshape(n, ch)
    gf = g.reshape(n, cg)
    if n_pad != n:
        hf = jnp.pad(hf, ((0, n_pad - n), (0, 0)))
        gf = jnp.pad(gf, ((0, n_pad - n), (0, 0)))
    out = pl.pallas_call(
        _fc0_kernel,
        out_shape=jax.ShapeDtypeStruct((n_pad, cout), h.dtype),
        grid_spec=pltpu.PrefetchScalarGridSpec(
            num_scalar_prefetch=0,
            grid=(n_pad // tile,),
            in_specs=[
                pl.BlockSpec((tile, ch), lambda i: (i, 0)),
                pl.BlockSpec((tile, cg), lambda i: (i, 0)),
                pl.BlockSpec((ch + cg, cout), lambda i: (0, 0)),
                pl.BlockSpec((1, cout), lambda i: (0, 0)),
            ],
            out_specs=pl.BlockSpec((tile, cout), lambda i: (i, 0)),
        ),
        compiler_params=pltpu.CompilerParams(dimension_semantics=("parallel",)),
    )(hf, gf, w, b.reshape(1, cout))
    return out[:n].reshape(B, S1, S2, cout)


def w_plus_spectral(x, spec, w, b, apply_gelu):
    """y = act( Conv1x1(x) + spec ) over the flattened point axis."""
    B, S1, S2, cin = x.shape
    cout = w.shape[1]
    n = B * S1 * S2
    tile, n_pad = _pick_row_tile(n, cin + 2 * cout)
    xf = x.reshape(n, cin)
    sf = spec.reshape(n, cout)
    if n_pad != n:
        xf = jnp.pad(xf, ((0, n_pad - n), (0, 0)))
        sf = jnp.pad(sf, ((0, n_pad - n), (0, 0)))
    out = pl.pallas_call(
        functools.partial(_wlayer_kernel, apply_gelu=apply_gelu),
        out_shape=jax.ShapeDtypeStruct((n_pad, cout), x.dtype),
        grid_spec=pltpu.PrefetchScalarGridSpec(
            num_scalar_prefetch=0,
            grid=(n_pad // tile,),
            in_specs=[
                pl.BlockSpec((tile, cin), lambda i: (i, 0)),
                pl.BlockSpec((tile, cout), lambda i: (i, 0)),
                pl.BlockSpec((cin, cout), lambda i: (0, 0)),
                pl.BlockSpec((1, cout), lambda i: (0, 0)),
            ],
            out_specs=pl.BlockSpec((tile, cout), lambda i: (i, 0)),
        ),
        compiler_params=pltpu.CompilerParams(dimension_semantics=("parallel",)),
    )(xf, sf, w, b.reshape(1, cout))
    return out[:n].reshape(B, S1, S2, cout)


def projection_head(x, w1, b1, w2, b2):
    """y = fc2( GELU( fc1(x) ) ) fused per row-tile (no HBM intermediate)."""
    B, S1, S2, cin = x.shape
    chid = w1.shape[1]
    cout = w2.shape[1]
    n = B * S1 * S2
    tile, n_pad = _pick_row_tile(n, cin + cout)
    xf = x.reshape(n, cin)
    if n_pad != n:
        xf = jnp.pad(xf, ((0, n_pad - n), (0, 0)))
    out = pl.pallas_call(
        _head_kernel,
        out_shape=jax.ShapeDtypeStruct((n_pad, cout), x.dtype),
        grid_spec=pltpu.PrefetchScalarGridSpec(
            num_scalar_prefetch=0,
            grid=(n_pad // tile,),
            in_specs=[
                pl.BlockSpec((tile, cin), lambda i: (i, 0)),
                pl.BlockSpec((cin, chid), lambda i: (0, 0)),
                pl.BlockSpec((1, chid), lambda i: (0, 0)),
                pl.BlockSpec((chid, cout), lambda i: (0, 0)),
                pl.BlockSpec((1, cout), lambda i: (0, 0)),
            ],
            out_specs=pl.BlockSpec((tile, cout), lambda i: (i, 0)),
        ),
        compiler_params=pltpu.CompilerParams(dimension_semantics=("parallel",)),
    )(xf, w1, b1.reshape(1, chid), w2, b2.reshape(1, cout))
    return out[:n].reshape(B, S1, S2, cout)


def spectral_conv2d(x, w_cat, m1, m2, co):
    """SpectralConv2d.forward for channels-last x: (B, S, S, Ci).

    w_cat: (2, M*Ci, 2*M*Co) block-diagonal packed weights (corner, [Wr | Wi]).
    """
    B, S1, S2, ci = x.shape
    M = m1 * m2
    mco = M * co

    # TODO(synk): FFTs have no Pallas TPU equivalent; they stay as XLA FFT ops.
    x_ft = jnp.fft.rfft2(x.astype(jnp.float32), axes=(1, 2))  # (B, S1, S2//2+1, Ci)
    a1 = x_ft[:, :m1, :m2, :]
    a2 = x_ft[:, S1 - m1:, :m2, :]

    def _flat(a):
        # (B, m1, m2, Ci) complex -> (2B, M*Ci) with rows [real; imag]
        return jnp.concatenate([jnp.real(a), jnp.imag(a)], axis=0).reshape(2 * B, M * ci)

    act = jnp.stack([_flat(a1), _flat(a2)], axis=0)  # (2, 2B, M*Ci)

    out = pl.pallas_call(
        functools.partial(_spectral_mix_kernel, nb=B, mco=mco),
        out_shape=jax.ShapeDtypeStruct((2, 2 * B, mco), jnp.float32),
        grid_spec=pltpu.PrefetchScalarGridSpec(
            num_scalar_prefetch=0,
            grid=(1,),
            in_specs=[
                pl.BlockSpec((2, 2 * B, M * ci), lambda i: (0, 0, 0)),
                pl.BlockSpec((2, M * ci, 2 * mco), lambda i: (0, 0, 0)),
            ],
            out_specs=pl.BlockSpec((2, 2 * B, mco), lambda i: (0, 0, 0)),
        ),
        compiler_params=pltpu.CompilerParams(dimension_semantics=("arbitrary",)),
    )(act, w_cat)

    out = out.reshape(2, 2, B, m1, m2, co)
    out1 = lax.complex(out[0, 0], out[0, 1])  # (B, m1, m2, Co)
    out2 = lax.complex(out[1, 0], out[1, 1])

    # Sparse inverse FFT: out_ft is nonzero only in the first m2 columns and
    # the first / last m1 rows.  Build only the m2 nonzero columns, ifft over
    # axis 1, zero-pad along axis 2, then irfft over axis 2.
    mid = jnp.zeros((B, S1 - 2 * m1, m2, co), dtype=jnp.complex64)
    cols = jnp.concatenate([out1, mid, out2], axis=1)          # (B, S1, m2, Co)
    tmp = jnp.fft.ifft(cols, axis=1)
    tmp = jnp.pad(tmp, ((0, 0), (0, 0), (0, S2 // 2 + 1 - m2), (0, 0)))
    y = jnp.fft.irfft(tmp, n=S2, axis=2)
    return y.astype(x.dtype)


# ----------------------------------------------------------------------------
# FNO2d forward
# ----------------------------------------------------------------------------

def fno2d_forward(params, h, xg, modes1, modes2):
    width = params["fc0_w"].shape[1]
    # fused cat((h, x), -1) + fc0 lift: 3 -> width
    x = fc0_lift(h, xg, params["fc0_w"], params["fc0_b"])

    # Three Fourier layers: x = act( SpectralConv(x) + Conv1x1(x) )
    for i, name in enumerate(("0", "1", "3")):
        x1 = spectral_conv2d(x, params[f"conv{name}_wcat"], modes1, modes2, width)
        x = w_plus_spectral(
            x, x1, params[f"w{name}_w"], params[f"w{name}_b"],
            apply_gelu=(i != 2),
        )

    # fused fc1 (width -> 64) + GELU + fc2 (64 -> 1)
    return projection_head(x, params["fc1_w"], params["fc1_b"],
                           params["fc2_w"], params["fc2_b"])


# ----------------------------------------------------------------------------
# Deterministic parameter init (synthetic, matches module shapes)
# ----------------------------------------------------------------------------

def _pack_block_diag(wr, wi):
    """(Ci, Co, m1, m2) real/imag weights -> (M*Ci, 2*M*Co) [Wr | Wi] block-diag."""
    ci, co, m1, m2 = wr.shape
    M = m1 * m2
    eye = jnp.eye(M, dtype=wr.dtype)

    def bd(w):
        wm = jnp.transpose(w, (2, 3, 0, 1)).reshape(M, ci, co)   # per-mode blocks
        blocks = wm[:, :, None, :] * eye[:, None, :, None]       # (M, Ci, M, Co)
        return blocks.reshape(M * ci, M * co)

    return jnp.concatenate([bd(wr), bd(wi)], axis=1)


def init_params(key, modes1, modes2, width):
    keys = iter(jax.random.split(key, 32))
    p = {}

    def unif(shape, lo, hi):
        return jax.random.uniform(next(keys), shape, jnp.float32, lo, hi)

    # fc0: Linear(3, width)   (stored transposed: (in, out) for channels-last)
    p["fc0_w"] = unif((3, width), -0.5, 0.5)
    p["fc0_b"] = unif((width,), -0.5, 0.5)

    scale = 1.0 / (width * width)
    for name in ("0", "1", "3"):
        # SpectralConv2d weights: (in, out, modes1, modes2) complex -> real/imag,
        # packed block-diagonally over modes and stacked over the two corners.
        w1r = scale * unif((width, width, modes1, modes2), 0.0, 1.0)
        w1i = scale * unif((width, width, modes1, modes2), 0.0, 1.0)
        w2r = scale * unif((width, width, modes1, modes2), 0.0, 1.0)
        w2i = scale * unif((width, width, modes1, modes2), 0.0, 1.0)
        p[f"conv{name}_wcat"] = jnp.stack(
            [_pack_block_diag(w1r, w1i), _pack_block_diag(w2r, w2i)], axis=0)
        # Conv2d(width, width, 1) as a per-pixel linear: (in, out) + bias
        bnd = 1.0 / math.sqrt(width)
        p[f"w{name}_w"] = unif((width, width), -bnd, bnd)
        p[f"w{name}_b"] = unif((width,), -bnd, bnd)

    # fc1: Linear(width, 64); fc2: Linear(64, 1)
    p["fc1_w"] = unif((width, 64), -1.0 / math.sqrt(width), 1.0 / math.sqrt(width))
    p["fc1_b"] = unif((64,), -1.0 / math.sqrt(width), 1.0 / math.sqrt(width))
    p["fc2_w"] = unif((64, 1), -1.0 / 8.0, 1.0 / 8.0)
    p["fc2_b"] = unif((1,), -1.0 / 8.0, 1.0 / 8.0)
    return p


# ----------------------------------------------------------------------------
# Main
# ----------------------------------------------------------------------------

if __name__ == "__main__":
    B, S = 2, 16
    modes1, modes2, width = 4, 4, 16

    key = jax.random.PRNGKey(0)
    k_p, k_h, k_x = jax.random.split(key, 3)

    params = init_params(k_p, modes1, modes2, width)
    # h: scalar field a(x, y); xg: coordinate grid (x, y) -> concat gives 3 channels
    h = jax.random.normal(k_h, (B, S, S, 1), dtype=jnp.float32)
    xg = jax.random.normal(k_x, (B, S, S, 2), dtype=jnp.float32)

    fwd = jax.jit(functools.partial(fno2d_forward, modes1=modes1, modes2=modes2))
    out = fwd(params, h, xg)
    out = jax.block_until_ready(out)

    assert out.shape == (B, S, S, 1), out.shape
    assert bool(jnp.all(jnp.isfinite(out)))
    print("KERNEL_OK")
</pallas_src>

<mosaic_0001>
module attributes {stable_mosaic.version = 11 : i64} {
  func.func @_fc0_kernel(%arg0: i32, %arg1: memref<512x1xf32, #tpu.memory_space<vmem>>, %arg2: memref<512x2xf32, #tpu.memory_space<vmem>>, %arg3: memref<3x16xf32, #tpu.memory_space<vmem>>, %arg4: memref<1x16xf32, #tpu.memory_space<vmem>>, %arg5: memref<512x16xf32, #tpu.memory_space<vmem>>) attributes {dimension_semantics = [#tpu.dimension_semantics<parallel>], iteration_bounds = array<i64: 1>, scalar_prefetch = 0 : i64, scratch_operands = 0 : i64, tpu.core_type = #tpu.core_type<tc>, window_params = [{transform_indices = @transform_0, window_bounds = array<i64: 512, 1>}, {transform_indices = @transform_1, window_bounds = array<i64: 512, 2>}, {pipeline_mode = #tpu.pipeline_mode<synchronous>, transform_indices = @transform_2, window_bounds = array<i64: 3, 16>}, {pipeline_mode = #tpu.pipeline_mode<synchronous>, transform_indices = @transform_3, window_bounds = array<i64: 1, 16>}, {transform_indices = @transform_4, window_bounds = array<i64: 512, 16>}]} {
    %c0 = arith.constant 0 : index
    %c0_0 = arith.constant 0 : index
    %0 = vector.load %arg3[%c0, %c0_0] : memref<3x16xf32, #tpu.memory_space<vmem>>, vector<3x16xf32>
    %c0_1 = arith.constant 0 : index
    %c0_2 = arith.constant 0 : index
    %1 = vector.load %arg1[%c0_1, %c0_2] : memref<512x1xf32, #tpu.memory_space<vmem>>, vector<512x1xf32>
    %2 = vector.extract_strided_slice %0 {offsets = [0, 0], sizes = [1, 16], strides = [1, 1]} : vector<3x16xf32> to vector<1x16xf32>
    %3 = vector.broadcast %1 : vector<512x1xf32> to vector<512x16xf32>
    %4 = vector.broadcast %2 : vector<1x16xf32> to vector<512x16xf32>
    %5 = arith.mulf %3, %4 : vector<512x16xf32>
    %c0_3 = arith.constant 0 : index
    %c0_4 = arith.constant 0 : index
    %6 = vector.load %arg2[%c0_3, %c0_4] : memref<512x2xf32, #tpu.memory_space<vmem>>, vector<512x1xf32>
    %7 = vector.extract_strided_slice %0 {offsets = [1, 0], sizes = [1, 16], strides = [1, 1]} : vector<3x16xf32> to vector<1x16xf32>
    %8 = vector.broadcast %6 : vector<512x1xf32> to vector<512x16xf32>
    %9 = vector.broadcast %7 : vector<1x16xf32> to vector<512x16xf32>
    %10 = arith.mulf %8, %9 : vector<512x16xf32>
    %11 = arith.addf %5, %10 : vector<512x16xf32>
    %c0_5 = arith.constant 0 : index
    %c1 = arith.constant 1 : index
    %12 = vector.load %arg2[%c0_5, %c1] : memref<512x2xf32, #tpu.memory_space<vmem>>, vector<512x1xf32>
    %13 = vector.extract_strided_slice %0 {offsets = [2, 0], sizes = [1, 16], strides = [1, 1]} : vector<3x16xf32> to vector<1x16xf32>
    %14 = vector.broadcast %12 : vector<512x1xf32> to vector<512x16xf32>
    %15 = vector.broadcast %13 : vector<1x16xf32> to vector<512x16xf32>
    %16 = arith.mulf %14, %15 : vector<512x16xf32>
    %17 = arith.addf %11, %16 : vector<512x16xf32>
    %c0_6 = arith.constant 0 : index
    %c0_7 = arith.constant 0 : index
    %18 = vector.load %arg4[%c0_6, %c0_7] : memref<1x16xf32, #tpu.memory_space<vmem>>, vector<1x16xf32>
    %19 = vector.broadcast %18 : vector<1x16xf32> to vector<512x16xf32>
    %20 = arith.addf %17, %19 : vector<512x16xf32>
    %c0_8 = arith.constant 0 : index
    %c0_9 = arith.constant 0 : index
    %21 = vector.load %arg5[%c0_8, %c0_9] : memref<512x16xf32, #tpu.memory_space<vmem>>, vector<512x16xf32>
    tpu.vector_store %arg5[%c0_8, %c0_9], %20 {strides = array<i32>} : memref<512x16xf32, #tpu.memory_space<vmem>>, vector<512x16xf32>,
    return
  }
  func.func @transform_0(%arg0: i32) -> (i32, i32) {
    %c0_i32 = arith.constant 0 : i32
    %c0_i32_0 = arith.constant 0 : i32
    return %arg0, %c0_i32 : i32, i32
  }
  func.func @transform_1(%arg0: i32) -> (i32, i32) {
    %c0_i32 = arith.constant 0 : i32
    %c0_i32_0 = arith.constant 0 : i32
    return %arg0, %c0_i32 : i32, i32
  }
  func.func @transform_2(%arg0: i32) -> (i32, i32) {
    %c0_i32 = arith.constant 0 : i32
    %c0_i32_0 = arith.constant 0 : i32
    %c0_i32_1 = arith.constant 0 : i32
    return %c0_i32, %c0_i32_0 : i32, i32
  }
  func.func @transform_3(%arg0: i32) -> (i32, i32) {
    %c0_i32 = arith.constant 0 : i32
    %c0_i32_0 = arith.constant 0 : i32
    %c0_i32_1 = arith.constant 0 : i32
    return %c0_i32, %c0_i32_0 : i32, i32
  }
  func.func @transform_4(%arg0: i32) -> (i32, i32) {
    %c0_i32 = arith.constant 0 : i32
    %c0_i32_0 = arith.constant 0 : i32
    return %arg0, %c0_i32 : i32, i32
  }
}

module attributes {stable_mosaic.version = 11 : i64} {
  func.func @_spectral_mix_kernel(%arg0: i32, %arg1: memref<2x4x256xf32, #tpu.memory_space<vmem>>, %arg2: memref<2x256x512xf32, #tpu.memory_space<vmem>>, %arg3: memref<2x4x256xf32, #tpu.memory_space<vmem>>) attributes {dimension_semantics = [#tpu.dimension_semantics<arbitrary>], iteration_bounds = array<i64: 1>, scalar_prefetch = 0 : i64, scratch_operands = 0 : i64, tpu.core_type = #tpu.core_type<tc>, window_params = [{pipeline_mode = #tpu.pipeline_mode<synchronous>, transform_indices = @transform_0, window_bounds = array<i64: 2, 4, 256>}, {pipeline_mode = #tpu.pipeline_mode<synchronous>, transform_indices = @transform_1, window_bounds = array<i64: 2, 256, 512>}, {pipeline_mode = #tpu.pipeline_mode<synchronous>, transform_indices = @transform_2, window_bounds = array<i64: 2, 4, 256>}]} {
    %c0 = arith.constant 0 : index
    %c0_0 = arith.constant 0 : index
    %c0_1 = arith.constant 0 : index
    %0 = vector.load %arg1[%c0, %c0_0, %c0_1] : memref<2x4x256xf32, #tpu.memory_space<vmem>>, vector<1x4x256xf32>
    %1 = vector.shape_cast %0 : vector<1x4x256xf32> to vector<4x256xf32>
    %c0_2 = arith.constant 0 : index
    %c0_3 = arith.constant 0 : index
    %c0_4 = arith.constant 0 : index
    %2 = vector.load %arg2[%c0_2, %c0_3, %c0_4] : memref<2x256x512xf32, #tpu.memory_space<vmem>>, vector<1x256x512xf32>
    %3 = vector.shape_cast %2 : vector<1x256x512xf32> to vector<256x512xf32>
    %cst = arith.constant dense<0.000000e+00> : vector<4x512xf32>
    %4 = tpu.matmul %1, %3, %cst {dimension_numbers = #tpu.dot_dimension_numbers<[1], [0], [0], [1], [0, 0, 1, 1], [], []>} : vector<4x256xf32>, vector<256x512xf32>, vector<4x512xf32> -> vector<4x512xf32>
    %5 = vector.extract_strided_slice %4 {offsets = [0, 0], sizes = [2, 256], strides = [1, 1]} : vector<4x512xf32> to vector<2x256xf32>
    %6 = vector.extract_strided_slice %4 {offsets = [2, 256], sizes = [2, 256], strides = [1, 1]} : vector<4x512xf32> to vector<2x256xf32>
    %7 = arith.subf %5, %6 : vector<2x256xf32>
    %8 = vector.extract_strided_slice %4 {offsets = [0, 256], sizes = [2, 256], strides = [1, 1]} : vector<4x512xf32> to vector<2x256xf32>
    %9 = vector.extract_strided_slice %4 {offsets = [2, 0], sizes = [2, 256], strides = [1, 1]} : vector<4x512xf32> to vector<2x256xf32>
    %10 = arith.addf %8, %9 : vector<2x256xf32>
    %11 = tpu.concatenate %7, %10 in 0 : vector<2x256xf32>, vector<2x256xf32> -> vector<4x256xf32>
    %c0_5 = arith.constant 0 : index
    %c0_6 = arith.constant 0 : index
    %c0_7 = arith.constant 0 : index
    %12 = vector.load %arg3[%c0_5, %c0_6, %c0_7] : memref<2x4x256xf32, #tpu.memory_space<vmem>>, vector<1x4x256xf32>
    %13 = vector.shape_cast %12 : vector<1x4x256xf32> to vector<4x256xf32>
    %14 = vector.shape_cast %11 : vector<4x256xf32> to vector<1x4x256xf32>
    tpu.vector_store %arg3[%c0_5, %c0_6, %c0_7], %14 {strides = array<i32>} : memref<2x4x256xf32, #tpu.memory_space<vmem>>, vector<1x4x256xf32>,
    %c1 = arith.constant 1 : index
    %c0_8 = arith.constant 0 : index
    %c0_9 = arith.constant 0 : index
    %15 = vector.load %arg1[%c1, %c0_8, %c0_9] : memref<2x4x256xf32, #tpu.memory_space<vmem>>, vector<1x4x256xf32>
    %16 = vector.shape_cast %15 : vector<1x4x256xf32> to vector<4x256xf32>
    %c1_10 = arith.constant 1 : index
    %c0_11 = arith.constant 0 : index
    %c0_12 = arith.constant 0 : index
    %17 = vector.load %arg2[%c1_10, %c0_11, %c0_12] : memref<2x256x512xf32, #tpu.memory_space<vmem>>, vector<1x256x512xf32>
    %18 = vector.shape_cast %17 : vector<1x256x512xf32> to vector<256x512xf32>
    %cst_13 = arith.constant dense<0.000000e+00> : vector<4x512xf32>
    %19 = tpu.matmul %16, %18, %cst_13 {dimension_numbers = #tpu.dot_dimension_numbers<[1], [0], [0], [1], [0, 0, 1, 1], [], []>} : vector<4x256xf32>, vector<256x512xf32>, vector<4x512xf32> -> vector<4x512xf32>
    %20 = vector.extract_strided_slice %19 {offsets = [0, 0], sizes = [2, 256], strides = [1, 1]} : vector<4x512xf32> to vector<2x256xf32>
    %21 = vector.extract_strided_slice %19 {offsets = [2, 256], sizes = [2, 256], strides = [1, 1]} : vector<4x512xf32> to vector<2x256xf32>
    %22 = arith.subf %20, %21 : vector<2x256xf32>
    %23 = vector.extract_strided_slice %19 {offsets = [0, 256], sizes = [2, 256], strides = [1, 1]} : vector<4x512xf32> to vector<2x256xf32>
    %24 = vector.extract_strided_slice %19 {offsets = [2, 0], sizes = [2, 256], strides = [1, 1]} : vector<4x512xf32> to vector<2x256xf32>
    %25 = arith.addf %23, %24 : vector<2x256xf32>
    %26 = tpu.concatenate %22, %25 in 0 : vector<2x256xf32>, vector<2x256xf32> -> vector<4x256xf32>
    %c1_14 = arith.constant 1 : index
    %c0_15 = arith.constant 0 : index
    %c0_16 = arith.constant 0 : index
    %27 = vector.load %arg3[%c1_14, %c0_15, %c0_16] : memref<2x4x256xf32, #tpu.memory_space<vmem>>, vector<1x4x256xf32>
    %28 = vector.shape_cast %27 : vector<1x4x256xf32> to vector<4x256xf32>
    %29 = vector.shape_cast %26 : vector<4x256xf32> to vector<1x4x256xf32>
    tpu.vector_store %arg3[%c1_14, %c0_15, %c0_16], %29 {strides = array<i32>} : memref<2x4x256xf32, #tpu.memory_space<vmem>>, vector<1x4x256xf32>,
    return
  }
  func.func @transform_0(%arg0: i32) -> (i32, i32, i32) {
    %c0_i32 = arith.constant 0 : i32
    %c0_i32_0 = arith.constant 0 : i32
    %c0_i32_1 = arith.constant 0 : i32
    %c0_i32_2 = arith.constant 0 : i32
    return %c0_i32, %c0_i32_0, %c0_i32_1 : i32, i32, i32
  }
  func.func @transform_1(%arg0: i32) -> (i32, i32, i32) {
    %c0_i32 = arith.constant 0 : i32
    %c0_i32_0 = arith.constant 0 : i32
    %c0_i32_1 = arith.constant 0 : i32
    %c0_i32_2 = arith.constant 0 : i32
    return %c0_i32, %c0_i32_0, %c0_i32_1 : i32, i32, i32
  }
  func.func @transform_2(%arg0: i32) -> (i32, i32, i32) {
    %c0_i32 = arith.constant 0 : i32
    %c0_i32_0 = arith.constant 0 : i32
    %c0_i32_1 = arith.constant 0 : i32
    %c0_i32_2 = arith.constant 0 : i32
    return %c0_i32, %c0_i32_0, %c0_i32_1 : i32, i32, i32
  }
}

module attributes {stable_mosaic.version = 11 : i64} {
  func.func @_wlayer_kernel(%arg0: i32, %arg1: memref<512x16xf32, #tpu.memory_space<vmem>>, %arg2: memref<512x16xf32, #tpu.memory_space<vmem>>, %arg3: memref<16x16xf32, #tpu.memory_space<vmem>>, %arg4: memref<1x16xf32, #tpu.memory_space<vmem>>, %arg5: memref<512x16xf32, #tpu.memory_space<vmem>>) attributes {dimension_semantics = [#tpu.dimension_semantics<parallel>], iteration_bounds = array<i64: 1>, scalar_prefetch = 0 : i64, scratch_operands = 0 : i64, tpu.core_type = #tpu.core_type<tc>, window_params = [{transform_indices = @transform_0, window_bounds = array<i64: 512, 16>}, {transform_indices = @transform_1, window_bounds = array<i64: 512, 16>}, {pipeline_mode = #tpu.pipeline_mode<synchronous>, transform_indices = @transform_2, window_bounds = array<i64: 16, 16>}, {pipeline_mode = #tpu.pipeline_mode<synchronous>, transform_indices = @transform_3, window_bounds = array<i64: 1, 16>}, {transform_indices = @transform_4, window_bounds = array<i64: 512, 16>}]} {
    %c0 = arith.constant 0 : index
    %c0_0 = arith.constant 0 : index
    %0 = vector.load %arg1[%c0, %c0_0] : memref<512x16xf32, #tpu.memory_space<vmem>>, vector<512x16xf32>
    %c0_1 = arith.constant 0 : index
    %c0_2 = arith.constant 0 : index
    %1 = vector.load %arg3[%c0_1, %c0_2] : memref<16x16xf32, #tpu.memory_space<vmem>>, vector<16x16xf32>
    %cst = arith.constant dense<0.000000e+00> : vector<512x16xf32>
    %2 = tpu.matmul %0, %1, %cst {dimension_numbers = #tpu.dot_dimension_numbers<[1], [0], [0], [1], [0, 0, 1, 1], [], []>} : vector<512x16xf32>, vector<16x16xf32>, vector<512x16xf32> -> vector<512x16xf32>
    %c0_3 = arith.constant 0 : index
    %c0_4 = arith.constant 0 : index
    %3 = vector.load %arg4[%c0_3, %c0_4] : memref<1x16xf32, #tpu.memory_space<vmem>>, vector<1x16xf32>
    %4 = vector.broadcast %3 : vector<1x16xf32> to vector<512x16xf32>
    %5 = arith.addf %2, %4 : vector<512x16xf32>
    %c0_5 = arith.constant 0 : index
    %c0_6 = arith.constant 0 : index
    %6 = vector.load %arg2[%c0_5, %c0_6] : memref<512x16xf32, #tpu.memory_space<vmem>>, vector<512x16xf32>
    %7 = arith.addf %5, %6 : vector<512x16xf32>
    %cst_7 = arith.constant 5.000000e-01 : f32
    %8 = vector.broadcast %cst_7 : f32 to vector<512x16xf32>
    %9 = arith.mulf %8, %7 : vector<512x16xf32>
    %cst_8 = arith.constant 2.000000e+00 : f32
    %10 = math.sqrt %cst_8 : f32
    %11 = vector.broadcast %10 : f32 to vector<512x16xf32>
    %12 = arith.divf %7, %11 : vector<512x16xf32>
    %13 = math.erf %12 : vector<512x16xf32>
    %cst_9 = arith.constant 1.000000e+00 : f32
    %14 = vector.broadcast %cst_9 : f32 to vector<512x16xf32>
    %15 = arith.addf %14, %13 : vector<512x16xf32>
    %16 = arith.mulf %9, %15 : vector<512x16xf32>
    %c0_10 = arith.constant 0 : index
    %c0_11 = arith.constant 0 : index
    %17 = vector.load %arg5[%c0_10, %c0_11] : memref<512x16xf32, #tpu.memory_space<vmem>>, vector<512x16xf32>
    tpu.vector_store %arg5[%c0_10, %c0_11], %16 {strides = array<i32>} : memref<512x16xf32, #tpu.memory_space<vmem>>, vector<512x16xf32>,
    return
  }
  func.func @transform_0(%arg0: i32) -> (i32, i32) {
    %c0_i32 = arith.constant 0 : i32
    %c0_i32_0 = arith.constant 0 : i32
    return %arg0, %c0_i32 : i32, i32
  }
  func.func @transform_1(%arg0: i32) -> (i32, i32) {
    %c0_i32 = arith.constant 0 : i32
    %c0_i32_0 = arith.constant 0 : i32
    return %arg0, %c0_i32 : i32, i32
  }
  func.func @transform_2(%arg0: i32) -> (i32, i32) {
    %c0_i32 = arith.constant 0 : i32
    %c0_i32_0 = arith.constant 0 : i32
    %c0_i32_1 = arith.constant 0 : i32
    return %c0_i32, %c0_i32_0 : i32, i32
  }
  func.func @transform_3(%arg0: i32) -> (i32, i32) {
    %c0_i32 = arith.constant 0 : i32
    %c0_i32_0 = arith.constant 0 : i32
    %c0_i32_1 = arith.constant 0 : i32
    return %c0_i32, %c0_i32_0 : i32, i32
  }
  func.func @transform_4(%arg0: i32) -> (i32, i32) {
    %c0_i32 = arith.constant 0 : i32
    %c0_i32_0 = arith.constant 0 : i32
    return %arg0, %c0_i32 : i32, i32
  }
}

module attributes {stable_mosaic.version = 11 : i64} {
  func.func @_wlayer_kernel(%arg0: i32, %arg1: memref<512x16xf32, #tpu.memory_space<vmem>>, %arg2: memref<512x16xf32, #tpu.memory_space<vmem>>, %arg3: memref<16x16xf32, #tpu.memory_space<vmem>>, %arg4: memref<1x16xf32, #tpu.memory_space<vmem>>, %arg5: memref<512x16xf32, #tpu.memory_space<vmem>>) attributes {dimension_semantics = [#tpu.dimension_semantics<parallel>], iteration_bounds = array<i64: 1>, scalar_prefetch = 0 : i64, scratch_operands = 0 : i64, tpu.core_type = #tpu.core_type<tc>, window_params = [{transform_indices = @transform_0, window_bounds = array<i64: 512, 16>}, {transform_indices = @transform_1, window_bounds = array<i64: 512, 16>}, {pipeline_mode = #tpu.pipeline_mode<synchronous>, transform_indices = @transform_2, window_bounds = array<i64: 16, 16>}, {pipeline_mode = #tpu.pipeline_mode<synchronous>, transform_indices = @transform_3, window_bounds = array<i64: 1, 16>}, {transform_indices = @transform_4, window_bounds = array<i64: 512, 16>}]} {
    %c0 = arith.constant 0 : index
    %c0_0 = arith.constant 0 : index
    %0 = vector.load %arg1[%c0, %c0_0] : memref<512x16xf32, #tpu.memory_space<vmem>>, vector<512x16xf32>
    %c0_1 = arith.constant 0 : index
    %c0_2 = arith.constant 0 : index
    %1 = vector.load %arg3[%c0_1, %c0_2] : memref<16x16xf32, #tpu.memory_space<vmem>>, vector<16x16xf32>
    %cst = arith.constant dense<0.000000e+00> : vector<512x16xf32>
    %2 = tpu.matmul %0, %1, %cst {dimension_numbers = #tpu.dot_dimension_numbers<[1], [0], [0], [1], [0, 0, 1, 1], [], []>} : vector<512x16xf32>, vector<16x16xf32>, vector<512x16xf32> -> vector<512x16xf32>
    %c0_3 = arith.constant 0 : index
    %c0_4 = arith.constant 0 : index
    %3 = vector.load %arg4[%c0_3, %c0_4] : memref<1x16xf32, #tpu.memory_space<vmem>>, vector<1x16xf32>
    %4 = vector.broadcast %3 : vector<1x16xf32> to vector<512x16xf32>
    %5 = arith.addf %2, %4 : vector<512x16xf32>
    %c0_5 = arith.constant 0 : index
    %c0_6 = arith.constant 0 : index
    %6 = vector.load %arg2[%c0_5, %c0_6] : memref<512x16xf32, #tpu.memory_space<vmem>>, vector<512x16xf32>
    %7 = arith.addf %5, %6 : vector<512x16xf32>
    %c0_7 = arith.constant 0 : index
    %c0_8 = arith.constant 0 : index
    %8 = vector.load %arg5[%c0_7, %c0_8] : memref<512x16xf32, #tpu.memory_space<vmem>>, vector<512x16xf32>
    tpu.vector_store %arg5[%c0_7, %c0_8], %7 {strides = array<i32>} : memref<512x16xf32, #tpu.memory_space<vmem>>, vector<512x16xf32>,
    return
  }
  func.func @transform_0(%arg0: i32) -> (i32, i32) {
    %c0_i32 = arith.constant 0 : i32
    %c0_i32_0 = arith.constant 0 : i32
    return %arg0, %c0_i32 : i32, i32
  }
  func.func @transform_1(%arg0: i32) -> (i32, i32) {
    %c0_i32 = arith.constant 0 : i32
    %c0_i32_0 = arith.constant 0 : i32
    return %arg0, %c0_i32 : i32, i32
  }
  func.func @transform_2(%arg0: i32) -> (i32, i32) {
    %c0_i32 = arith.constant 0 : i32
    %c0_i32_0 = arith.constant 0 : i32
    %c0_i32_1 = arith.constant 0 : i32
    return %c0_i32, %c0_i32_0 : i32, i32
  }
  func.func @transform_3(%arg0: i32) -> (i32, i32) {
    %c0_i32 = arith.constant 0 : i32
    %c0_i32_0 = arith.constant 0 : i32
    %c0_i32_1 = arith.constant 0 : i32
    return %c0_i32, %c0_i32_0 : i32, i32
  }
  func.func @transform_4(%arg0: i32) -> (i32, i32) {
    %c0_i32 = arith.constant 0 : i32
    %c0_i32_0 = arith.constant 0 : i32
    return %arg0, %c0_i32 : i32, i32
  }
}

module attributes {stable_mosaic.version = 11 : i64} {
  func.func @_head_kernel(%arg0: i32, %arg1: memref<512x16xf32, #tpu.memory_space<vmem>>, %arg2: memref<16x64xf32, #tpu.memory_space<vmem>>, %arg3: memref<1x64xf32, #tpu.memory_space<vmem>>, %arg4: memref<64x1xf32, #tpu.memory_space<vmem>>, %arg5: memref<1x1xf32, #tpu.memory_space<vmem>>, %arg6: memref<512x1xf32, #tpu.memory_space<vmem>>) attributes {dimension_semantics = [#tpu.dimension_semantics<parallel>], iteration_bounds = array<i64: 1>, scalar_prefetch = 0 : i64, scratch_operands = 0 : i64, tpu.core_type = #tpu.core_type<tc>, window_params = [{transform_indices = @transform_0, window_bounds = array<i64: 512, 16>}, {pipeline_mode = #tpu.pipeline_mode<synchronous>, transform_indices = @transform_1, window_bounds = array<i64: 16, 64>}, {pipeline_mode = #tpu.pipeline_mode<synchronous>, transform_indices = @transform_2, window_bounds = array<i64: 1, 64>}, {pipeline_mode = #tpu.pipeline_mode<synchronous>, transform_indices = @transform_3, window_bounds = array<i64: 64, 1>}, {pipeline_mode = #tpu.pipeline_mode<synchronous>, transform_indices = @transform_4, window_bounds = array<i64: 1, 1>}, {transform_indices = @transform_5, window_bounds = array<i64: 512, 1>}]} {
    %c0 = arith.constant 0 : index
    %c0_0 = arith.constant 0 : index
    %0 = vector.load %arg1[%c0, %c0_0] : memref<512x16xf32, #tpu.memory_space<vmem>>, vector<512x16xf32>
    %c0_1 = arith.constant 0 : index
    %c0_2 = arith.constant 0 : index
    %1 = vector.load %arg2[%c0_1, %c0_2] : memref<16x64xf32, #tpu.memory_space<vmem>>, vector<16x64xf32>
    %cst = arith.constant dense<0.000000e+00> : vector<512x64xf32>
    %2 = tpu.matmul %0, %1, %cst {dimension_numbers = #tpu.dot_dimension_numbers<[1], [0], [0], [1], [0, 0, 1, 1], [], []>} : vector<512x16xf32>, vector<16x64xf32>, vector<512x64xf32> -> vector<512x64xf32>
    %c0_3 = arith.constant 0 : index
    %c0_4 = arith.constant 0 : index
    %3 = vector.load %arg3[%c0_3, %c0_4] : memref<1x64xf32, #tpu.memory_space<vmem>>, vector<1x64xf32>
    %4 = vector.broadcast %3 : vector<1x64xf32> to vector<512x64xf32>
    %5 = arith.addf %2, %4 : vector<512x64xf32>
    %cst_5 = arith.constant 5.000000e-01 : f32
    %6 = vector.broadcast %cst_5 : f32 to vector<512x64xf32>
    %7 = arith.mulf %6, %5 : vector<512x64xf32>
    %cst_6 = arith.constant 2.000000e+00 : f32
    %8 = math.sqrt %cst_6 : f32
    %9 = vector.broadcast %8 : f32 to vector<512x64xf32>
    %10 = arith.divf %5, %9 : vector<512x64xf32>
    %11 = math.erf %10 : vector<512x64xf32>
    %cst_7 = arith.constant 1.000000e+00 : f32
    %12 = vector.broadcast %cst_7 : f32 to vector<512x64xf32>
    %13 = arith.addf %12, %11 : vector<512x64xf32>
    %14 = arith.mulf %7, %13 : vector<512x64xf32>
    %c0_8 = arith.constant 0 : index
    %c0_9 = arith.constant 0 : index
    %15 = vector.load %arg4[%c0_8, %c0_9] : memref<64x1xf32, #tpu.memory_space<vmem>>, vector<64x1xf32>
    %cst_10 = arith.constant dense<0.000000e+00> : vector<512x1xf32>
    %16 = tpu.matmul %14, %15, %cst_10 {dimension_numbers = #tpu.dot_dimension_numbers<[1], [0], [0], [1], [0, 0, 1, 1], [], []>} : vector<512x64xf32>, vector<64x1xf32>, vector<512x1xf32> -> vector<512x1xf32>
    %c0_11 = arith.constant 0 : index
    %c0_12 = arith.constant 0 : index
    %17 = vector.load %arg5[%c0_11, %c0_12] : memref<1x1xf32, #tpu.memory_space<vmem>>, vector<1x1xf32>
    %18 = vector.broadcast %17 : vector<1x1xf32> to vector<512x1xf32>
    %19 = arith.addf %16, %18 : vector<512x1xf32>
    %c0_13 = arith.constant 0 : index
    %c0_14 = arith.constant 0 : index
    %20 = vector.load %arg6[%c0_13, %c0_14] : memref<512x1xf32, #tpu.memory_space<vmem>>, vector<512x1xf32>
    tpu.vector_store %arg6[%c0_13, %c0_14], %19 {strides = array<i32>} : memref<512x1xf32, #tpu.memory_space<vmem>>, vector<512x1xf32>,
    return
  }
  func.func @transform_0(%arg0: i32) -> (i32, i32) {
    %c0_i32 = arith.constant 0 : i32
    %c0_i32_0 = arith.constant 0 : i32
    return %arg0, %c0_i32 : i32, i32
  }
  func.func @transform_1(%arg0: i32) -> (i32, i32) {
    %c0_i32 = arith.constant 0 : i32
    %c0_i32_0 = arith.constant 0 : i32
    %c0_i32_1 = arith.constant 0 : i32
    return %c0_i32, %c0_i32_0 : i32, i32
  }
  func.func @transform_2(%arg0: i32) -> (i32, i32) {
    %c0_i32 = arith.constant 0 : i32
    %c0_i32_0 = arith.constant 0 : i32
    %c0_i32_1 = arith.constant 0 : i32
    return %c0_i32, %c0_i32_0 : i32, i32
  }
  func.func @transform_3(%arg0: i32) -> (i32, i32) {
    %c0_i32 = arith.constant 0 : i32
    %c0_i32_0 = arith.constant 0 : i32
    %c0_i32_1 = arith.constant 0 : i32
    return %c0_i32, %c0_i32_0 : i32, i32
  }
  func.func @transform_4(%arg0: i32) -> (i32, i32) {
    %c0_i32 = arith.constant 0 : i32
    %c0_i32_0 = arith.constant 0 : i32
    %c0_i32_1 = arith.constant 0 : i32
    return %c0_i32, %c0_i32_0 : i32, i32
  }
  func.func @transform_5(%arg0: i32) -> (i32, i32) {
    %c0_i32 = arith.constant 0 : i32
    %c0_i32_0 = arith.constant 0 : i32
    return %arg0, %c0_i32 : i32, i32
  }
}

</mosaic_0001>

<llo_original>
// kernel: fno2d_forward.8
$region0: #{fno2d_forward.8}
  #allocation0 [shape = 'u32[]', space=smem, size = 0x4, offset = 0x4, fixed_abs, tag = 'smem constant byte address 0x4 - core index']
  #allocation1 [shape = 'u32[144,128]{1,0:T(1,128)}', space=vmem, size = 0x12000, scoped, tag = 'internal scratch']
  %s0 = inlined_call_operand.vmem [shape: f32[512,1], index: 0, kind: input, shape index: {}]
  %s1 = inlined_call_operand.vmem [shape: f32[512,2], index: 1, kind: input, shape index: {}]
  %s2 = inlined_call_operand.vmem [shape: f32[3,16], index: 2, kind: input, shape index: {}]
  %s3 = inlined_call_operand.vmem [shape: f32[1,16], index: 3, kind: input, shape index: {}]
  %s4 = inlined_call_operand.vmem [shape: f32[512,16], index: 4, kind: output, shape index: {}]
  %s5 = sld [smem:[#allocation0]]
  $region26: #{fno2d_forward.8} parent=0
    _
  %s7 = ssub.s32 1, %s5
  %s8 = scalar_select 0, %s7, %s5
  // Predicated region
  $region2: #{fno2d_forward.8} parent=0 // pred_check
    _
  $region3: #{fno2d_forward.8} parent=0 // pred_check_branch
    %10 = sbr.rel (0) target = $region5
  $region4: #{fno2d_forward.8} parent=0 // pred_region
    _
  $region5: #{fno2d_forward.8} parent=0 // pred_fallthru
    _
  // Predicated region
  $region6: #{fno2d_forward.8} parent=0 // pred_check
    _
  $region7: #{fno2d_forward.8} parent=0 // pred_check_branch
    %12 = sbr.rel (0) target = $region9
  $region8: #{fno2d_forward.8} parent=0 // pred_region
    _
  $region9: #{fno2d_forward.8} parent=0 // pred_fallthru
    _
  // Predicated region
  $region10: #{fno2d_forward.8} parent=0 // pred_check
    _
  $region11: #{fno2d_forward.8} parent=0 // pred_check_branch
    %14 = sbr.rel (0) target = $region13
  $region12: #{fno2d_forward.8} parent=0 // pred_region
    _
  $region13: #{fno2d_forward.8} parent=0 // pred_fallthru
    _
  // Predicated region
  $region14: #{fno2d_forward.8} parent=0 // pred_check
    _
  $region15: #{fno2d_forward.8} parent=0 // pred_check_branch
    %16 = sbr.rel (0) target = $region17
  $region16: #{fno2d_forward.8} parent=0 // pred_region
    _
  $region17: #{fno2d_forward.8} parent=0 // pred_fallthru
    _
  %v17 = vld [vmem:[%s2] sm:$0x7]
  %v18 = vld [vmem:[%s0] sm:$0xff]
  %v19 = vld [vmem:[%s0 + $0x8] sm:$0xff]
  %v20 = vld [vmem:[%s0 + $0x10] sm:$0xff]
  %v21 = vld [vmem:[%s0 + $0x18] sm:$0xff]
  %v22 = vld [vmem:[%s0 + $0x20] sm:$0xff]
  %v23 = vld [vmem:[%s0 + $0x28] sm:$0xff]
  %v24 = vld [vmem:[%s0 + $0x30] sm:$0xff]
  %v25 = vld [vmem:[%s0 + $0x38] sm:$0xff]
  %v26 = vld [vmem:[%s0 + $0x40] sm:$0xff]
  %v27 = vld [vmem:[%s0 + $0x48] sm:$0xff]
  %v28 = vld [vmem:[%s0 + $0x50] sm:$0xff]
  %v29 = vld [vmem:[%s0 + $0x58] sm:$0xff]
  %v30 = vld [vmem:[%s0 + $0x60] sm:$0xff]
  %v31 = vld [vmem:[%s0 + $0x68] sm:$0xff]
  %v32 = vld [vmem:[%s0 + $0x70] sm:$0xff]
  %v33 = vld [vmem:[%s0 + $0x78] sm:$0xff]
  %v34 = vld [vmem:[%s0 + $0x80] sm:$0xff]
  %v35 = vld [vmem:[%s0 + $0x88] sm:$0xff]
  %v36 = vld [vmem:[%s0 + $0x90] sm:$0xff]
  %v37 = vld [vmem:[%s0 + $0x98] sm:$0xff]
  %v38 = vld [vmem:[%s0 + $0xa0] sm:$0xff]
  %v39 = vld [vmem:[%s0 + $0xa8] sm:$0xff]
  %v40 = vld [vmem:[%s0 + $0xb0] sm:$0xff]
  %v41 = vld [vmem:[%s0 + $0xb8] sm:$0xff]
  %v42 = vld [vmem:[%s0 + $0xc0] sm:$0xff]
  %v43 = vld [vmem:[%s0 + $0xc8] sm:$0xff]
  %v44 = vld [vmem:[%s0 + $0xd0] sm:$0xff]
  %v45 = vld [vmem:[%s0 + $0xd8] sm:$0xff]
  %v46 = vld [vmem:[%s0 + $0xe0] sm:$0xff]
  %v47 = vld [vmem:[%s0 + $0xe8] sm:$0xff]
  %v48 = vld [vmem:[%s0 + $0xf0] sm:$0xff]
  %v49 = vld [vmem:[%s0 + $0xf8] sm:$0xff]
  %v50 = vld [vmem:[%s0 + $0x100] sm:$0xff]
  %v51 = vld [vmem:[%s0 + $0x108] sm:$0xff]
  %v52 = vld [vmem:[%s0 + $0x110] sm:$0xff]
  %v53 = vld [vmem:[%s0 + $0x118] sm:$0xff]
  %v54 = vld [vmem:[%s0 + $0x120] sm:$0xff]
  %v55 = vld [vmem:[%s0 + $0x128] sm:$0xff]
  %v56 = vld [vmem:[%s0 + $0x130] sm:$0xff]
  %v57 = vld [vmem:[%s0 + $0x138] sm:$0xff]
  %v58 = vld [vmem:[%s0 + $0x140] sm:$0xff]
  %v59 = vld [vmem:[%s0 + $0x148] sm:$0xff]
  %v60 = vld [vmem:[%s0 + $0x150] sm:$0xff]
  %v61 = vld [vmem:[%s0 + $0x158] sm:$0xff]
  %v62 = vld [vmem:[%s0 + $0x160] sm:$0xff]
  %v63 = vld [vmem:[%s0 + $0x168] sm:$0xff]
  %v64 = vld [vmem:[%s0 + $0x170] sm:$0xff]
  %v65 = vld [vmem:[%s0 + $0x178] sm:$0xff]
  %v66 = vld [vmem:[%s0 + $0x180] sm:$0xff]
  %v67 = vld [vmem:[%s0 + $0x188] sm:$0xff]
  %v68 = vld [vmem:[%s0 + $0x190] sm:$0xff]
  %v69 = vld [vmem:[%s0 + $0x198] sm:$0xff]
  %v70 = vld [vmem:[%s0 + $0x1a0] sm:$0xff]
  %v71 = vld [vmem:[%s0 + $0x1a8] sm:$0xff]
  %v72 = vld [vmem:[%s0 + $0x1b0] sm:$0xff]
  %v73 = vld [vmem:[%s0 + $0x1b8] sm:$0xff]
  %v74 = vld [vmem:[%s0 + $0x1c0] sm:$0xff]
  %v75 = vld [vmem:[%s0 + $0x1c8] sm:$0xff]
  %v76 = vld [vmem:[%s0 + $0x1d0] sm:$0xff]
  %v77 = vld [vmem:[%s0 + $0x1d8] sm:$0xff]
  %v78 = vld [vmem:[%s0 + $0x1e0] sm:$0xff]
  %v79 = vld [vmem:[%s0 + $0x1e8] sm:$0xff]
  %v80 = vld [vmem:[%s0 + $0x1f0] sm:$0xff]
  %v81 = vld [vmem:[%s0 + $0x1f8] sm:$0xff]
  %83 = vset.pattern.permute.xlu0 0
  %84 = vperm.xlu0 %83, %v18
  %v85 = vpop.permute.xlu0 %84
  %88 = vset.pattern.permute.xlu0 0
  %89 = vperm.xlu0 %88, %v19
  %v90 = vpop.permute.xlu0 %89
  %93 = vset.pattern.permute.xlu0 0
  %94 = vperm.xlu0 %93, %v20
  %v95 = vpop.permute.xlu0 %94
  %98 = vset.pattern.permute.xlu0 0
  %99 = vperm.xlu0 %98, %v21
  %v100 = vpop.permute.xlu0 %99
  %103 = vset.pattern.permute.xlu0 0
  %104 = vperm.xlu0 %103, %v22
  %v105 = vpop.permute.xlu0 %104
  %108 = vset.pattern.permute.xlu0 0
  %109 = vperm.xlu0 %108, %v23
  %v110 = vpop.permute.xlu0 %109
  %113 = vset.pattern.permute.xlu0 0
  %114 = vperm.xlu0 %113, %v24
  %v115 = vpop.permute.xlu0 %114
  %118 = vset.pattern.permute.xlu0 0
  %119 = vperm.xlu0 %118, %v25
  %v120 = vpop.permute.xlu0 %119
  %123 = vset.pattern.permute.xlu0 0
  %124 = vperm.xlu0 %123, %v26
  %v125 = vpop.permute.xlu0 %124
  %128 = vset.pattern.permute.xlu0 0
  %129 = vperm.xlu0 %128, %v27
  %v130 = vpop.permute.xlu0 %129
  %133 = vset.pattern.permute.xlu0 0
  %134 = vperm.xlu0 %133, %v28
  %v135 = vpop.permute.xlu0 %134
  %138 = vset.pattern.permute.xlu0 0
  %139 = vperm.xlu0 %138, %v29
  %v140 = vpop.permute.xlu0 %139
  %143 = vset.pattern.permute.xlu0 0
  %144 = vperm.xlu0 %143, %v30
  %v145 = vpop.permute.xlu0 %144
  %148 = vset.pattern.permute.xlu0 0
  %149 = vperm.xlu0 %148, %v31
  %v150 = vpop.permute.xlu0 %149
  %153 = vset.pattern.permute.xlu0 0
  %154 = vperm.xlu0 %153, %v32
  %v155 = vpop.permute.xlu0 %154
  %158 = vset.pattern.permute.xlu0 0
  %159 = vperm.xlu0 %158, %v33
  %v160 = vpop.permute.xlu0 %159
  %163 = vset.pattern.permute.xlu0 0
  %164 = vperm.xlu0 %163, %v34
  %v165 = vpop.permute.xlu0 %164
  %168 = vset.pattern.permute.xlu0 0
  %169 = vperm.xlu0 %168, %v35
  %v170 = vpop.permute.xlu0 %169
  %173 = vset.pattern.permute.xlu0 0
  %174 = vperm.xlu0 %173, %v36
  %v175 = vpop.permute.xlu0 %174
  %178 = vset.pattern.permute.xlu0 0
  %179 = vperm.xlu0 %178, %v37
  %v180 = vpop.permute.xlu0 %179
  %183 = vset.pattern.permute.xlu0 0
  %184 = vperm.xlu0 %183, %v38
  %v185 = vpop.permute.xlu0 %184
  %188 = vset.pattern.permute.xlu0 0
  %189 = vperm.xlu0 %188, %v39
  %v190 = vpop.permute.xlu0 %189
  %193 = vset.pattern.permute.xlu0 0
  %194 = vperm.xlu0 %193, %v40
  %v195 = vpop.permute.xlu0 %194
  %198 = vset.pattern.permute.xlu0 0
  %199 = vperm.xlu0 %198, %v41
  %v200 = vpop.permute.xlu0 %199
  %203 = vset.pattern.permute.xlu0 0
  %204 = vperm.xlu0 %203, %v42
  %v205 = vpop.permute.xlu0 %204
  %208 = vset.pattern.permute.xlu0 0
  %209 = vperm.xlu0 %208, %v43
  %v210 = vpop.permute.xlu0 %209
  %213 = vset.pattern.permute.xlu0 0
  %214 = vperm.xlu0 %213, %v44
  %v215 = vpop.permute.xlu0 %214
  %218 = vset.pattern.permute.xlu0 0
  %219 = vperm.xlu0 %218, %v45
  %v220 = vpop.permute.xlu0 %219
  %223 = vset.pattern.permute.xlu0 0
  %224 = vperm.xlu0 %223, %v46
  %v225 = vpop.permute.xlu0 %224
  %228 = vset.pattern.permute.xlu0 0
  %229 = vperm.xlu0 %228, %v47
  %v230 = vpop.permute.xlu0 %229
  %233 = vset.pattern.permute.xlu0 0
  %234 = vperm.xlu0 %233, %v48
  %v235 = vpop.permute.xlu0 %234
  %238 = vset.pattern.permute.xlu0 0
  %239 = vperm.xlu0 %238, %v49
  %v240 = vpop.permute.xlu0 %239
  %243 = vset.pattern.permute.xlu0 0
  %244 = vperm.xlu0 %243, %v50
  %v245 = vpop.permute.xlu0 %244
  %248 = vset.pattern.permute.xlu0 0
  %249 = vperm.xlu0 %248, %v51
  %v250 = vpop.permute.xlu0 %249
  %253 = vset.pattern.permute.xlu0 0
  %254 = vperm.xlu0 %253, %v52
  %v255 = vpop.permute.xlu0 %254
  %258 = vset.pattern.permute.xlu0 0
  %259 = vperm.xlu0 %258, %v53
  %v260 = vpop.permute.xlu0 %259
  %263 = vset.pattern.permute.xlu0 0
  %264 = vperm.xlu0 %263, %v54
  %v265 = vpop.permute.xlu0 %264
  %268 = vset.pattern.permute.xlu0 0
  %269 = vperm.xlu0 %268, %v55
  %v270 = vpop.permute.xlu0 %269
  %273 = vset.pattern.permute.xlu0 0
  %274 = vperm.xlu0 %273, %v56
  %v275 = vpop.permute.xlu0 %274
  %278 = vset.pattern.permute.xlu0 0
  %279 = vperm.xlu0 %278, %v57
  %v280 = vpop.permute.xlu0 %279
  %283 = vset.pattern.permute.xlu0 0
  %284 = vperm.xlu0 %283, %v58
  %v285 = vpop.permute.xlu0 %284
  %288 = vset.pattern.permute.xlu0 0
  %289 = vperm.xlu0 %288, %v59
  %v290 = vpop.permute.xlu0 %289
  %293 = vset.pattern.permute.xlu0 0
  %294 = vperm.xlu0 %293, %v60
  %v295 = vpop.permute.xlu0 %294
  %298 = vset.pattern.permute.xlu0 0
  %299 = vperm.xlu0 %298, %v61
  %v300 = vpop.permute.xlu0 %299
  %303 = vset.pattern.permute.xlu0 0
  %304 = vperm.xlu0 %303, %v62
  %v305 = vpop.permute.xlu0 %304
  %308 = vset.pattern.permute.xlu0 0
  %309 = vperm.xlu0 %308, %v63
  %v310 = vpop.permute.xlu0 %309
  %313 = vset.pattern.permute.xlu0 0
  %314 = vperm.xlu0 %313, %v64
  %v315 = vpop.permute.xlu0 %314
  %318 = vset.pattern.permute.xlu0 0
  %319 = vperm.xlu0 %318, %v65
  %v320 = vpop.permute.xlu0 %319
  %323 = vset.pattern.permute.xlu0 0
  %324 = vperm.xlu0 %323, %v66
  %v325 = vpop.permute.xlu0 %324
  %328 = vset.pattern.permute.xlu0 0
  %329 = vperm.xlu0 %328, %v67
  %v330 = vpop.permute.xlu0 %329
  %333 = vset.pattern.permute.xlu0 0
  %334 = vperm.xlu0 %333, %v68
  %v335 = vpop.permute.xlu0 %334
  %338 = vset.pattern.permute.xlu0 0
  %339 = vperm.xlu0 %338, %v69
  %v340 = vpop.permute.xlu0 %339
  %343 = vset.pattern.permute.xlu0 0
  %344 = vperm.xlu0 %343, %v70
  %v345 = vpop.permute.xlu0 %344
  %348 = vset.pattern.permute.xlu0 0
  %349 = vperm.xlu0 %348, %v71
  %v350 = vpop.permute.xlu0 %349
  %353 = vset.pattern.permute.xlu0 0
  %354 = vperm.xlu0 %353, %v72
  %v355 = vpop.permute.xlu0 %354
  %358 = vset.pattern.permute.xlu0 0
  %359 = vperm.xlu0 %358, %v73
  %v360 = vpop.permute.xlu0 %359
  %363 = vset.pattern.permute.xlu0 0
  %364 = vperm.xlu0 %363, %v74
  %v365 = vpop.permute.xlu0 %364
  %368 = vset.pattern.permute.xlu0 0
  %369 = vperm.xlu0 %368, %v75
  %v370 = vpop.permute.xlu0 %369
  %373 = vset.pattern.permute.xlu0 0
  %374 = vperm.xlu0 %373, %v76
  %v375 = vpop.permute.xlu0 %374
  %378 = vset.pattern.permute.xlu0 0
  %379 = vperm.xlu0 %378, %v77
  %v380 = vpop.permute.xlu0 %379
  %383 = vset.pattern.permute.xlu0 0
  %384 = vperm.xlu0 %383, %v78
  %v385 = vpop.permute.xlu0 %384
  %388 = vset.pattern.permute.xlu0 0
  %389 = vperm.xlu0 %388, %v79
  %v390 = vpop.permute.xlu0 %389
  %393 = vset.pattern.permute.xlu0 0
  %394 = vperm.xlu0 %393, %v80
  %v395 = vpop.permute.xlu0 %394
  %398 = vset.pattern.permute.xlu0 0
  %399 = vperm.xlu0 %398, %v81
  %v400 = vpop.permute.xlu0 %399
  %v402 = vlaneseq
  %v403 = vshrl.u32 %v402, 7
  %v404 = vsub.s32 0, %v403
  %v405 = vrot.slane %v17, %v404
  %v406 = vmul.f32 %v85, %v405
  %v407 = vmul.f32 %v90, %v405
  %v408 = vmul.f32 %v95, %v405
  %v409 = vmul.f32 %v100, %v405
  %v410 = vmul.f32 %v105, %v405
  %v411 = vmul.f32 %v110, %v405
  %v412 = vmul.f32 %v115, %v405
  %v413 = vmul.f32 %v120, %v405
  %v414 = vmul.f32 %v125, %v405
  %v415 = vmul.f32 %v130, %v405
  %v416 = vmul.f32 %v135, %v405
  %v417 = vmul.f32 %v140, %v405
  %v418 = vmul.f32 %v145, %v405
  %v419 = vmul.f32 %v150, %v405
  %v420 = vmul.f32 %v155, %v405
  %v421 = vmul.f32 %v160, %v405
  %v422 = vmul.f32 %v165, %v405
  %v423 = vmul.f32 %v170, %v405
  %v424 = vmul.f32 %v175, %v405
  %v425 = vmul.f32 %v180, %v405
  %v426 = vmul.f32 %v185, %v405
  %v427 = vmul.f32 %v190, %v405
  %v428 = vmul.f32 %v195, %v405
  %v429 = vmul.f32 %v200, %v405
  %v430 = vmul.f32 %v205, %v405
  %v431 = vmul.f32 %v210, %v405
  %v432 = vmul.f32 %v215, %v405
  %v433 = vmul.f32 %v220, %v405
  %v434 = vmul.f32 %v225, %v405
  %v435 = vmul.f32 %v230, %v405
  %v436 = vmul.f32 %v235, %v405
  %v437 = vmul.f32 %v240, %v405
  %v438 = vmul.f32 %v245, %v405
  %v439 = vmul.f32 %v250, %v405
  %v440 = vmul.f32 %v255, %v405
  %v441 = vmul.f32 %v260, %v405
  %v442 = vmul.f32 %v265, %v405
  %v443 = vmul.f32 %v270, %v405
  %v444 = vmul.f32 %v275, %v405
  %v445 = vmul.f32 %v280, %v405
  %v446 = vmul.f32 %v285, %v405
  %v447 = vmul.f32 %v290, %v405
  %v448 = vmul.f32 %v295, %v405
  %v449 = vmul.f32 %v300, %v405
  %v450 = vmul.f32 %v305, %v405
  %v451 = vmul.f32 %v310, %v405
  %v452 = vmul.f32 %v315, %v405
  %v453 = vmul.f32 %v320, %v405
  %v454 = vmul.f32 %v325, %v405
  %v455 = vmul.f32 %v330, %v405
  %v456 = vmul.f32 %v335, %v405
  %v457 = vmul.f32 %v340, %v405
  %v458 = vmul.f32 %v345, %v405
  %v459 = vmul.f32 %v350, %v405
  %v460 = vmul.f32 %v355, %v405
  %v461 = vmul.f32 %v360, %v405
  %v462 = vmul.f32 %v365, %v405
  %v463 = vmul.f32 %v370, %v405
  %v464 = vmul.f32 %v375, %v405
  %v465 = vmul.f32 %v380, %v405
  %v466 = vmul.f32 %v385, %v405
  %v467 = vmul.f32 %v390, %v405
  %v468 = vmul.f32 %v395, %v405
  %v469 = vmul.f32 %v400, %v405
  %v470 = vld [vmem:[%s1] sm:$0xff]
  %v471 = vld [vmem:[%s1 + $0x8] sm:$0xff]
  %v472 = vld [vmem:[%s1 + $0x10] sm:$0xff]
  %v473 = vld [vmem:[%s1 + $0x18] sm:$0xff]
  %v474 = vld [vmem:[%s1 + $0x20] sm:$0xff]
  %v475 = vld [vmem:[%s1 + $0x28] sm:$0xff]
  %v476 = vld [vmem:[%s1 + $0x30] sm:$0xff]
  %v477 = vld [vmem:[%s1 + $0x38] sm:$0xff]
  %v478 = vld [vmem:[%s1 + $0x40] sm:$0xff]
  %v479 = vld [vmem:[%s1 + $0x48] sm:$0xff]
  %v480 = vld [vmem:[%s1 + $0x50] sm:$0xff]
  %v481 = vld [vmem:[%s1 + $0x58] sm:$0xff]
  %v482 = vld [vmem:[%s1 + $0x60] sm:$0xff]
  %v483 = vld [vmem:[%s1 + $0x68] sm:$0xff]
  %v484 = vld [vmem:[%s1 + $0x70] sm:$0xff]
  %v485 = vld [vmem:[%s1 + $0x78] sm:$0xff]
  %v486 = vld [vmem:[%s1 + $0x80] sm:$0xff]
  %v487 = vld [vmem:[%s1 + $0x88] sm:$0xff]
  %v488 = vld [vmem:[%s1 + $0x90] sm:$0xff]
  %v489 = vld [vmem:[%s1 + $0x98] sm:$0xff]
  %v490 = vld [vmem:[%s1 + $0xa0] sm:$0xff]
  %v491 = vld [vmem:[%s1 + $0xa8] sm:$0xff]
  %v492 = vld [vmem:[%s1 + $0xb0] sm:$0xff]
  %v493 = vld [vmem:[%s1 + $0xb8] sm:$0xff]
  %v494 = vld [vmem:[%s1 + $0xc0] sm:$0xff]
  %v495 = vld [vmem:[%s1 + $0xc8] sm:$0xff]
  %v496 = vld [vmem:[%s1 + $0xd0] sm:$0xff]
  %v497 = vld [vmem:[%s1 + $0xd8] sm:$0xff]
  %v498 = vld [vmem:[%s1 + $0xe0] sm:$0xff]
  %v499 = vld [vmem:[%s1 + $0xe8] sm:$0xff]
  %v500 = vld [vmem:[%s1 + $0xf0] sm:$0xff]
  %v501 = vld [vmem:[%s1 + $0xf8] sm:$0xff]
  %v502 = vld [vmem:[%s1 + $0x100] sm:$0xff]
  %v503 = vld [vmem:[%s1 + $0x108] sm:$0xff]
  %v504 = vld [vmem:[%s1 + $0x110] sm:$0xff]
  %v505 = vld [vmem:[%s1 + $0x118] sm:$0xff]
  %v506 = vld [vmem:[%s1 + $0x120] sm:$0xff]
  %v507 = vld [vmem:[%s1 + $0x128] sm:$0xff]
  %v508 = vld [vmem:[%s1 + $0x130] sm:$0xff]
  %v509 = vld [vmem:[%s1 + $0x138] sm:$0xff]
  %v510 = vld [vmem:[%s1 + $0x140] sm:$0xff]
  %v511 = vld [vmem:[%s1 + $0x148] sm:$0xff]
  %v512 = vld [vmem:[%s1 + $0x150] sm:$0xff]
  %v513 = vld [vmem:[%s1 + $0x158] sm:$0xff]
  %v514 = vld [vmem:[%s1 + $0x160] sm:$0xff]
  %v515 = vld [vmem:[%s1 + $0x168] sm:$0xff]
  %v516 = vld [vmem:[%s1 + $0x170] sm:$0xff]
  %v517 = vld [vmem:[%s1 + $0x178] sm:$0xff]
  %v518 = vld [vmem:[%s1 + $0x180] sm:$0xff]
  %v519 = vld [vmem:[%s1 + $0x188] sm:$0xff]
  %v520 = vld [vmem:[%s1 + $0x190] sm:$0xff]
  %v521 = vld [vmem:[%s1 + $0x198] sm:$0xff]
  %v522 = vld [vmem:[%s1 + $0x1a0] sm:$0xff]
  %v523 = vld [vmem:[%s1 + $0x1a8] sm:$0xff]
  %v524 = vld [vmem:[%s1 + $0x1b0] sm:$0xff]
  %v525 = vld [vmem:[%s1 + $0x1b8] sm:$0xff]
  %v526 = vld [vmem:[%s1 + $0x1c0] sm:$0xff]
  %v527 = vld [vmem:[%s1 + $0x1c8] sm:$0xff]
  %v528 = vld [vmem:[%s1 + $0x1d0] sm:$0xff]
  %v529 = vld [vmem:[%s1 + $0x1d8] sm:$0xff]
  %v530 = vld [vmem:[%s1 + $0x1e0] sm:$0xff]
  %v531 = vld [vmem:[%s1 + $0x1e8] sm:$0xff]
  %v532 = vld [vmem:[%s1 + $0x1f0] sm:$0xff]
  %v533 = vld [vmem:[%s1 + $0x1f8] sm:$0xff]
  %535 = vset.pattern.permute.xlu0 0
  %536 = vperm.xlu0 %535, %v470
  %v537 = vpop.permute.xlu0 %536
  %540 = vset.pattern.permute.xlu0 0
  %541 = vperm.xlu0 %540, %v471
  %v542 = vpop.permute.xlu0 %541
  %545 = vset.pattern.permute.xlu0 0
  %546 = vperm.xlu0 %545, %v472
  %v547 = vpop.permute.xlu0 %546
  %550 = vset.pattern.permute.xlu0 0
  %551 = vperm.xlu0 %550, %v473
  %v552 = vpop.permute.xlu0 %551
  %555 = vset.pattern.permute.xlu0 0
  %556 = vperm.xlu0 %555, %v474
  %v557 = vpop.permute.xlu0 %556
  %560 = vset.pattern.permute.xlu0 0
  %561 = vperm.xlu0 %560, %v475
  %v562 = vpop.permute.xlu0 %561
  %565 = vset.pattern.permute.xlu0 0
  %566 = vperm.xlu0 %565, %v476
  %v567 = vpop.permute.xlu0 %566
  %570 = vset.pattern.permute.xlu0 0
  %571 = vperm.xlu0 %570, %v477
  %v572 = vpop.permute.xlu0 %571
  %575 = vset.pattern.permute.xlu0 0
  %576 = vperm.xlu0 %575, %v478
  %v577 = vpop.permute.xlu0 %576
  %580 = vset.pattern.permute.xlu0 0
  %581 = vperm.xlu0 %580, %v479
  %v582 = vpop.permute.xlu0 %581
  %585 = vset.pattern.permute.xlu0 0
  %586 = vperm.xlu0 %585, %v480
  %v587 = vpop.permute.xlu0 %586
  %590 = vset.pattern.permute.xlu0 0
  %591 = vperm.xlu0 %590, %v481
  %v592 = vpop.permute.xlu0 %591
  %595 = vset.pattern.permute.xlu0 0
  %596 = vperm.xlu0 %595, %v482
  %v597 = vpop.permute.xlu0 %596
  %600 = vset.pattern.permute.xlu0 0
  %601 = vperm.xlu0 %600, %v483
  %v602 = vpop.permute.xlu0 %601
  %605 = vset.pattern.permute.xlu0 0
  %606 = vperm.xlu0 %605, %v484
  %v607 = vpop.permute.xlu0 %606
  %610 = vset.pattern.permute.xlu0 0
  %611 = vperm.xlu0 %610, %v485
  %v612 = vpop.permute.xlu0 %611
  %615 = vset.pattern.permute.xlu0 0
  %616 = vperm.xlu0 %615, %v486
  %v617 = vpop.permute.xlu0 %616
  %620 = vset.pattern.permute.xlu0 0
  %621 = vperm.xlu0 %620, %v487
  %v622 = vpop.permute.xlu0 %621
  %625 = vset.pattern.permute.xlu0 0
  %626 = vperm.xlu0 %625, %v488
  %v627 = vpop.permute.xlu0 %626
  %630 = vset.pattern.permute.xlu0 0
  %631 = vperm.xlu0 %630, %v489
  %v632 = vpop.permute.xlu0 %631
  %635 = vset.pattern.permute.xlu0 0
  %636 = vperm.xlu0 %635, %v490
  %v637 = vpop.permute.xlu0 %636
  %640 = vset.pattern.permute.xlu0 0
  %641 = vperm.xlu0 %640, %v491
  %v642 = vpop.permute.xlu0 %641
  %645 = vset.pattern.permute.xlu0 0
  %646 = vperm.xlu0 %645, %v492
  %v647 = vpop.permute.xlu0 %646
  %650 = vset.pattern.permute.xlu0 0
  %651 = vperm.xlu0 %650, %v493
  %v652 = vpop.permute.xlu0 %651
  %655 = vset.pattern.permute.xlu0 0
  %656 = vperm.xlu0 %655, %v494
  %v657 = vpop.permute.xlu0 %656
  %660 = vset.pattern.permute.xlu0 0
  %661 = vperm.xlu0 %660, %v495
  %v662 = vpop.permute.xlu0 %661
  %665 = vset.pattern.permute.xlu0 0
  %666 = vperm.xlu0 %665, %v496
  %v667 = vpop.permute.xlu0 %666
  %670 = vset.pattern.permute.xlu0 0
  %671 = vperm.xlu0 %670, %v497
  %v672 = vpop.permute.xlu0 %671
  %675 = vset.pattern.permute.xlu0 0
  %676 = vperm.xlu0 %675, %v498
  %v677 = vpop.permute.xlu0 %676
  %680 = vset.pattern.permute.xlu0 0
  %681 = vperm.xlu0 %680, %v499
  %v682 = vpop.permute.xlu0 %681
  %685 = vset.pattern.permute.xlu0 0
  %686 = vperm.xlu0 %685, %v500
  %v687 = vpop.permute.xlu0 %686
  %690 = vset.pattern.permute.xlu0 0
  %691 = vperm.xlu0 %690, %v501
  %v692 = vpop.permute.xlu0 %691
  %695 = vset.pattern.permute.xlu0 0
  %696 = vperm.xlu0 %695, %v502
  %v697 = vpop.permute.xlu0 %696
  %700 = vset.pattern.permute.xlu0 0
  %701 = vperm.xlu0 %700, %v503
  %v702 = vpop.permute.xlu0 %701
  %705 = vset.pattern.permute.xlu0 0
  %706 = vperm.xlu0 %705, %v504
  %v707 = vpop.permute.xlu0 %706
  %710 = vset.pattern.permute.xlu0 0
  %711 = vperm.xlu0 %710, %v505
  %v712 = vpop.permute.xlu0 %711
  %715 = vset.pattern.permute.xlu0 0
  %716 = vperm.xlu0 %715, %v506
  %v717 = vpop.permute.xlu0 %716
  %720 = vset.pattern.permute.xlu0 0
  %721 = vperm.xlu0 %720, %v507
  %v722 = vpop.permute.xlu0 %721
  %725 = vset.pattern.permute.xlu0 0
  %726 = vperm.xlu0 %725, %v508
  %v727 = vpop.permute.xlu0 %726
  %730 = vset.pattern.permute.xlu0 0
  %731 = vperm.xlu0 %730, %v509
  %v732 = vpop.permute.xlu0 %731
  %735 = vset.pattern.permute.xlu0 0
  %736 = vperm.xlu0 %735, %v510
  %v737 = vpop.permute.xlu0 %736
  %740 = vset.pattern.permute.xlu0 0
  %741 = vperm.xlu0 %740, %v511
  %v742 = vpop.permute.xlu0 %741
  %745 = vset.pattern.permute.xlu0 0
  %746 = vperm.xlu0 %745, %v512
  %v747 = vpop.permute.xlu0 %746
  %750 = vset.pattern.permute.xlu0 0
  %751 = vperm.xlu0 %750, %v513
  %v752 = vpop.permute.xlu0 %751
  %755 = vset.pattern.permute.xlu0 0
  %756 = vperm.xlu0 %755, %v514
  %v757 = vpop.permute.xlu0 %756
  %760 = vset.pattern.permute.xlu0 0
  %761 = vperm.xlu0 %760, %v515
  %v762 = vpop.permute.xlu0 %761
  %765 = vset.pattern.permute.xlu0 0
  %766 = vperm.xlu0 %765, %v516
  %v767 = vpop.permute.xlu0 %766
  %770 = vset.pattern.permute.xlu0 0
  %771 = vperm.xlu0 %770, %v517
  %v772 = vpop.permute.xlu0 %771
  %775 = vset.pattern.permute.xlu0 0
  %776 = vperm.xlu0 %775, %v518
  %v777 = vpop.permute.xlu0 %776
  %780 = vset.pattern.permute.xlu0 0
  %781 = vperm.xlu0 %780, %v519
  %v782 = vpop.permute.xlu0 %781
  %785 = vset.pattern.permute.xlu0 0
  %786 = vperm.xlu0 %785, %v520
  %v787 = vpop.permute.xlu0 %786
  %790 = vset.pattern.permute.xlu0 0
  %791 = vperm.xlu0 %790, %v521
  %v792 = vpop.permute.xlu0 %791
  %795 = vset.pattern.permute.xlu0 0
  %796 = vperm.xlu0 %795, %v522
  %v797 = vpop.permute.xlu0 %796
  %800 = vset.pattern.permute.xlu0 0
  %801 = vperm.xlu0 %800, %v523
  %v802 = vpop.permute.xlu0 %801
  %805 = vset.pattern.permute.xlu0 0
  %806 = vperm.xlu0 %805, %v524
  %v807 = vpop.permute.xlu0 %806
  %810 = vset.pattern.permute.xlu0 0
  %811 = vperm.xlu0 %810, %v525
  %v812 = vpop.permute.xlu0 %811
  %815 = vset.pattern.permute.xlu0 0
  %816 = vperm.xlu0 %815, %v526
  %v817 = vpop.permute.xlu0 %816
  %820 = vset.pattern.permute.xlu0 0
  %821 = vperm.xlu0 %820, %v527
  %v822 = vpop.permute.xlu0 %821
  %825 = vset.pattern.permute.xlu0 0
  %826 = vperm.xlu0 %825, %v528
  %v827 = vpop.permute.xlu0 %826
  %830 = vset.pattern.permute.xlu0 0
  %831 = vperm.xlu0 %830, %v529
  %v832 = vpop.permute.xlu0 %831
  %835 = vset.pattern.permute.xlu0 0
  %836 = vperm.xlu0 %835, %v530
  %v837 = vpop.permute.xlu0 %836
  %840 = vset.pattern.permute.xlu0 0
  %841 = vperm.xlu0 %840, %v531
  %v842 = vpop.permute.xlu0 %841
  %845 = vset.pattern.permute.xlu0 0
  %846 = vperm.xlu0 %845, %v532
  %v847 = vpop.permute.xlu0 %846
  %850 = vset.pattern.permute.xlu0 0
  %851 = vperm.xlu0 %850, %v533
  %v852 = vpop.permute.xlu0 %851
  %v854 = vlaneseq
  %v855 = vshrl.u32 %v854, 7
  %v856 = vsub.s32 1, %v855
  %v857 = vrot.slane %v17, %v856
  %v858 = vmul.f32 %v537, %v857
  %v859 = vmul.f32 %v542, %v857
  %v860 = vmul.f32 %v547, %v857
  %v861 = vmul.f32 %v552, %v857
  %v862 = vmul.f32 %v557, %v857
  %v863 = vmul.f32 %v562, %v857
  %v864 = vmul.f32 %v567, %v857
  %v865 = vmul.f32 %v572, %v857
  %v866 = vmul.f32 %v577, %v857
  %v867 = vmul.f32 %v582, %v857
  %v868 = vmul.f32 %v587, %v857
  %v869 = vmul.f32 %v592, %v857
  %v870 = vmul.f32 %v597, %v857
  %v871 = vmul.f32 %v602, %v857
  %v872 = vmul.f32 %v607, %v857
  %v873 = vmul.f32 %v612, %v857
  %v874 = vmul.f32 %v617, %v857
  %v875 = vmul.f32 %v622, %v857
  %v876 = vmul.f32 %v627, %v857
  %v877 = vmul.f32 %v632, %v857
  %v878 = vmul.f32 %v637, %v857
  %v879 = vmul.f32 %v642, %v857
  %v880 = vmul.f32 %v647, %v857
  %v881 = vmul.f32 %v652, %v857
  %v882 = vmul.f32 %v657, %v857
  %v883 = vmul.f32 %v662, %v857
  %v884 = vmul.f32 %v667, %v857
  %v885 = vmul.f32 %v672, %v857
  %v886 = vmul.f32 %v677, %v857
  %v887 = vmul.f32 %v682, %v857
  %v888 = vmul.f32 %v687, %v857
  %v889 = vmul.f32 %v692, %v857
  %v890 = vmul.f32 %v697, %v857
  %v891 = vmul.f32 %v702, %v857
  %v892 = vmul.f32 %v707, %v857
  %v893 = vmul.f32 %v712, %v857
  %v894 = vmul.f32 %v717, %v857
  %v895 = vmul.f32 %v722, %v857
  %v896 = vmul.f32 %v727, %v857
  %v897 = vmul.f32 %v732, %v857
  %v898 = vmul.f32 %v737, %v857
  %v899 = vmul.f32 %v742, %v857
  %v900 = vmul.f32 %v747, %v857
  %v901 = vmul.f32 %v752, %v857
  %v902 = vmul.f32 %v757, %v857
  %v903 = vmul.f32 %v762, %v857
  %v904 = vmul.f32 %v767, %v857
  %v905 = vmul.f32 %v772, %v857
  %v906 = vmul.f32 %v777, %v857
  %v907 = vmul.f32 %v782, %v857
  %v908 = vmul.f32 %v787, %v857
  %v909 = vmul.f32 %v792, %v857
  %v910 = vmul.f32 %v797, %v857
  %v911 = vmul.f32 %v802, %v857
  %v912 = vmul.f32 %v807, %v857
  %v913 = vmul.f32 %v812, %v857
  %v914 = vmul.f32 %v817, %v857
  %v915 = vmul.f32 %v822, %v857
  %v916 = vmul.f32 %v827, %v857
  %v917 = vmul.f32 %v832, %v857
  %v918 = vmul.f32 %v837, %v857
  %v919 = vmul.f32 %v842, %v857
  %v920 = vmul.f32 %v847, %v857
  %v921 = vmul.f32 %v852, %v857
  %v922 = vadd.f32 %v406, %v858
  %v923 = vadd.f32 %v407, %v859
  %v924 = vadd.f32 %v408, %v860
  %v925 = vadd.f32 %v409, %v861
  %v926 = vadd.f32 %v410, %v862
  %v927 = vadd.f32 %v411, %v863
  %v928 = vadd.f32 %v412, %v864
  %v929 = vadd.f32 %v413, %v865
  %v930 = vadd.f32 %v414, %v866
  %v931 = vadd.f32 %v415, %v867
  %v932 = vadd.f32 %v416, %v868
  %v933 = vadd.f32 %v417, %v869
  %v934 = vadd.f32 %v418, %v870
  %v935 = vadd.f32 %v419, %v871
  %v936 = vadd.f32 %v420, %v872
  %v937 = vadd.f32 %v421, %v873
  %v938 = vadd.f32 %v422, %v874
  %v939 = vadd.f32 %v423, %v875
  %v940 = vadd.f32 %v424, %v876
  %v941 = vadd.f32 %v425, %v877
  %v942 = vadd.f32 %v426, %v878
  %v943 = vadd.f32 %v427, %v879
  %v944 = vadd.f32 %v428, %v880
  %v945 = vadd.f32 %v429, %v881
  %v946 = vadd.f32 %v430, %v882
  %v947 = vadd.f32 %v431, %v883
  %v948 = vadd.f32 %v432, %v884
  %v949 = vadd.f32 %v433, %v885
  %v950 = vadd.f32 %v434, %v886
  %v951 = vadd.f32 %v435, %v887
  %v952 = vadd.f32 %v436, %v888
  %v953 = vadd.f32 %v437, %v889
  %v954 = vadd.f32 %v438, %v890
  %v955 = vadd.f32 %v439, %v891
  %v956 = vadd.f32 %v440, %v892
  %v957 = vadd.f32 %v441, %v893
  %v958 = vadd.f32 %v442, %v894
  %v959 = vadd.f32 %v443, %v895
  %v960 = vadd.f32 %v444, %v896
  %v961 = vadd.f32 %v445, %v897
  %v962 = vadd.f32 %v446, %v898
  %v963 = vadd.f32 %v447, %v899
  %v964 = vadd.f32 %v448, %v900
  %v965 = vadd.f32 %v449, %v901
  %v966 = vadd.f32 %v450, %v902
  %v967 = vadd.f32 %v451, %v903
  %v968 = vadd.f32 %v452, %v904
  %v969 = vadd.f32 %v453, %v905
  %v970 = vadd.f32 %v454, %v906
  %v971 = vadd.f32 %v455, %v907
  %v972 = vadd.f32 %v456, %v908
  %v973 = vadd.f32 %v457, %v909
  %v974 = vadd.f32 %v458, %v910
  %v975 = vadd.f32 %v459, %v911
  %v976 = vadd.f32 %v460, %v912
  %v977 = vadd.f32 %v461, %v913
  %v978 = vadd.f32 %v462, %v914
  %v979 = vadd.f32 %v463, %v915
  %v980 = vadd.f32 %v464, %v916
  %v981 = vadd.f32 %v465, %v917
  %v982 = vadd.f32 %v466, %v918
  %v983 = vadd.f32 %v467, %v919
  %v984 = vadd.f32 %v468, %v920
  %v985 = vadd.f32 %v469, %v921
  %986 = vset.pattern.permute.xlu0 1
  %987 = vperm.xlu0 %986, %v470
  %v988 = vpop.permute.xlu0 %987
  %990 = vset.pattern.permute.xlu0 1
  %991 = vperm.xlu0 %990, %v471
  %v992 = vpop.permute.xlu0 %991
  %994 = vset.pattern.permute.xlu0 1
  %995 = vperm.xlu0 %994, %v472
  %v996 = vpop.permute.xlu0 %995
  %998 = vset.pattern.permute.xlu0 1
  %999 = vperm.xlu0 %998, %v473
  %v1000 = vpop.permute.xlu0 %999
  %1002 = vset.pattern.permute.xlu0 1
  %1003 = vperm.xlu0 %1002, %v474
  %v1004 = vpop.permute.xlu0 %1003
  %1006 = vset.pattern.permute.xlu0 1
  %1007 = vperm.xlu0 %1006, %v475
  %v1008 = vpop.permute.xlu0 %1007
  %1010 = vset.pattern.permute.xlu0 1
  %1011 = vperm.xlu0 %1010, %v476
  %v1012 = vpop.permute.xlu0 %1011
  %1014 = vset.pattern.permute.xlu0 1
  %1015 = vperm.xlu0 %1014, %v477
  %v1016 = vpop.permute.xlu0 %1015
  %1018 = vset.pattern.permute.xlu0 1
  %1019 = vperm.xlu0 %1018, %v478
  %v1020 = vpop.permute.xlu0 %1019
  %1022 = vset.pattern.permute.xlu0 1
  %1023 = vperm.xlu0 %1022, %v479
  %v1024 = vpop.permute.xlu0 %1023
  %1026 = vset.pattern.permute.xlu0 1
  %1027 = vperm.xlu0 %1026, %v480
  %v1028 = vpop.permute.xlu0 %1027
  %1030 = vset.pattern.permute.xlu0 1
  %1031 = vperm.xlu0 %1030, %v481
  %v1032 = vpop.permute.xlu0 %1031
  %1034 = vset.pattern.permute.xlu0 1
  %1035 = vperm.xlu0 %1034, %v482
  %v1036 = vpop.permute.xlu0 %1035
  %1038 = vset.pattern.permute.xlu0 1
  %1039 = vperm.xlu0 %1038, %v483
  %v1040 = vpop.permute.xlu0 %1039
  %1042 = vset.pattern.permute.xlu0 1
  %1043 = vperm.xlu0 %1042, %v484
  %v1044 = vpop.permute.xlu0 %1043
  %1046 = vset.pattern.permute.xlu0 1
  %1047 = vperm.xlu0 %1046, %v485
  %v1048 = vpop.permute.xlu0 %1047
  %1050 = vset.pattern.permute.xlu0 1
  %1051 = vperm.xlu0 %1050, %v486
  %v1052 = vpop.permute.xlu0 %1051
  %1054 = vset.pattern.permute.xlu0 1
  %1055 = vperm.xlu0 %1054, %v487
  %v1056 = vpop.permute.xlu0 %1055
  %1058 = vset.pattern.permute.xlu0 1
  %1059 = vperm.xlu0 %1058, %v488
  %v1060 = vpop.permute.xlu0 %1059
  %1062 = vset.pattern.permute.xlu0 1
  %1063 = vperm.xlu0 %1062, %v489
  %v1064 = vpop.permute.xlu0 %1063
  %1066 = vset.pattern.permute.xlu0 1
  %1067 = vperm.xlu0 %1066, %v490
  %v1068 = vpop.permute.xlu0 %1067
  %1070 = vset.pattern.permute.xlu0 1
  %1071 = vperm.xlu0 %1070, %v491
  %v1072 = vpop.permute.xlu0 %1071
  %1074 = vset.pattern.permute.xlu0 1
  %1075 = vperm.xlu0 %1074, %v492
  %v1076 = vpop.permute.xlu0 %1075
  %1078 = vset.pattern.permute.xlu0 1
  %1079 = vperm.xlu0 %1078, %v493
  %v1080 = vpop.permute.xlu0 %1079
  %1082 = vset.pattern.permute.xlu0 1
  %1083 = vperm.xlu0 %1082, %v494
  %v1084 = vpop.permute.xlu0 %1083
  %1086 = vset.pattern.permute.xlu0 1
  %1087 = vperm.xlu0 %1086, %v495
  %v1088 = vpop.permute.xlu0 %1087
  %1090 = vset.pattern.permute.xlu0 1
  %1091 = vperm.xlu0 %1090, %v496
  %v1092 = vpop.permute.xlu0 %1091
  %1094 = vset.pattern.permute.xlu0 1
  %1095 = vperm.xlu0 %1094, %v497
  %v1096 = vpop.permute.xlu0 %1095
  %1098 = vset.pattern.permute.xlu0 1
  %1099 = vperm.xlu0 %1098, %v498
  %v1100 = vpop.permute.xlu0 %1099
  %1102 = vset.pattern.permute.xlu0 1
  %1103 = vperm.xlu0 %1102, %v499
  %v1104 = vpop.permute.xlu0 %1103
  %1106 = vset.pattern.permute.xlu0 1
  %1107 = vperm.xlu0 %1106, %v500
  %v1108 = vpop.permute.xlu0 %1107
  %1110 = vset.pattern.permute.xlu0 1
  %1111 = vperm.xlu0 %1110, %v501
  %v1112 = vpop.permute.xlu0 %1111
  %1114 = vset.pattern.permute.xlu0 1
  %1115 = vperm.xlu0 %1114, %v502
  %v1116 = vpop.permute.xlu0 %1115
  %1118 = vset.pattern.permute.xlu0 1
  %1119 = vperm.xlu0 %1118, %v503
  %v1120 = vpop.permute.xlu0 %1119
  %1122 = vset.pattern.permute.xlu0 1
  %1123 = vperm.xlu0 %1122, %v504
  %v1124 = vpop.permute.xlu0 %1123
  %1126 = vset.pattern.permute.xlu0 1
  %1127 = vperm.xlu0 %1126, %v505
  %v1128 = vpop.permute.xlu0 %1127
  %1130 = vset.pattern.permute.xlu0 1
  %1131 = vperm.xlu0 %1130, %v506
  %v1132 = vpop.permute.xlu0 %1131
  %1134 = vset.pattern.permute.xlu0 1
  %1135 = vperm.xlu0 %1134, %v507
  %v1136 = vpop.permute.xlu0 %1135
  %1138 = vset.pattern.permute.xlu0 1
  %1139 = vperm.xlu0 %1138, %v508
  %v1140 = vpop.permute.xlu0 %1139
  %1142 = vset.pattern.permute.xlu0 1
  %1143 = vperm.xlu0 %1142, %v509
  %v1144 = vpop.permute.xlu0 %1143
  %1146 = vset.pattern.permute.xlu0 1
  %1147 = vperm.xlu0 %1146, %v510
  %v1148 = vpop.permute.xlu0 %1147
  %1150 = vset.pattern.permute.xlu0 1
  %1151 = vperm.xlu0 %1150, %v511
  %v1152 = vpop.permute.xlu0 %1151
  %1154 = vset.pattern.permute.xlu0 1
  %1155 = vperm.xlu0 %1154, %v512
  %v1156 = vpop.permute.xlu0 %1155
  %1158 = vset.pattern.permute.xlu0 1
  %1159 = vperm.xlu0 %1158, %v513
  %v1160 = vpop.permute.xlu0 %1159
  %1162 = vset.pattern.permute.xlu0 1
  %1163 = vperm.xlu0 %1162, %v514
  %v1164 = vpop.permute.xlu0 %1163
  %1166 = vset.pattern.permute.xlu0 1
  %1167 = vperm.xlu0 %1166, %v515
  %v1168 = vpop.permute.xlu0 %1167
  %1170 = vset.pattern.permute.xlu0 1
  %1171 = vperm.xlu0 %1170, %v516
  %v1172 = vpop.permute.xlu0 %1171
  %1174 = vset.pattern.permute.xlu0 1
  %1175 = vperm.xlu0 %1174, %v517
  %v1176 = vpop.permute.xlu0 %1175
  %1178 = vset.pattern.permute.xlu0 1
  %1179 = vperm.xlu0 %1178, %v518
  %v1180 = vpop.permute.xlu0 %1179
  %1182 = vset.pattern.permute.xlu0 1
  %1183 = vperm.xlu0 %1182, %v519
  %v1184 = vpop.permute.xlu0 %1183
  %1186 = vset.pattern.permute.xlu0 1
  %1187 = vperm.xlu0 %1186, %v520
  %v1188 = vpop.permute.xlu0 %1187
  %1190 = vset.pattern.permute.xlu0 1
  %1191 = vperm.xlu0 %1190, %v521
  %v1192 = vpop.permute.xlu0 %1191
  %1194 = vset.pattern.permute.xlu0 1
  %1195 = vperm.xlu0 %1194, %v522
  %v1196 = vpop.permute.xlu0 %1195
  %1198 = vset.pattern.permute.xlu0 1
  %1199 = vperm.xlu0 %1198, %v523
  %v1200 = vpop.permute.xlu0 %1199
  %1202 = vset.pattern.permute.xlu0 1
  %1203 = vperm.xlu0 %1202, %v524
  %v1204 = vpop.permute.xlu0 %1203
  %1206 = vset.pattern.permute.xlu0 1
  %1207 = vperm.xlu0 %1206, %v525
  %v1208 = vpop.permute.xlu0 %1207
  %1210 = vset.pattern.permute.xlu0 1
  %1211 = vperm.xlu0 %1210, %v526
  %v1212 = vpop.permute.xlu0 %1211
  %1214 = vset.pattern.permute.xlu0 1
  %1215 = vperm.xlu0 %1214, %v527
  %v1216 = vpop.permute.xlu0 %1215
  %1218 = vset.pattern.permute.xlu0 1
  %1219 = vperm.xlu0 %1218, %v528
  %v1220 = vpop.permute.xlu0 %1219
  %1222 = vset.pattern.permute.xlu0 1
  %1223 = vperm.xlu0 %1222, %v529
  %v1224 = vpop.permute.xlu0 %1223
  %1226 = vset.pattern.permute.xlu0 1
  %1227 = vperm.xlu0 %1226, %v530
  %v1228 = vpop.permute.xlu0 %1227
  %1230 = vset.pattern.permute.xlu0 1
  %1231 = vperm.xlu0 %1230, %v531
  %v1232 = vpop.permute.xlu0 %1231
  %1234 = vset.pattern.permute.xlu0 1
  %1235 = vperm.xlu0 %1234, %v532
  %v1236 = vpop.permute.xlu0 %1235
  %1238 = vset.pattern.permute.xlu0 1
  %1239 = vperm.xlu0 %1238, %v533
  %v1240 = vpop.permute.xlu0 %1239
  %v1242 = vlaneseq
  %v1243 = vshrl.u32 %v1242, 7
  %v1244 = vsub.s32 2, %v1243
  %v1245 = vrot.slane %v17, %v1244
  %v1246 = vmul.f32 %v988, %v1245
  %v1247 = vmul.f32 %v992, %v1245
  %v1248 = vmul.f32 %v996, %v1245
  %v1249 = vmul.f32 %v1000, %v1245
  %v1250 = vmul.f32 %v1004, %v1245
  %v1251 = vmul.f32 %v1008, %v1245
  %v1252 = vmul.f32 %v1012, %v1245
  %v1253 = vmul.f32 %v1016, %v1245
  %v1254 = vmul.f32 %v1020, %v1245
  %v1255 = vmul.f32 %v1024, %v1245
  %v1256 = vmul.f32 %v1028, %v1245
  %v1257 = vmul.f32 %v1032, %v1245
  %v1258 = vmul.f32 %v1036, %v1245
  %v1259 = vmul.f32 %v1040, %v1245
  %v1260 = vmul.f32 %v1044, %v1245
  %v1261 = vmul.f32 %v1048, %v1245
  %v1262 = vmul.f32 %v1052, %v1245
  %v1263 = vmul.f32 %v1056, %v1245
  %v1264 = vmul.f32 %v1060, %v1245
  %v1265 = vmul.f32 %v1064, %v1245
  %v1266 = vmul.f32 %v1068, %v1245
  %v1267 = vmul.f32 %v1072, %v1245
  %v1268 = vmul.f32 %v1076, %v1245
  %v1269 = vmul.f32 %v1080, %v1245
  %v1270 = vmul.f32 %v1084, %v1245
  %v1271 = vmul.f32 %v1088, %v1245
  %v1272 = vmul.f32 %v1092, %v1245
  %v1273 = vmul.f32 %v1096, %v1245
  %v1274 = vmul.f32 %v1100, %v1245
  %v1275 = vmul.f32 %v1104, %v1245
  %v1276 = vmul.f32 %v1108, %v1245
  %v1277 = vmul.f32 %v1112, %v1245
  %v1278 = vmul.f32 %v1116, %v1245
  %v1279 = vmul.f32 %v1120, %v1245
  %v1280 = vmul.f32 %v1124, %v1245
  %v1281 = vmul.f32 %v1128, %v1245
  %v1282 = vmul.f32 %v1132, %v1245
  %v1283 = vmul.f32 %v1136, %v1245
  %v1284 = vmul.f32 %v1140, %v1245
  %v1285 = vmul.f32 %v1144, %v1245
  %v1286 = vmul.f32 %v1148, %v1245
  %v1287 = vmul.f32 %v1152, %v1245
  %v1288 = vmul.f32 %v1156, %v1245
  %v1289 = vmul.f32 %v1160, %v1245
  %v1290 = vmul.f32 %v1164, %v1245
  %v1291 = vmul.f32 %v1168, %v1245
  %v1292 = vmul.f32 %v1172, %v1245
  %v1293 = vmul.f32 %v1176, %v1245
  %v1294 = vmul.f32 %v1180, %v1245
  %v1295 = vmul.f32 %v1184, %v1245
  %v1296 = vmul.f32 %v1188, %v1245
  %v1297 = vmul.f32 %v1192, %v1245
  %v1298 = vmul.f32 %v1196, %v1245
  %v1299 = vmul.f32 %v1200, %v1245
  %v1300 = vmul.f32 %v1204, %v1245
  %v1301 = vmul.f32 %v1208, %v1245
  %v1302 = vmul.f32 %v1212, %v1245
  %v1303 = vmul.f32 %v1216, %v1245
  %v1304 = vmul.f32 %v1220, %v1245
  %v1305 = vmul.f32 %v1224, %v1245
  %v1306 = vmul.f32 %v1228, %v1245
  %v1307 = vmul.f32 %v1232, %v1245
  %v1308 = vmul.f32 %v1236, %v1245
  %v1309 = vmul.f32 %v1240, %v1245
  %v1310 = vadd.f32 %v922, %v1246
  %v1311 = vadd.f32 %v923, %v1247
  %v1312 = vadd.f32 %v924, %v1248
  %v1313 = vadd.f32 %v925, %v1249
  %v1314 = vadd.f32 %v926, %v1250
  %v1315 = vadd.f32 %v927, %v1251
  %v1316 = vadd.f32 %v928, %v1252
  %v1317 = vadd.f32 %v929, %v1253
  %v1318 = vadd.f32 %v930, %v1254
  %v1319 = vadd.f32 %v931, %v1255
  %v1320 = vadd.f32 %v932, %v1256
  %v1321 = vadd.f32 %v933, %v1257
  %v1322 = vadd.f32 %v934, %v1258
  %v1323 = vadd.f32 %v935, %v1259
  %v1324 = vadd.f32 %v936, %v1260
  %v1325 = vadd.f32 %v937, %v1261
  %v1326 = vadd.f32 %v938, %v1262
  %v1327 = vadd.f32 %v939, %v1263
  %v1328 = vadd.f32 %v940, %v1264
  %v1329 = vadd.f32 %v941, %v1265
  %v1330 = vadd.f32 %v942, %v1266
  %v1331 = vadd.f32 %v943, %v1267
  %v1332 = vadd.f32 %v944, %v1268
  %v1333 = vadd.f32 %v945, %v1269
  %v1334 = vadd.f32 %v946, %v1270
  %v1335 = vadd.f32 %v947, %v1271
  %v1336 = vadd.f32 %v948, %v1272
  %v1337 = vadd.f32 %v949, %v1273
  %v1338 = vadd.f32 %v950, %v1274
  %v1339 = vadd.f32 %v951, %v1275
  %v1340 = vadd.f32 %v952, %v1276
  %v1341 = vadd.f32 %v953, %v1277
  %v1342 = vadd.f32 %v954, %v1278
  %v1343 = vadd.f32 %v955, %v1279
  %v1344 = vadd.f32 %v956, %v1280
  %v1345 = vadd.f32 %v957, %v1281
  %v1346 = vadd.f32 %v958, %v1282
  %v1347 = vadd.f32 %v959, %v1283
  %v1348 = vadd.f32 %v960, %v1284
  %v1349 = vadd.f32 %v961, %v1285
  %v1350 = vadd.f32 %v962, %v1286
  %v1351 = vadd.f32 %v963, %v1287
  %v1352 = vadd.f32 %v964, %v1288
  %v1353 = vadd.f32 %v965, %v1289
  %v1354 = vadd.f32 %v966, %v1290
  %v1355 = vadd.f32 %v967, %v1291
  %v1356 = vadd.f32 %v968, %v1292
  %v1357 = vadd.f32 %v969, %v1293
  %v1358 = vadd.f32 %v970, %v1294
  %v1359 = vadd.f32 %v971, %v1295
  %v1360 = vadd.f32 %v972, %v1296
  %v1361 = vadd.f32 %v973, %v1297
  %v1362 = vadd.f32 %v974, %v1298
  %v1363 = vadd.f32 %v975, %v1299
  %v1364 = vadd.f32 %v976, %v1300
  %v1365 = vadd.f32 %v977, %v1301
  %v1366 = vadd.f32 %v978, %v1302
  %v1367 = vadd.f32 %v979, %v1303
  %v1368 = vadd.f32 %v980, %v1304
  %v1369 = vadd.f32 %v981, %v1305
  %v1370 = vadd.f32 %v982, %v1306
  %v1371 = vadd.f32 %v983, %v1307
  %v1372 = vadd.f32 %v984, %v1308
  %v1373 = vadd.f32 %v985, %v1309
  %v1374 = vld [vmem:[%s3] sm:$0x1]
  %v1376 = vlaneseq
  %v1377 = vshrl.u32 %v1376, 7
  %v1378 = vsub.s32 0, %v1377
  %v1379 = vrot.slane %v1374, %v1378
  %v1381 = vadd.f32 %v1310, %v1379
  %v1382 = vadd.f32 %v1311, %v1379
  %v1383 = vadd.f32 %v1312, %v1379
  %v1384 = vadd.f32 %v1313, %v1379
  %v1385 = vadd.f32 %v1314, %v1379
  %v1386 = vadd.f32 %v1315, %v1379
  %v1387 = vadd.f32 %v1316, %v1379
  %v1388 = vadd.f32 %v1317, %v1379
  %v1389 = vadd.f32 %v1318, %v1379
  %v1390 = vadd.f32 %v1319, %v1379
  %v1391 = vadd.f32 %v1320, %v1379
  %v1392 = vadd.f32 %v1321, %v1379
  %v1393 = vadd.f32 %v1322, %v1379
  %v1394 = vadd.f32 %v1323, %v1379
  %v1395 = vadd.f32 %v1324, %v1379
  %v1396 = vadd.f32 %v1325, %v1379
  %v1397 = vadd.f32 %v1326, %v1379
  %v1398 = vadd.f32 %v1327, %v1379
  %v1399 = vadd.f32 %v1328, %v1379
  %v1400 = vadd.f32 %v1329, %v1379
  %v1401 = vadd.f32 %v1330, %v1379
  %v1402 = vadd.f32 %v1331, %v1379
  %v1403 = vadd.f32 %v1332, %v1379
  %v1404 = vadd.f32 %v1333, %v1379
  %v1405 = vadd.f32 %v1334, %v1379
  %v1406 = vadd.f32 %v1335, %v1379
  %v1407 = vadd.f32 %v1336, %v1379
  %v1408 = vadd.f32 %v1337, %v1379
  %v1409 = vadd.f32 %v1338, %v1379
  %v1410 = vadd.f32 %v1339, %v1379
  %v1411 = vadd.f32 %v1340, %v1379
  %v1412 = vadd.f32 %v1341, %v1379
  %v1413 = vadd.f32 %v1342, %v1379
  %v1414 = vadd.f32 %v1343, %v1379
  %v1415 = vadd.f32 %v1344, %v1379
  %v1416 = vadd.f32 %v1345, %v1379
  %v1417 = vadd.f32 %v1346, %v1379
  %v1418 = vadd.f32 %v1347, %v1379
  %v1419 = vadd.f32 %v1348, %v1379
  %v1420 = vadd.f32 %v1349, %v1379
  %v1421 = vadd.f32 %v1350, %v1379
  %v1422 = vadd.f32 %v1351, %v1379
  %v1423 = vadd.f32 %v1352, %v1379
  %v1424 = vadd.f32 %v1353, %v1379
  %v1425 = vadd.f32 %v1354, %v1379
  %v1426 = vadd.f32 %v1355, %v1379
  %v1427 = vadd.f32 %v1356, %v1379
  %v1428 = vadd.f32 %v1357, %v1379
  %v1429 = vadd.f32 %v1358, %v1379
  %v1430 = vadd.f32 %v1359, %v1379
  %v1431 = vadd.f32 %v1360, %v1379
  %v1432 = vadd.f32 %v1361, %v1379
  %v1433 = vadd.f32 %v1362, %v1379
  %v1434 = vadd.f32 %v1363, %v1379
  %v1435 = vadd.f32 %v1364, %v1379
  %v1436 = vadd.f32 %v1365, %v1379
  %v1437 = vadd.f32 %v1366, %v1379
  %v1438 = vadd.f32 %v1367, %v1379
  %v1439 = vadd.f32 %v1368, %v1379
  %v1440 = vadd.f32 %v1369, %v1379
  %v1441 = vadd.f32 %v1370, %v1379
  %v1442 = vadd.f32 %v1371, %v1379
  %v1443 = vadd.f32 %v1372, %v1379
  %v1444 = vadd.f32 %v1373, %v1379
  %vm1445 = vcmask 130048
  %1446 = vst.msk [vmem:[%s4] sm:$0xff] %vm1445, %v1381
  %1447 = vst.msk [vmem:[%s4 + $0x8] sm:$0xff] %vm1445, %v1382
  %1448 = vst.msk [vmem:[%s4 + $0x10] sm:$0xff] %vm1445, %v1383
  %1449 = vst.msk [vmem:[%s4 + $0x18] sm:$0xff] %vm1445, %v1384
  %1450 = vst.msk [vmem:[%s4 + $0x20] sm:$0xff] %vm1445, %v1385
  %1451 = vst.msk [vmem:[%s4 + $0x28] sm:$0xff] %vm1445, %v1386
  %1452 = vst.msk [vmem:[%s4 + $0x30] sm:$0xff] %vm1445, %v1387
  %1453 = vst.msk [vmem:[%s4 + $0x38] sm:$0xff] %vm1445, %v1388
  %1454 = vst.msk [vmem:[%s4 + $0x40] sm:$0xff] %vm1445, %v1389
  %1455 = vst.msk [vmem:[%s4 + $0x48] sm:$0xff] %vm1445, %v1390
  %1456 = vst.msk [vmem:[%s4 + $0x50] sm:$0xff] %vm1445, %v1391
  %1457 = vst.msk [vmem:[%s4 + $0x58] sm:$0xff] %vm1445, %v1392
  %1458 = vst.msk [vmem:[%s4 + $0x60] sm:$0xff] %vm1445, %v1393
  %1459 = vst.msk [vmem:[%s4 + $0x68] sm:$0xff] %vm1445, %v1394
  %1460 = vst.msk [vmem:[%s4 + $0x70] sm:$0xff] %vm1445, %v1395
  %1461 = vst.msk [vmem:[%s4 + $0x78] sm:$0xff] %vm1445, %v1396
  %1462 = vst.msk [vmem:[%s4 + $0x80] sm:$0xff] %vm1445, %v1397
  %1463 = vst.msk [vmem:[%s4 + $0x88] sm:$0xff] %vm1445, %v1398
  %1464 = vst.msk [vmem:[%s4 + $0x90] sm:$0xff] %vm1445, %v1399
  %1465 = vst.msk [vmem:[%s4 + $0x98] sm:$0xff] %vm1445, %v1400
  %1466 = vst.msk [vmem:[%s4 + $0xa0] sm:$0xff] %vm1445, %v1401
  %1467 = vst.msk [vmem:[%s4 + $0xa8] sm:$0xff] %vm1445, %v1402
  %1468 = vst.msk [vmem:[%s4 + $0xb0] sm:$0xff] %vm1445, %v1403
  %1469 = vst.msk [vmem:[%s4 + $0xb8] sm:$0xff] %vm1445, %v1404
  %1470 = vst.msk [vmem:[%s4 + $0xc0] sm:$0xff] %vm1445, %v1405
  %1471 = vst.msk [vmem:[%s4 + $0xc8] sm:$0xff] %vm1445, %v1406
  %1472 = vst.msk [vmem:[%s4 + $0xd0] sm:$0xff] %vm1445, %v1407
  %1473 = vst.msk [vmem:[%s4 + $0xd8] sm:$0xff] %vm1445, %v1408
  %1474 = vst.msk [vmem:[%s4 + $0xe0] sm:$0xff] %vm1445, %v1409
  %1475 = vst.msk [vmem:[%s4 + $0xe8] sm:$0xff] %vm1445, %v1410
  %1476 = vst.msk [vmem:[%s4 + $0xf0] sm:$0xff] %vm1445, %v1411
  %1477 = vst.msk [vmem:[%s4 + $0xf8] sm:$0xff] %vm1445, %v1412
  %1478 = vst.msk [vmem:[%s4 + $0x100] sm:$0xff] %vm1445, %v1413
  %1479 = vst.msk [vmem:[%s4 + $0x108] sm:$0xff] %vm1445, %v1414
  %1480 = vst.msk [vmem:[%s4 + $0x110] sm:$0xff] %vm1445, %v1415
  %1481 = vst.msk [vmem:[%s4 + $0x118] sm:$0xff] %vm1445, %v1416
  %1482 = vst.msk [vmem:[%s4 + $0x120] sm:$0xff] %vm1445, %v1417
  %1483 = vst.msk [vmem:[%s4 + $0x128] sm:$0xff] %vm1445, %v1418
  %1484 = vst.msk [vmem:[%s4 + $0x130] sm:$0xff] %vm1445, %v1419
  %1485 = vst.msk [vmem:[%s4 + $0x138] sm:$0xff] %vm1445, %v1420
  %1486 = vst.msk [vmem:[%s4 + $0x140] sm:$0xff] %vm1445, %v1421
  %1487 = vst.msk [vmem:[%s4 + $0x148] sm:$0xff] %vm1445, %v1422
  %1488 = vst.msk [vmem:[%s4 + $0x150] sm:$0xff] %vm1445, %v1423
  %1489 = vst.msk [vmem:[%s4 + $0x158] sm:$0xff] %vm1445, %v1424
  %1490 = vst.msk [vmem:[%s4 + $0x160] sm:$0xff] %vm1445, %v1425
  %1491 = vst.msk [vmem:[%s4 + $0x168] sm:$0xff] %vm1445, %v1426
  %1492 = vst.msk [vmem:[%s4 + $0x170] sm:$0xff] %vm1445, %v1427
  %1493 = vst.msk [vmem:[%s4 + $0x178] sm:$0xff] %vm1445, %v1428
  %1494 = vst.msk [vmem:[%s4 + $0x180] sm:$0xff] %vm1445, %v1429
  %1495 = vst.msk [vmem:[%s4 + $0x188] sm:$0xff] %vm1445, %v1430
  %1496 = vst.msk [vmem:[%s4 + $0x190] sm:$0xff] %vm1445, %v1431
  %1497 = vst.msk [vmem:[%s4 + $0x198] sm:$0xff] %vm1445, %v1432
  %1498 = vst.msk [vmem:[%s4 + $0x1a0] sm:$0xff] %vm1445, %v1433
  %1499 = vst.msk [vmem:[%s4 + $0x1a8] sm:$0xff] %vm1445, %v1434
  %1500 = vst.msk [vmem:[%s4 + $0x1b0] sm:$0xff] %vm1445, %v1435
  %1501 = vst.msk [vmem:[%s4 + $0x1b8] sm:$0xff] %vm1445, %v1436
  %1502 = vst.msk [vmem:[%s4 + $0x1c0] sm:$0xff] %vm1445, %v1437
  %1503 = vst.msk [vmem:[%s4 + $0x1c8] sm:$0xff] %vm1445, %v1438
  %1504 = vst.msk [vmem:[%s4 + $0x1d0] sm:$0xff] %vm1445, %v1439
  %1505 = vst.msk [vmem:[%s4 + $0x1d8] sm:$0xff] %vm1445, %v1440
  %1506 = vst.msk [vmem:[%s4 + $0x1e0] sm:$0xff] %vm1445, %v1441
  %1507 = vst.msk [vmem:[%s4 + $0x1e8] sm:$0xff] %vm1445, %v1442
  %1508 = vst.msk [vmem:[%s4 + $0x1f0] sm:$0xff] %vm1445, %v1443
  %1509 = vst.msk [vmem:[%s4 + $0x1f8] sm:$0xff] %vm1445, %v1444
  // Predicated region
  $region18: #{fno2d_forward.8} parent=0 // pred_check
    _
  $region19: #{fno2d_forward.8} parent=0 // pred_check_branch
    %1511 = sbr.rel (0) target = $region21
  $region20: #{fno2d_forward.8} parent=0 // pred_region
    _
  $region21: #{fno2d_forward.8} parent=0 // pred_fallthru
    _
  // Predicated region
  $region22: #{fno2d_forward.8} parent=0 // pred_check
    _
  $region23: #{fno2d_forward.8} parent=0 // pred_check_branch
    %1513 = sbr.rel (0) target = $region25
  $region24: #{fno2d_forward.8} parent=0 // pred_region
    _
  $region25: #{fno2d_forward.8} parent=0 // pred_fallthru
    _

// kernel: fno2d_forward.9
$region0: #{fno2d_forward.9}
  #allocation0 [shape = 'u32[]', space=smem, size = 0x4, offset = 0x4, fixed_abs, tag = 'smem constant byte address 0x4 - core index']
  #allocation1 [shape = 'u32[144,128]{1,0:T(1,128)}', space=vmem, size = 0x12000, scoped, tag = 'internal scratch']
  %s0 = inlined_call_operand.vmem [shape: f32[2,4,256], index: 0, kind: input, shape index: {}]
  %s1 = inlined_call_operand.vmem [shape: f32[2,256,512], index: 1, kind: input, shape index: {}]
  %s2 = inlined_call_operand.vmem [shape: f32[2,4,256], index: 2, kind: output, shape index: {}]
  %s3 = sld [smem:[#allocation0]]
  $region18: #{fno2d_forward.9} parent=0
    _
  %s5 = ssub.s32 1, %s3
  %s6 = scalar_select 0, %s5, %s3
  // Predicated region
  $region2: #{fno2d_forward.9} parent=0 // pred_check
    _
  $region3: #{fno2d_forward.9} parent=0 // pred_check_branch
    %8 = sbr.rel (0) target = $region5
  $region4: #{fno2d_forward.9} parent=0 // pred_region
    _
  $region5: #{fno2d_forward.9} parent=0 // pred_fallthru
    _
  // Predicated region
  $region6: #{fno2d_forward.9} parent=0 // pred_check
    _
  $region7: #{fno2d_forward.9} parent=0 // pred_check_branch
    %10 = sbr.rel (0) target = $region9
  $region8: #{fno2d_forward.9} parent=0 // pred_region
    _
  $region9: #{fno2d_forward.9} parent=0 // pred_fallthru
    _
  %v11 = vld [vmem:[%s0] sm:$0xff]
  %v12 = vld [vmem:[%s1] sm:$0xff]
  %v13 = vld [vmem:[%s1 + $0x8] sm:$0xff]
  %v14 = vld [vmem:[%s1 + $0x10] sm:$0xff]
  %v15 = vld [vmem:[%s1 + $0x18] sm:$0xff]
  %v16 = vld [vmem:[%s1 + $0x20] sm:$0xff]
  %v17 = vld [vmem:[%s1 + $0x28] sm:$0xff]
  %v18 = vld [vmem:[%s1 + $0x30] sm:$0xff]
  %v19 = vld [vmem:[%s1 + $0x38] sm:$0xff]
  %v20 = vld [vmem:[%s1 + $0x40] sm:$0xff]
  %v21 = vld [vmem:[%s1 + $0x48] sm:$0xff]
  %v22 = vld [vmem:[%s1 + $0x50] sm:$0xff]
  %v23 = vld [vmem:[%s1 + $0x58] sm:$0xff]
  %v24 = vld [vmem:[%s1 + $0x60] sm:$0xff]
  %v25 = vld [vmem:[%s1 + $0x68] sm:$0xff]
  %v26 = vld [vmem:[%s1 + $0x70] sm:$0xff]
  %v27 = vld [vmem:[%s1 + $0x78] sm:$0xff]
  %v28 = vld [vmem:[%s1 + $0x80] sm:$0xff]
  %v29 = vld [vmem:[%s1 + $0x88] sm:$0xff]
  %v30 = vld [vmem:[%s1 + $0x90] sm:$0xff]
  %v31 = vld [vmem:[%s1 + $0x98] sm:$0xff]
  %v32 = vld [vmem:[%s1 + $0xa0] sm:$0xff]
  %v33 = vld [vmem:[%s1 + $0xa8] sm:$0xff]
  %v34 = vld [vmem:[%s1 + $0xb0] sm:$0xff]
  %v35 = vld [vmem:[%s1 + $0xb8] sm:$0xff]
  %v36 = vld [vmem:[%s1 + $0xc0] sm:$0xff]
  %v37 = vld [vmem:[%s1 + $0xc8] sm:$0xff]
  %v38 = vld [vmem:[%s1 + $0xd0] sm:$0xff]
  %v39 = vld [vmem:[%s1 + $0xd8] sm:$0xff]
  %v40 = vld [vmem:[%s1 + $0xe0] sm:$0xff]
  %v41 = vld [vmem:[%s1 + $0xe8] sm:$0xff]
  %v42 = vld [vmem:[%s1 + $0xf0] sm:$0xff]
  %v43 = vld [vmem:[%s1 + $0xf8] sm:$0xff]
  %v44 = vld [vmem:[%s1 + $0x100] sm:$0xff]
  %v45 = vld [vmem:[%s1 + $0x108] sm:$0xff]
  %v46 = vld [vmem:[%s1 + $0x110] sm:$0xff]
  %v47 = vld [vmem:[%s1 + $0x118] sm:$0xff]
  %v48 = vld [vmem:[%s1 + $0x120] sm:$0xff]
  %v49 = vld [vmem:[%s1 + $0x128] sm:$0xff]
  %v50 = vld [vmem:[%s1 + $0x130] sm:$0xff]
  %v51 = vld [vmem:[%s1 + $0x138] sm:$0xff]
  %v52 = vld [vmem:[%s1 + $0x140] sm:$0xff]
  %v53 = vld [vmem:[%s1 + $0x148] sm:$0xff]
  %v54 = vld [vmem:[%s1 + $0x150] sm:$0xff]
  %v55 = vld [vmem:[%s1 + $0x158] sm:$0xff]
  %v56 = vld [vmem:[%s1 + $0x160] sm:$0xff]
  %v57 = vld [vmem:[%s1 + $0x168] sm:$0xff]
  %v58 = vld [vmem:[%s1 + $0x170] sm:$0xff]
  %v59 = vld [vmem:[%s1 + $0x178] sm:$0xff]
  %v60 = vld [vmem:[%s1 + $0x180] sm:$0xff]
  %v61 = vld [vmem:[%s1 + $0x188] sm:$0xff]
  %v62 = vld [vmem:[%s1 + $0x190] sm:$0xff]
  %v63 = vld [vmem:[%s1 + $0x198] sm:$0xff]
  %v64 = vld [vmem:[%s1 + $0x1a0] sm:$0xff]
  %v65 = vld [vmem:[%s1 + $0x1a8] sm:$0xff]
  %v66 = vld [vmem:[%s1 + $0x1b0] sm:$0xff]
  %v67 = vld [vmem:[%s1 + $0x1b8] sm:$0xff]
  %v68 = vld [vmem:[%s1 + $0x1c0] sm:$0xff]
  %v69 = vld [vmem:[%s1 + $0x1c8] sm:$0xff]
  %v70 = vld [vmem:[%s1 + $0x1d0] sm:$0xff]
  %v71 = vld [vmem:[%s1 + $0x1d8] sm:$0xff]
  %v72 = vld [vmem:[%s1 + $0x1e0] sm:$0xff]
  %v73 = vld [vmem:[%s1 + $0x1e8] sm:$0xff]
  %v74 = vld [vmem:[%s1 + $0x1f0] sm:$0xff]
  %v75 = vld [vmem:[%s1 + $0x1f8] sm:$0xff]
  %v76 = vld [vmem:[%s1 + $0x200] sm:$0xff]
  %v77 = vld [vmem:[%s1 + $0x208] sm:$0xff]
  %v78 = vld [vmem:[%s1 + $0x210] sm:$0xff]
  %v79 = vld [vmem:[%s1 + $0x218] sm:$0xff]
  %v80 = vld [vmem:[%s1 + $0x220] sm:$0xff]
  %v81 = vld [vmem:[%s1 + $0x228] sm:$0xff]
  %v82 = vld [vmem:[%s1 + $0x230] sm:$0xff]
  %v83 = vld [vmem:[%s1 + $0x238] sm:$0xff]
  %v84 = vld [vmem:[%s1 + $0x240] sm:$0xff]
  %v85 = vld [vmem:[%s1 + $0x248] sm:$0xff]
  %v86 = vld [vmem:[%s1 + $0x250] sm:$0xff]
  %v87 = vld [vmem:[%s1 + $0x258] sm:$0xff]
  %v88 = vld [vmem:[%s1 + $0x260] sm:$0xff]
  %v89 = vld [vmem:[%s1 + $0x268] sm:$0xff]
  %v90 = vld [vmem:[%s1 + $0x270] sm:$0xff]
  %v91 = vld [vmem:[%s1 + $0x278] sm:$0xff]
  %v92 = vld [vmem:[%s1 + $0x280] sm:$0xff]
  %v93 = vld [vmem:[%s1 + $0x288] sm:$0xff]
  %v94 = vld [vmem:[%s1 + $0x290] sm:$0xff]
  %v95 = vld [vmem:[%s1 + $0x298] sm:$0xff]
  %v96 = vld [vmem:[%s1 + $0x2a0] sm:$0xff]
  %v97 = vld [vmem:[%s1 + $0x2a8] sm:$0xff]
  %v98 = vld [vmem:[%s1 + $0x2b0] sm:$0xff]
  %v99 = vld [vmem:[%s1 + $0x2b8] sm:$0xff]
  %v100 = vld [vmem:[%s1 + $0x2c0] sm:$0xff]
  %v101 = vld [vmem:[%s1 + $0x2c8] sm:$0xff]
  %v102 = vld [vmem:[%s1 + $0x2d0] sm:$0xff]
  %v103 = vld [vmem:[%s1 + $0x2d8] sm:$0xff]
  %v104 = vld [vmem:[%s1 + $0x2e0] sm:$0xff]
  %v105 = vld [vmem:[%s1 + $0x2e8] sm:$0xff]
  %v106 = vld [vmem:[%s1 + $0x2f0] sm:$0xff]
  %v107 = vld [vmem:[%s1 + $0x2f8] sm:$0xff]
  %v108 = vld [vmem:[%s1 + $0x300] sm:$0xff]
  %v109 = vld [vmem:[%s1 + $0x308] sm:$0xff]
  %v110 = vld [vmem:[%s1 + $0x310] sm:$0xff]
  %v111 = vld [vmem:[%s1 + $0x318] sm:$0xff]
  %v112 = vld [vmem:[%s1 + $0x320] sm:$0xff]
  %v113 = vld [vmem:[%s1 + $0x328] sm:$0xff]
  %v114 = vld [vmem:[%s1 + $0x330] sm:$0xff]
  %v115 = vld [vmem:[%s1 + $0x338] sm:$0xff]
  %v116 = vld [vmem:[%s1 + $0x340] sm:$0xff]
  %v117 = vld [vmem:[%s1 + $0x348] sm:$0xff]
  %v118 = vld [vmem:[%s1 + $0x350] sm:$0xff]
  %v119 = vld [vmem:[%s1 + $0x358] sm:$0xff]
  %v120 = vld [vmem:[%s1 + $0x360] sm:$0xff]
  %v121 = vld [vmem:[%s1 + $0x368] sm:$0xff]
  %v122 = vld [vmem:[%s1 + $0x370] sm:$0xff]
  %v123 = vld [vmem:[%s1 + $0x378] sm:$0xff]
  %v124 = vld [vmem:[%s1 + $0x380] sm:$0xff]
  %v125 = vld [vmem:[%s1 + $0x388] sm:$0xff]
  %v126 = vld [vmem:[%s1 + $0x390] sm:$0xff]
  %v127 = vld [vmem:[%s1 + $0x398] sm:$0xff]
  %v128 = vld [vmem:[%s1 + $0x3a0] sm:$0xff]
  %v129 = vld [vmem:[%s1 + $0x3a8] sm:$0xff]
  %v130 = vld [vmem:[%s1 + $0x3b0] sm:$0xff]
  %v131 = vld [vmem:[%s1 + $0x3b8] sm:$0xff]
  %v132 = vld [vmem:[%s1 + $0x3c0] sm:$0xff]
  %v133 = vld [vmem:[%s1 + $0x3c8] sm:$0xff]
  %v134 = vld [vmem:[%s1 + $0x3d0] sm:$0xff]
  %v135 = vld [vmem:[%s1 + $0x3d8] sm:$0xff]
  %v136 = vld [vmem:[%s1 + $0x3e0] sm:$0xff]
  %v137 = vld [vmem:[%s1 + $0x3e8] sm:$0xff]
  %v138 = vld [vmem:[%s1 + $0x3f0] sm:$0xff]
  %v139 = vld [vmem:[%s1 + $0x3f8] sm:$0xff]
  %v141 = vcombine.high %v11, %v11
  %143 = vmatprep.subr.mxu0 %v13
  %144 = vmatpush1.msra.mxu0 %v12
  %145 = vmatprep.subr.mxu0 %v17
  %146 = vmatpush1.msra.mxu0 %v16
  %147 = vmatprep.subr.mxu0 %v21
  %148 = vmatpush1.msra.mxu0 %v20
  %149 = vmatprep.subr.mxu0 %v25
  %150 = vmatpush1.msra.mxu0 %v24
  %151 = vmatprep.subr.mxu0 %v29
  %152 = vmatpush1.msra.mxu0 %v28
  %153 = vmatprep.subr.mxu0 %v33
  %154 = vmatpush1.msra.mxu0 %v32
  %155 = vmatprep.subr.mxu0 %v37
  %156 = vmatpush1.msra.mxu0 %v36
  %157 = vmatprep.subr.mxu0 %v41
  %158 = vmatpush1.msra.mxu0 %v40
  %159 = vmatprep.subr.mxu0 %v45
  %160 = vmatpush1.msra.mxu0 %v44
  %161 = vmatprep.subr.mxu0 %v49
  %162 = vmatpush1.msra.mxu0 %v48
  %163 = vmatprep.subr.mxu0 %v53
  %164 = vmatpush1.msra.mxu0 %v52
  %165 = vmatprep.subr.mxu0 %v57
  %166 = vmatpush1.msra.mxu0 %v56
  %167 = vmatprep.subr.mxu0 %v61
  %168 = vmatpush1.msra.mxu0 %v60
  %169 = vmatprep.subr.mxu0 %v65
  %170 = vmatpush1.msra.mxu0 %v64
  %171 = vmatprep.subr.mxu0 %v69
  %172 = vmatpush1.msra.mxu0 %v68
  %173 = vmatprep.subr.mxu0 %v73
  %174 = vmatpush1.msra.mxu0 %v72
  %175 = vmatprep.subr.mxu0 %v77
  %176 = vmatpush1.msra.mxu0 %v76
  %177 = vmatprep.subr.mxu0 %v81
  %178 = vmatpush1.msra.mxu0 %v80
  %179 = vmatprep.subr.mxu0 %v85
  %180 = vmatpush1.msra.mxu0 %v84
  %181 = vmatprep.subr.mxu0 %v89
  %182 = vmatpush1.msra.mxu0 %v88
  %183 = vmatprep.subr.mxu0 %v93
  %184 = vmatpush1.msra.mxu0 %v92
  %185 = vmatprep.subr.mxu0 %v97
  %186 = vmatpush1.msra.mxu0 %v96
  %187 = vmatprep.subr.mxu0 %v101
  %188 = vmatpush1.msra.mxu0 %v100
  %189 = vmatprep.subr.mxu0 %v105
  %190 = vmatpush1.msra.mxu0 %v104
  %191 = vmatprep.subr.mxu0 %v109
  %192 = vmatpush1.msra.mxu0 %v108
  %193 = vmatprep.subr.mxu0 %v113
  %194 = vmatpush1.msra.mxu0 %v112
  %195 = vmatprep.subr.mxu0 %v117
  %196 = vmatpush1.msra.mxu0 %v116
  %197 = vmatprep.subr.mxu0 %v121
  %198 = vmatpush1.msra.mxu0 %v120
  %199 = vmatprep.subr.mxu0 %v125
  %200 = vmatpush1.msra.mxu0 %v124
  %201 = vmatprep.subr.mxu0 %v129
  %202 = vmatpush1.msra.mxu0 %v128
  %203 = vmatprep.subr.mxu0 %v133
  %204 = vmatpush1.msra.mxu0 %v132
  %205 = vmatprep.subr.mxu0 %v137
  %206 = vmatpush1.msra.mxu0 %v136
  %207 = vmatprep.mubr.f32.mxu0 %v141
  %208 = vmatmul.mubr.f32.gmra.mrb[0].mxu0 %v11
  %v209 = vpop.f32.mrb[0].mxu0
  %v210 = vadd.f32 0.0, %v209
  %v211 = vpop.f32.mrb[0].mxu0
  %v212 = vadd.f32 0.0, %v211
  %213 = vdwg.mxu0
  %214 = vmatprep.subr.mxu0 %v15
  %215 = vmatpush1.msra.mxu0 %v14
  %216 = vmatprep.subr.mxu0 %v19
  %217 = vmatpush1.msra.mxu0 %v18
  %218 = vmatprep.subr.mxu0 %v23
  %219 = vmatpush1.msra.mxu0 %v22
  %220 = vmatprep.subr.mxu0 %v27
  %221 = vmatpush1.msra.mxu0 %v26
  %222 = vmatprep.subr.mxu0 %v31
  %223 = vmatpush1.msra.mxu0 %v30
  %224 = vmatprep.subr.mxu0 %v35
  %225 = vmatpush1.msra.mxu0 %v34
  %226 = vmatprep.subr.mxu0 %v39
  %227 = vmatpush1.msra.mxu0 %v38
  %228 = vmatprep.subr.mxu0 %v43
  %229 = vmatpush1.msra.mxu0 %v42
  %230 = vmatprep.subr.mxu0 %v47
  %231 = vmatpush1.msra.mxu0 %v46
  %232 = vmatprep.subr.mxu0 %v51
  %233 = vmatpush1.msra.mxu0 %v50
  %234 = vmatprep.subr.mxu0 %v55
  %235 = vmatpush1.msra.mxu0 %v54
  %236 = vmatprep.subr.mxu0 %v59
  %237 = vmatpush1.msra.mxu0 %v58
  %238 = vmatprep.subr.mxu0 %v63
  %239 = vmatpush1.msra.mxu0 %v62
  %240 = vmatprep.subr.mxu0 %v67
  %241 = vmatpush1.msra.mxu0 %v66
  %242 = vmatprep.subr.mxu0 %v71
  %243 = vmatpush1.msra.mxu0 %v70
  %244 = vmatprep.subr.mxu0 %v75
  %245 = vmatpush1.msra.mxu0 %v74
  %246 = vmatprep.subr.mxu0 %v79
  %247 = vmatpush1.msra.mxu0 %v78
  %248 = vmatprep.subr.mxu0 %v83
  %249 = vmatpush1.msra.mxu0 %v82
  %250 = vmatprep.subr.mxu0 %v87
  %251 = vmatpush1.msra.mxu0 %v86
  %252 = vmatprep.subr.mxu0 %v91
  %253 = vmatpush1.msra.mxu0 %v90
  %254 = vmatprep.subr.mxu0 %v95
  %255 = vmatpush1.msra.mxu0 %v94
  %256 = vmatprep.subr.mxu0 %v99
  %257 = vmatpush1.msra.mxu0 %v98
  %258 = vmatprep.subr.mxu0 %v103
  %259 = vmatpush1.msra.mxu0 %v102
  %260 = vmatprep.subr.mxu0 %v107
  %261 = vmatpush1.msra.mxu0 %v106
  %262 = vmatprep.subr.mxu0 %v111
  %263 = vmatpush1.msra.mxu0 %v110
  %264 = vmatprep.subr.mxu0 %v115
  %265 = vmatpush1.msra.mxu0 %v114
  %266 = vmatprep.subr.mxu0 %v119
  %267 = vmatpush1.msra.mxu0 %v118
  %268 = vmatprep.subr.mxu0 %v123
  %269 = vmatpush1.msra.mxu0 %v122
  %270 = vmatprep.subr.mxu0 %v127
  %271 = vmatpush1.msra.mxu0 %v126
  %272 = vmatprep.subr.mxu0 %v131
  %273 = vmatpush1.msra.mxu0 %v130
  %274 = vmatprep.subr.mxu0 %v135
  %275 = vmatpush1.msra.mxu0 %v134
  %276 = vmatprep.subr.mxu0 %v139
  %277 = vmatpush1.msra.mxu0 %v138
  %278 = vmatprep.mubr.f32.mxu0 %v141
  %279 = vmatmul.mubr.f32.gmra.mrb[0].mxu0 %v11
  %v280 = vpop.f32.mrb[0].mxu0
  %v281 = vadd.f32 0.0, %v280
  %v282 = vpop.f32.mrb[0].mxu0
  %v283 = vadd.f32 0.0, %v282
  %284 = vdwg.mxu0
  %v287 = vrot.slane %v281, 2
  %v288 = vrot.slane %v283, 2
  %v291 = vsub.f32 %v210, %v287
  %v292 = vsub.f32 %v212, %v288
  %v295 = vrot.slane %v210, 2
  %v296 = vrot.slane %v212, 2
  %v299 = vadd.f32 %v281, %v295
  %v300 = vadd.f32 %v283, %v296
  %v303 = vrot.slane %v299, 6
  %v304 = vrot.slane %v300, 6
  %vm307 = vcmask 1041408
  %v308 = vsel %vm307, %v291, %v303
  %v309 = vsel %vm307, %v292, %v304
  %v312 = vcombine.low %v308, %v309
  %314 = vst [vmem:[%s2] sm:$0xff] %v312
  %s315 = scalar_lea.vmem %s0, 8
  %v316 = vld [vmem:[%s315] sm:$0xff]
  %s317 = scalar_lea.vmem %s1, 1024
  %v318 = vld [vmem:[%s317] sm:$0xff]
  %v319 = vld [vmem:[%s317 + $0x8] sm:$0xff]
  %v320 = vld [vmem:[%s317 + $0x10] sm:$0xff]
  %v321 = vld [vmem:[%s317 + $0x18] sm:$0xff]
  %v322 = vld [vmem:[%s317 + $0x20] sm:$0xff]
  %v323 = vld [vmem:[%s317 + $0x28] sm:$0xff]
  %v324 = vld [vmem:[%s317 + $0x30] sm:$0xff]
  %v325 = vld [vmem:[%s317 + $0x38] sm:$0xff]
  %v326 = vld [vmem:[%s317 + $0x40] sm:$0xff]
  %v327 = vld [vmem:[%s317 + $0x48] sm:$0xff]
  %v328 = vld [vmem:[%s317 + $0x50] sm:$0xff]
  %v329 = vld [vmem:[%s317 + $0x58] sm:$0xff]
  %v330 = vld [vmem:[%s317 + $0x60] sm:$0xff]
  %v331 = vld [vmem:[%s317 + $0x68] sm:$0xff]
  %v332 = vld [vmem:[%s317 + $0x70] sm:$0xff]
  %v333 = vld [vmem:[%s317 + $0x78] sm:$0xff]
  %v334 = vld [vmem:[%s317 + $0x80] sm:$0xff]
  %v335 = vld [vmem:[%s317 + $0x88] sm:$0xff]
  %v336 = vld [vmem:[%s317 + $0x90] sm:$0xff]
  %v337 = vld [vmem:[%s317 + $0x98] sm:$0xff]
  %v338 = vld [vmem:[%s317 + $0xa0] sm:$0xff]
  %v339 = vld [vmem:[%s317 + $0xa8] sm:$0xff]
  %v340 = vld [vmem:[%s317 + $0xb0] sm:$0xff]
  %v341 = vld [vmem:[%s317 + $0xb8] sm:$0xff]
  %v342 = vld [vmem:[%s317 + $0xc0] sm:$0xff]
  %v343 = vld [vmem:[%s317 + $0xc8] sm:$0xff]
  %v344 = vld [vmem:[%s317 + $0xd0] sm:$0xff]
  %v345 = vld [vmem:[%s317 + $0xd8] sm:$0xff]
  %v346 = vld [vmem:[%s317 + $0xe0] sm:$0xff]
  %v347 = vld [vmem:[%s317 + $0xe8] sm:$0xff]
  %v348 = vld [vmem:[%s317 + $0xf0] sm:$0xff]
  %v349 = vld [vmem:[%s317 + $0xf8] sm:$0xff]
  %v350 = vld [vmem:[%s317 + $0x100] sm:$0xff]
  %v351 = vld [vmem:[%s317 + $0x108] sm:$0xff]
  %v352 = vld [vmem:[%s317 + $0x110] sm:$0xff]
  %v353 = vld [vmem:[%s317 + $0x118] sm:$0xff]
  %v354 = vld [vmem:[%s317 + $0x120] sm:$0xff]
  %v355 = vld [vmem:[%s317 + $0x128] sm:$0xff]
  %v356 = vld [vmem:[%s317 + $0x130] sm:$0xff]
  %v357 = vld [vmem:[%s317 + $0x138] sm:$0xff]
  %v358 = vld [vmem:[%s317 + $0x140] sm:$0xff]
  %v359 = vld [vmem:[%s317 + $0x148] sm:$0xff]
  %v360 = vld [vmem:[%s317 + $0x150] sm:$0xff]
  %v361 = vld [vmem:[%s317 + $0x158] sm:$0xff]
  %v362 = vld [vmem:[%s317 + $0x160] sm:$0xff]
  %v363 = vld [vmem:[%s317 + $0x168] sm:$0xff]
  %v364 = vld [vmem:[%s317 + $0x170] sm:$0xff]
  %v365 = vld [vmem:[%s317 + $0x178] sm:$0xff]
  %v366 = vld [vmem:[%s317 + $0x180] sm:$0xff]
  %v367 = vld [vmem:[%s317 + $0x188] sm:$0xff]
  %v368 = vld [vmem:[%s317 + $0x190] sm:$0xff]
  %v369 = vld [vmem:[%s317 + $0x198] sm:$0xff]
  %v370 = vld [vmem:[%s317 + $0x1a0] sm:$0xff]
  %v371 = vld [vmem:[%s317 + $0x1a8] sm:$0xff]
  %v372 = vld [vmem:[%s317 + $0x1b0] sm:$0xff]
  %v373 = vld [vmem:[%s317 + $0x1b8] sm:$0xff]
  %v374 = vld [vmem:[%s317 + $0x1c0] sm:$0xff]
  %v375 = vld [vmem:[%s317 + $0x1c8] sm:$0xff]
  %v376 = vld [vmem:[%s317 + $0x1d0] sm:$0xff]
  %v377 = vld [vmem:[%s317 + $0x1d8] sm:$0xff]
  %v378 = vld [vmem:[%s317 + $0x1e0] sm:$0xff]
  %v379 = vld [vmem:[%s317 + $0x1e8] sm:$0xff]
  %v380 = vld [vmem:[%s317 + $0x1f0] sm:$0xff]
  %v381 = vld [vmem:[%s317 + $0x1f8] sm:$0xff]
  %v382 = vld [vmem:[%s317 + $0x200] sm:$0xff]
  %v383 = vld [vmem:[%s317 + $0x208] sm:$0xff]
  %v384 = vld [vmem:[%s317 + $0x210] sm:$0xff]
  %v385 = vld [vmem:[%s317 + $0x218] sm:$0xff]
  %v386 = vld [vmem:[%s317 + $0x220] sm:$0xff]
  %v387 = vld [vmem:[%s317 + $0x228] sm:$0xff]
  %v388 = vld [vmem:[%s317 + $0x230] sm:$0xff]
  %v389 = vld [vmem:[%s317 + $0x238] sm:$0xff]
  %v390 = vld [vmem:[%s317 + $0x240] sm:$0xff]
  %v391 = vld [vmem:[%s317 + $0x248] sm:$0xff]
  %v392 = vld [vmem:[%s317 + $0x250] sm:$0xff]
  %v393 = vld [vmem:[%s317 + $0x258] sm:$0xff]
  %v394 = vld [vmem:[%s317 + $0x260] sm:$0xff]
  %v395 = vld [vmem:[%s317 + $0x268] sm:$0xff]
  %v396 = vld [vmem:[%s317 + $0x270] sm:$0xff]
  %v397 = vld [vmem:[%s317 + $0x278] sm:$0xff]
  %v398 = vld [vmem:[%s317 + $0x280] sm:$0xff]
  %v399 = vld [vmem:[%s317 + $0x288] sm:$0xff]
  %v400 = vld [vmem:[%s317 + $0x290] sm:$0xff]
  %v401 = vld [vmem:[%s317 + $0x298] sm:$0xff]
  %v402 = vld [vmem:[%s317 + $0x2a0] sm:$0xff]
  %v403 = vld [vmem:[%s317 + $0x2a8] sm:$0xff]
  %v404 = vld [vmem:[%s317 + $0x2b0] sm:$0xff]
  %v405 = vld [vmem:[%s317 + $0x2b8] sm:$0xff]
  %v406 = vld [vmem:[%s317 + $0x2c0] sm:$0xff]
  %v407 = vld [vmem:[%s317 + $0x2c8] sm:$0xff]
  %v408 = vld [vmem:[%s317 + $0x2d0] sm:$0xff]
  %v409 = vld [vmem:[%s317 + $0x2d8] sm:$0xff]
  %v410 = vld [vmem:[%s317 + $0x2e0] sm:$0xff]
  %v411 = vld [vmem:[%s317 + $0x2e8] sm:$0xff]
  %v412 = vld [vmem:[%s317 + $0x2f0] sm:$0xff]
  %v413 = vld [vmem:[%s317 + $0x2f8] sm:$0xff]
  %v414 = vld [vmem:[%s317 + $0x300] sm:$0xff]
  %v415 = vld [vmem:[%s317 + $0x308] sm:$0xff]
  %v416 = vld [vmem:[%s317 + $0x310] sm:$0xff]
  %v417 = vld [vmem:[%s317 + $0x318] sm:$0xff]
  %v418 = vld [vmem:[%s317 + $0x320] sm:$0xff]
  %v419 = vld [vmem:[%s317 + $0x328] sm:$0xff]
  %v420 = vld [vmem:[%s317 + $0x330] sm:$0xff]
  %v421 = vld [vmem:[%s317 + $0x338] sm:$0xff]
  %v422 = vld [vmem:[%s317 + $0x340] sm:$0xff]
  %v423 = vld [vmem:[%s317 + $0x348] sm:$0xff]
  %v424 = vld [vmem:[%s317 + $0x350] sm:$0xff]
  %v425 = vld [vmem:[%s317 + $0x358] sm:$0xff]
  %v426 = vld [vmem:[%s317 + $0x360] sm:$0xff]
  %v427 = vld [vmem:[%s317 + $0x368] sm:$0xff]
  %v428 = vld [vmem:[%s317 + $0x370] sm:$0xff]
  %v429 = vld [vmem:[%s317 + $0x378] sm:$0xff]
  %v430 = vld [vmem:[%s317 + $0x380] sm:$0xff]
  %v431 = vld [vmem:[%s317 + $0x388] sm:$0xff]
  %v432 = vld [vmem:[%s317 + $0x390] sm:$0xff]
  %v433 = vld [vmem:[%s317 + $0x398] sm:$0xff]
  %v434 = vld [vmem:[%s317 + $0x3a0] sm:$0xff]
  %v435 = vld [vmem:[%s317 + $0x3a8] sm:$0xff]
  %v436 = vld [vmem:[%s317 + $0x3b0] sm:$0xff]
  %v437 = vld [vmem:[%s317 + $0x3b8] sm:$0xff]
  %v438 = vld [vmem:[%s317 + $0x3c0] sm:$0xff]
  %v439 = vld [vmem:[%s317 + $0x3c8] sm:$0xff]
  %v440 = vld [vmem:[%s317 + $0x3d0] sm:$0xff]
  %v441 = vld [vmem:[%s317 + $0x3d8] sm:$0xff]
  %v442 = vld [vmem:[%s317 + $0x3e0] sm:$0xff]
  %v443 = vld [vmem:[%s317 + $0x3e8] sm:$0xff]
  %v444 = vld [vmem:[%s317 + $0x3f0] sm:$0xff]
  %v445 = vld [vmem:[%s317 + $0x3f8] sm:$0xff]
  %v447 = vcombine.high %v316, %v316
  %449 = vmatprep.subr.mxu0 %v319
  %450 = vmatpush1.msra.mxu0 %v318
  %451 = vmatprep.subr.mxu0 %v323
  %452 = vmatpush1.msra.mxu0 %v322
  %453 = vmatprep.subr.mxu0 %v327
  %454 = vmatpush1.msra.mxu0 %v326
  %455 = vmatprep.subr.mxu0 %v331
  %456 = vmatpush1.msra.mxu0 %v330
  %457 = vmatprep.subr.mxu0 %v335
  %458 = vmatpush1.msra.mxu0 %v334
  %459 = vmatprep.subr.mxu0 %v339
  %460 = vmatpush1.msra.mxu0 %v338
  %461 = vmatprep.subr.mxu0 %v343
  %462 = vmatpush1.msra.mxu0 %v342
  %463 = vmatprep.subr.mxu0 %v347
  %464 = vmatpush1.msra.mxu0 %v346
  %465 = vmatprep.subr.mxu0 %v351
  %466 = vmatpush1.msra.mxu0 %v350
  %467 = vmatprep.subr.mxu0 %v355
  %468 = vmatpush1.msra.mxu0 %v354
  %469 = vmatprep.subr.mxu0 %v359
  %470 = vmatpush1.msra.mxu0 %v358
  %471 = vmatprep.subr.mxu0 %v363
  %472 = vmatpush1.msra.mxu0 %v362
  %473 = vmatprep.subr.mxu0 %v367
  %474 = vmatpush1.msra.mxu0 %v366
  %475 = vmatprep.subr.mxu0 %v371
  %476 = vmatpush1.msra.mxu0 %v370
  %477 = vmatprep.subr.mxu0 %v375
  %478 = vmatpush1.msra.mxu0 %v374
  %479 = vmatprep.subr.mxu0 %v379
  %480 = vmatpush1.msra.mxu0 %v378
  %481 = vmatprep.subr.mxu0 %v383
  %482 = vmatpush1.msra.mxu0 %v382
  %483 = vmatprep.subr.mxu0 %v387
  %484 = vmatpush1.msra.mxu0 %v386
  %485 = vmatprep.subr.mxu0 %v391
  %486 = vmatpush1.msra.mxu0 %v390
  %487 = vmatprep.subr.mxu0 %v395
  %488 = vmatpush1.msra.mxu0 %v394
  %489 = vmatprep.subr.mxu0 %v399
  %490 = vmatpush1.msra.mxu0 %v398
  %491 = vmatprep.subr.mxu0 %v403
  %492 = vmatpush1.msra.mxu0 %v402
  %493 = vmatprep.subr.mxu0 %v407
  %494 = vmatpush1.msra.mxu0 %v406
  %495 = vmatprep.subr.mxu0 %v411
  %496 = vmatpush1.msra.mxu0 %v410
  %497 = vmatprep.subr.mxu0 %v415
  %498 = vmatpush1.msra.mxu0 %v414
  %499 = vmatprep.subr.mxu0 %v419
  %500 = vmatpush1.msra.mxu0 %v418
  %501 = vmatprep.subr.mxu0 %v423
  %502 = vmatpush1.msra.mxu0 %v422
  %503 = vmatprep.subr.mxu0 %v427
  %504 = vmatpush1.msra.mxu0 %v426
  %505 = vmatprep.subr.mxu0 %v431
  %506 = vmatpush1.msra.mxu0 %v430
  %507 = vmatprep.subr.mxu0 %v435
  %508 = vmatpush1.msra.mxu0 %v434
  %509 = vmatprep.subr.mxu0 %v439
  %510 = vmatpush1.msra.mxu0 %v438
  %511 = vmatprep.subr.mxu0 %v443
  %512 = vmatpush1.msra.mxu0 %v442
  %513 = vmatprep.mubr.f32.mxu0 %v447
  %514 = vmatmul.mubr.f32.gmra.mrb[0].mxu0 %v316
  %v515 = vpop.f32.mrb[0].mxu0
  %v516 = vadd.f32 0.0, %v515
  %v517 = vpop.f32.mrb[0].mxu0
  %v518 = vadd.f32 0.0, %v517
  %519 = vdwg.mxu0
  %520 = vmatprep.subr.mxu0 %v321
  %521 = vmatpush1.msra.mxu0 %v320
  %522 = vmatprep.subr.mxu0 %v325
  %523 = vmatpush1.msra.mxu0 %v324
  %524 = vmatprep.subr.mxu0 %v329
  %525 = vmatpush1.msra.mxu0 %v328
  %526 = vmatprep.subr.mxu0 %v333
  %527 = vmatpush1.msra.mxu0 %v332
  %528 = vmatprep.subr.mxu0 %v337
  %529 = vmatpush1.msra.mxu0 %v336
  %530 = vmatprep.subr.mxu0 %v341
  %531 = vmatpush1.msra.mxu0 %v340
  %532 = vmatprep.subr.mxu0 %v345
  %533 = vmatpush1.msra.mxu0 %v344
  %534 = vmatprep.subr.mxu0 %v349
  %535 = vmatpush1.msra.mxu0 %v348
  %536 = vmatprep.subr.mxu0 %v353
  %537 = vmatpush1.msra.mxu0 %v352
  %538 = vmatprep.subr.mxu0 %v357
  %539 = vmatpush1.msra.mxu0 %v356
  %540 = vmatprep.subr.mxu0 %v361
  %541 = vmatpush1.msra.mxu0 %v360
  %542 = vmatprep.subr.mxu0 %v365
  %543 = vmatpush1.msra.mxu0 %v364
  %544 = vmatprep.subr.mxu0 %v369
  %545 = vmatpush1.msra.mxu0 %v368
  %546 = vmatprep.subr.mxu0 %v373
  %547 = vmatpush1.msra.mxu0 %v372
  %548 = vmatprep.subr.mxu0 %v377
  %549 = vmatpush1.msra.mxu0 %v376
  %550 = vmatprep.subr.mxu0 %v381
  %551 = vmatpush1.msra.mxu0 %v380
  %552 = vmatprep.subr.mxu0 %v385
  %553 = vmatpush1.msra.mxu0 %v384
  %554 = vmatprep.subr.mxu0 %v389
  %555 = vmatpush1.msra.mxu0 %v388
  %556 = vmatprep.subr.mxu0 %v393
  %557 = vmatpush1.msra.mxu0 %v392
  %558 = vmatprep.subr.mxu0 %v397
  %559 = vmatpush1.msra.mxu0 %v396
  %560 = vmatprep.subr.mxu0 %v401
  %561 = vmatpush1.msra.mxu0 %v400
  %562 = vmatprep.subr.mxu0 %v405
  %563 = vmatpush1.msra.mxu0 %v404
  %564 = vmatprep.subr.mxu0 %v409
  %565 = vmatpush1.msra.mxu0 %v408
  %566 = vmatprep.subr.mxu0 %v413
  %567 = vmatpush1.msra.mxu0 %v412
  %568 = vmatprep.subr.mxu0 %v417
  %569 = vmatpush1.msra.mxu0 %v416
  %570 = vmatprep.subr.mxu0 %v421
  %571 = vmatpush1.msra.mxu0 %v420
  %572 = vmatprep.subr.mxu0 %v425
  %573 = vmatpush1.msra.mxu0 %v424
  %574 = vmatprep.subr.mxu0 %v429
  %575 = vmatpush1.msra.mxu0 %v428
  %576 = vmatprep.subr.mxu0 %v433
  %577 = vmatpush1.msra.mxu0 %v432
  %578 = vmatprep.subr.mxu0 %v437
  %579 = vmatpush1.msra.mxu0 %v436
  %580 = vmatprep.subr.mxu0 %v441
  %581 = vmatpush1.msra.mxu0 %v440
  %582 = vmatprep.subr.mxu0 %v445
  %583 = vmatpush1.msra.mxu0 %v444
  %584 = vmatprep.mubr.f32.mxu0 %v447
  %585 = vmatmul.mubr.f32.gmra.mrb[0].mxu0 %v316
  %v586 = vpop.f32.mrb[0].mxu0
  %v587 = vadd.f32 0.0, %v586
  %v588 = vpop.f32.mrb[0].mxu0
  %v589 = vadd.f32 0.0, %v588
  %590 = vdwg.mxu0
  %v593 = vrot.slane %v587, 2
  %v594 = vrot.slane %v589, 2
  %v597 = vsub.f32 %v516, %v593
  %v598 = vsub.f32 %v518, %v594
  %v601 = vrot.slane %v516, 2
  %v602 = vrot.slane %v518, 2
  %v605 = vadd.f32 %v587, %v601
  %v606 = vadd.f32 %v589, %v602
  %v609 = vrot.slane %v605, 6
  %v610 = vrot.slane %v606, 6
  %v613 = vsel %vm307, %v597, %v609
  %v614 = vsel %vm307, %v598, %v610
  %v617 = vcombine.low %v613, %v614
  %s619 = scalar_lea.vmem %s2, 8
  %620 = vst [vmem:[%s619] sm:$0xff] %v617
  // Predicated region
  $region10: #{fno2d_forward.9} parent=0 // pred_check
    _
  $region11: #{fno2d_forward.9} parent=0 // pred_check_branch
    %622 = sbr.rel (0) target = $region13
  $region12: #{fno2d_forward.9} parent=0 // pred_region
    _
  $region13: #{fno2d_forward.9} parent=0 // pred_fallthru
    _
  // Predicated region
  $region14: #{fno2d_forward.9} parent=0 // pred_check
    _
  $region15: #{fno2d_forward.9} parent=0 // pred_check_branch
    %624 = sbr.rel (0) target = $region17
  $region16: #{fno2d_forward.9} parent=0 // pred_region
    _
  $region17: #{fno2d_forward.9} parent=0 // pred_fallthru
    _

// kernel: reverse.6
$region0: #{reverse.6}
  #allocation0 [shape = 's32[1]{0}', space=sflag, size = 0x4, scoped, tag = 'scoped memory for reverse.6']
  %s0 = inlined_call_operand.vmem [shape: f32[2,16,16,7], index: 0, kind: input, shape index: {}]
  %s1 = inlined_call_operand.vmem [shape: f32[2,16,16,7], index: 1, kind: output, shape index: {}]
  %s2 = scalar_lea.vmem %s0, 96
  %v3 = vld [vmem:[%s2] sm:$0xff]
  %4 = vst [vmem:[%s1] sm:$0xff] %v3
  %s5 = scalar_lea.vmem %s0, 208
  %v6 = vld [vmem:[%s5] sm:$0xff]
  %s7 = scalar_lea.vmem %s1, 112
  %8 = vst [vmem:[%s7] sm:$0xff] %v6
  %s9 = scalar_lea.vmem %s0, 80
  %v10 = vld [vmem:[%s9] sm:$0xff]
  %s11 = scalar_lea.vmem %s1, 16
  %12 = vst [vmem:[%s11] sm:$0xff] %v10
  %s13 = scalar_lea.vmem %s0, 192
  %v14 = vld [vmem:[%s13] sm:$0xff]
  %s15 = scalar_lea.vmem %s1, 128
  %16 = vst [vmem:[%s15] sm:$0xff] %v14
  %s17 = scalar_lea.vmem %s0, 64
  %v18 = vld [vmem:[%s17] sm:$0xff]
  %s19 = scalar_lea.vmem %s1, 32
  %20 = vst [vmem:[%s19] sm:$0xff] %v18
  %s21 = scalar_lea.vmem %s0, 176
  %v22 = vld [vmem:[%s21] sm:$0xff]
  %s23 = scalar_lea.vmem %s1, 144
  %24 = vst [vmem:[%s23] sm:$0xff] %v22
  %s25 = scalar_lea.vmem %s0, 48
  %v26 = vld [vmem:[%s25] sm:$0xff]
  %s27 = scalar_lea.vmem %s1, 48
  %28 = vst [vmem:[%s27] sm:$0xff] %v26
  %s29 = scalar_lea.vmem %s0, 160
  %v30 = vld [vmem:[%s29] sm:$0xff]
  %s31 = scalar_lea.vmem %s1, 160
  %32 = vst [vmem:[%s31] sm:$0xff] %v30
  %s33 = scalar_lea.vmem %s0, 32
  %v34 = vld [vmem:[%s33] sm:$0xff]
  %s35 = scalar_lea.vmem %s1, 64
  %36 = vst [vmem:[%s35] sm:$0xff] %v34
  %s37 = scalar_lea.vmem %s0, 144
  %v38 = vld [vmem:[%s37] sm:$0xff]
  %s39 = scalar_lea.vmem %s1, 176
  %40 = vst [vmem:[%s39] sm:$0xff] %v38
  %s41 = scalar_lea.vmem %s0, 16
  %v42 = vld [vmem:[%s41] sm:$0xff]
  %s43 = scalar_lea.vmem %s1, 80
  %44 = vst [vmem:[%s43] sm:$0xff] %v42
  %s45 = scalar_lea.vmem %s0, 128
  %v46 = vld [vmem:[%s45] sm:$0xff]
  %s47 = scalar_lea.vmem %s1, 192
  %48 = vst [vmem:[%s47] sm:$0xff] %v46
  %v49 = vld [vmem:[%s0] sm:$0xff]
  %s50 = scalar_lea.vmem %s1, 96
  %51 = vst [vmem:[%s50] sm:$0xff] %v49
  %s52 = scalar_lea.vmem %s0, 112
  %v53 = vld [vmem:[%s52] sm:$0xff]
  %s54 = scalar_lea.vmem %s1, 208
  %55 = vst [vmem:[%s54] sm:$0xff] %v53
  %s56 = scalar_lea.vmem %s0, 104
  %v57 = vld [vmem:[%s56] sm:$0xff]
  %s58 = scalar_lea.vmem %s1, 8
  %59 = vst [vmem:[%s58] sm:$0xff] %v57
  %s60 = scalar_lea.vmem %s0, 216
  %v61 = vld [vmem:[%s60] sm:$0xff]
  %s62 = scalar_lea.vmem %s1, 120
  %63 = vst [vmem:[%s62] sm:$0xff] %v61
  %s64 = scalar_lea.vmem %s0, 88
  %v65 = vld [vmem:[%s64] sm:$0xff]
  %s66 = scalar_lea.vmem %s1, 24
  %67 = vst [vmem:[%s66] sm:$0xff] %v65
  %s68 = scalar_lea.vmem %s0, 200
  %v69 = vld [vmem:[%s68] sm:$0xff]
  %s70 = scalar_lea.vmem %s1, 136
  %71 = vst [vmem:[%s70] sm:$0xff] %v69
  %s72 = scalar_lea.vmem %s0, 72
  %v73 = vld [vmem:[%s72] sm:$0xff]
  %s74 = scalar_lea.vmem %s1, 40
  %75 = vst [vmem:[%s74] sm:$0xff] %v73
  %s76 = scalar_lea.vmem %s0, 184
  %v77 = vld [vmem:[%s76] sm:$0xff]
  %s78 = scalar_lea.vmem %s1, 152
  %79 = vst [vmem:[%s78] sm:$0xff] %v77
  %s80 = scalar_lea.vmem %s0, 56
  %v81 = vld [vmem:[%s80] sm:$0xff]
  %s82 = scalar_lea.vmem %s1, 56
  %83 = vst [vmem:[%s82] sm:$0xff] %v81
  %s84 = scalar_lea.vmem %s0, 168
  %v85 = vld [vmem:[%s84] sm:$0xff]
  %s86 = scalar_lea.vmem %s1, 168
  %87 = vst [vmem:[%s86] sm:$0xff] %v85
  %s88 = scalar_lea.vmem %s0, 40
  %v89 = vld [vmem:[%s88] sm:$0xff]
  %s90 = scalar_lea.vmem %s1, 72
  %91 = vst [vmem:[%s90] sm:$0xff] %v89
  %s92 = scalar_lea.vmem %s0, 152
  %v93 = vld [vmem:[%s92] sm:$0xff]
  %s94 = scalar_lea.vmem %s1, 184
  %95 = vst [vmem:[%s94] sm:$0xff] %v93
  %s96 = scalar_lea.vmem %s0, 24
  %v97 = vld [vmem:[%s96] sm:$0xff]
  %s98 = scalar_lea.vmem %s1, 88
  %99 = vst [vmem:[%s98] sm:$0xff] %v97
  %s100 = scalar_lea.vmem %s0, 136
  %v101 = vld [vmem:[%s100] sm:$0xff]
  %s102 = scalar_lea.vmem %s1, 200
  %103 = vst [vmem:[%s102] sm:$0xff] %v101
  %s104 = scalar_lea.vmem %s0, 8
  %v105 = vld [vmem:[%s104] sm:$0xff]
  %s106 = scalar_lea.vmem %s1, 104
  %107 = vst [vmem:[%s106] sm:$0xff] %v105
  %s108 = scalar_lea.vmem %s0, 120
  %v109 = vld [vmem:[%s108] sm:$0xff]
  %s110 = scalar_lea.vmem %s1, 216
  %111 = vst [vmem:[%s110] sm:$0xff] %v109

// kernel: fno2d_forward.10
$region0: #{fno2d_forward.10}
  #allocation0 [shape = 'u32[]', space=smem, size = 0x4, offset = 0x4, fixed_abs, tag = 'smem constant byte address 0x4 - core index']
  #allocation1 [shape = 'u32[144,128]{1,0:T(1,128)}', space=vmem, size = 0x12000, scoped, tag = 'internal scratch']
  %s0 = inlined_call_operand.vmem [shape: f32[512,16], index: 0, kind: input, shape index: {}]
  %s1 = inlined_call_operand.vmem [shape: f32[512,16], index: 1, kind: input, shape index: {}]
  %s2 = inlined_call_operand.vmem [shape: f32[16,16], index: 2, kind: input, shape index: {}]
  %s3 = inlined_call_operand.vmem [shape: f32[1,16], index: 3, kind: input, shape index: {}]
  %s4 = inlined_call_operand.vmem [shape: f32[512,16], index: 4, kind: output, shape index: {}]
  %s5 = sld [smem:[#allocation0]]
  $region26: #{fno2d_forward.10} parent=0
    _
  %s7 = ssub.s32 1, %s5
  %s8 = scalar_select 0, %s7, %s5
  // Predicated region
  $region2: #{fno2d_forward.10} parent=0 // pred_check
    _
  $region3: #{fno2d_forward.10} parent=0 // pred_check_branch
    %10 = sbr.rel (0) target = $region5
  $region4: #{fno2d_forward.10} parent=0 // pred_region
    _
  $region5: #{fno2d_forward.10} parent=0 // pred_fallthru
    _
  // Predicated region
  $region6: #{fno2d_forward.10} parent=0 // pred_check
    _
  $region7: #{fno2d_forward.10} parent=0 // pred_check_branch
    %12 = sbr.rel (0) target = $region9
  $region8: #{fno2d_forward.10} parent=0 // pred_region
    _
  $region9: #{fno2d_forward.10} parent=0 // pred_fallthru
    _
  // Predicated region
  $region10: #{fno2d_forward.10} parent=0 // pred_check
    _
  $region11: #{fno2d_forward.10} parent=0 // pred_check_branch
    %14 = sbr.rel (0) target = $region13
  $region12: #{fno2d_forward.10} parent=0 // pred_region
    _
  $region13: #{fno2d_forward.10} parent=0 // pred_fallthru
    _
  // Predicated region
  $region14: #{fno2d_forward.10} parent=0 // pred_check
    _
  $region15: #{fno2d_forward.10} parent=0 // pred_check_branch
    %16 = sbr.rel (0) target = $region17
  $region16: #{fno2d_forward.10} parent=0 // pred_region
    _
  $region17: #{fno2d_forward.10} parent=0 // pred_fallthru
    _
  %v17 = vld [vmem:[%s0] sm:$0xff]
  %v18 = vld [vmem:[%s0 + $0x8] sm:$0xff]
  %v19 = vld [vmem:[%s0 + $0x10] sm:$0xff]
  %v20 = vld [vmem:[%s0 + $0x18] sm:$0xff]
  %v21 = vld [vmem:[%s0 + $0x20] sm:$0xff]
  %v22 = vld [vmem:[%s0 + $0x28] sm:$0xff]
  %v23 = vld [vmem:[%s0 + $0x30] sm:$0xff]
  %v24 = vld [vmem:[%s0 + $0x38] sm:$0xff]
  %v25 = vld [vmem:[%s0 + $0x40] sm:$0xff]
  %v26 = vld [vmem:[%s0 + $0x48] sm:$0xff]
  %v27 = vld [vmem:[%s0 + $0x50] sm:$0xff]
  %v28 = vld [vmem:[%s0 + $0x58] sm:$0xff]
  %v29 = vld [vmem:[%s0 + $0x60] sm:$0xff]
  %v30 = vld [vmem:[%s0 + $0x68] sm:$0xff]
  %v31 = vld [vmem:[%s0 + $0x70] sm:$0xff]
  %v32 = vld [vmem:[%s0 + $0x78] sm:$0xff]
  %v33 = vld [vmem:[%s0 + $0x80] sm:$0xff]
  %v34 = vld [vmem:[%s0 + $0x88] sm:$0xff]
  %v35 = vld [vmem:[%s0 + $0x90] sm:$0xff]
  %v36 = vld [vmem:[%s0 + $0x98] sm:$0xff]
  %v37 = vld [vmem:[%s0 + $0xa0] sm:$0xff]
  %v38 = vld [vmem:[%s0 + $0xa8] sm:$0xff]
  %v39 = vld [vmem:[%s0 + $0xb0] sm:$0xff]
  %v40 = vld [vmem:[%s0 + $0xb8] sm:$0xff]
  %v41 = vld [vmem:[%s0 + $0xc0] sm:$0xff]
  %v42 = vld [vmem:[%s0 + $0xc8] sm:$0xff]
  %v43 = vld [vmem:[%s0 + $0xd0] sm:$0xff]
  %v44 = vld [vmem:[%s0 + $0xd8] sm:$0xff]
  %v45 = vld [vmem:[%s0 + $0xe0] sm:$0xff]
  %v46 = vld [vmem:[%s0 + $0xe8] sm:$0xff]
  %v47 = vld [vmem:[%s0 + $0xf0] sm:$0xff]
  %v48 = vld [vmem:[%s0 + $0xf8] sm:$0xff]
  %v49 = vld [vmem:[%s0 + $0x100] sm:$0xff]
  %v50 = vld [vmem:[%s0 + $0x108] sm:$0xff]
  %v51 = vld [vmem:[%s0 + $0x110] sm:$0xff]
  %v52 = vld [vmem:[%s0 + $0x118] sm:$0xff]
  %v53 = vld [vmem:[%s0 + $0x120] sm:$0xff]
  %v54 = vld [vmem:[%s0 + $0x128] sm:$0xff]
  %v55 = vld [vmem:[%s0 + $0x130] sm:$0xff]
  %v56 = vld [vmem:[%s0 + $0x138] sm:$0xff]
  %v57 = vld [vmem:[%s0 + $0x140] sm:$0xff]
  %v58 = vld [vmem:[%s0 + $0x148] sm:$0xff]
  %v59 = vld [vmem:[%s0 + $0x150] sm:$0xff]
  %v60 = vld [vmem:[%s0 + $0x158] sm:$0xff]
  %v61 = vld [vmem:[%s0 + $0x160] sm:$0xff]
  %v62 = vld [vmem:[%s0 + $0x168] sm:$0xff]
  %v63 = vld [vmem:[%s0 + $0x170] sm:$0xff]
  %v64 = vld [vmem:[%s0 + $0x178] sm:$0xff]
  %v65 = vld [vmem:[%s0 + $0x180] sm:$0xff]
  %v66 = vld [vmem:[%s0 + $0x188] sm:$0xff]
  %v67 = vld [vmem:[%s0 + $0x190] sm:$0xff]
  %v68 = vld [vmem:[%s0 + $0x198] sm:$0xff]
  %v69 = vld [vmem:[%s0 + $0x1a0] sm:$0xff]
  %v70 = vld [vmem:[%s0 + $0x1a8] sm:$0xff]
  %v71 = vld [vmem:[%s0 + $0x1b0] sm:$0xff]
  %v72 = vld [vmem:[%s0 + $0x1b8] sm:$0xff]
  %v73 = vld [vmem:[%s0 + $0x1c0] sm:$0xff]
  %v74 = vld [vmem:[%s0 + $0x1c8] sm:$0xff]
  %v75 = vld [vmem:[%s0 + $0x1d0] sm:$0xff]
  %v76 = vld [vmem:[%s0 + $0x1d8] sm:$0xff]
  %v77 = vld [vmem:[%s0 + $0x1e0] sm:$0xff]
  %v78 = vld [vmem:[%s0 + $0x1e8] sm:$0xff]
  %v79 = vld [vmem:[%s0 + $0x1f0] sm:$0xff]
  %v80 = vld [vmem:[%s0 + $0x1f8] sm:$0xff]
  %v81 = vld [vmem:[%s2] sm:$0xff]
  %v82 = vld [vmem:[%s2 + $0x8] sm:$0xff]
  %v83 = vld [vmem:[%s3] sm:$0x1]
  %v85 = vlaneseq
  %v86 = vshrl.u32 %v85, 7
  %v87 = vsub.s32 0, %v86
  %v88 = vrot.slane %v83, %v87
  %vm90 = vcmask 130048
  %v92 = vsel %vm90, %v17, 0
  %v95 = vsel %vm90, %v18, 0
  %v98 = vsel %vm90, %v19, 0
  %v101 = vsel %vm90, %v20, 0
  %v104 = vsel %vm90, %v21, 0
  %v107 = vsel %vm90, %v22, 0
  %v110 = vsel %vm90, %v23, 0
  %v113 = vsel %vm90, %v24, 0
  %v116 = vsel %vm90, %v25, 0
  %v119 = vsel %vm90, %v26, 0
  %v122 = vsel %vm90, %v27, 0
  %v125 = vsel %vm90, %v28, 0
  %v128 = vsel %vm90, %v29, 0
  %v131 = vsel %vm90, %v30, 0
  %v134 = vsel %vm90, %v31, 0
  %v137 = vsel %vm90, %v32, 0
  %v140 = vsel %vm90, %v33, 0
  %v143 = vsel %vm90, %v34, 0
  %v146 = vsel %vm90, %v35, 0
  %v149 = vsel %vm90, %v36, 0
  %v152 = vsel %vm90, %v37, 0
  %v155 = vsel %vm90, %v38, 0
  %v158 = vsel %vm90, %v39, 0
  %v161 = vsel %vm90, %v40, 0
  %v164 = vsel %vm90, %v41, 0
  %v167 = vsel %vm90, %v42, 0
  %v170 = vsel %vm90, %v43, 0
  %v173 = vsel %vm90, %v44, 0
  %v176 = vsel %vm90, %v45, 0
  %v179 = vsel %vm90, %v46, 0
  %v182 = vsel %vm90, %v47, 0
  %v185 = vsel %vm90, %v48, 0
  %v188 = vsel %vm90, %v49, 0
  %v191 = vsel %vm90, %v50, 0
  %v194 = vsel %vm90, %v51, 0
  %v197 = vsel %vm90, %v52, 0
  %v200 = vsel %vm90, %v53, 0
  %v203 = vsel %vm90, %v54, 0
  %v206 = vsel %vm90, %v55, 0
  %v209 = vsel %vm90, %v56, 0
  %v212 = vsel %vm90, %v57, 0
  %v215 = vsel %vm90, %v58, 0
  %v218 = vsel %vm90, %v59, 0
  %v221 = vsel %vm90, %v60, 0
  %v224 = vsel %vm90, %v61, 0
  %v227 = vsel %vm90, %v62, 0
  %v230 = vsel %vm90, %v63, 0
  %v233 = vsel %vm90, %v64, 0
  %v236 = vsel %vm90, %v65, 0
  %v239 = vsel %vm90, %v66, 0
  %v242 = vsel %vm90, %v67, 0
  %v245 = vsel %vm90, %v68, 0
  %v248 = vsel %vm90, %v69, 0
  %v251 = vsel %vm90, %v70, 0
  %v254 = vsel %vm90, %v71, 0
  %v257 = vsel %vm90, %v72, 0
  %v260 = vsel %vm90, %v73, 0
  %v263 = vsel %vm90, %v74, 0
  %v266 = vsel %vm90, %v75, 0
  %v269 = vsel %vm90, %v76, 0
  %v272 = vsel %vm90, %v77, 0
  %v275 = vsel %vm90, %v78, 0
  %v278 = vsel %vm90, %v79, 0
  %v281 = vsel %vm90, %v80, 0
  %283 = vmatprep.subr.mxu0 0.0
  %284 = vmatpush1.msra.mxu0 %v81
  %285 = vmatprep.subr.mxu0 0.0
  %286 = vmatpush1.msra.mxu0 %v82
  %287 = vmatprep.subr.mxu0 0.0
  %288 = vmatpush1.msra.mxu0 0.0
  %289 = vmatprep.subr.mxu0 0.0
  %290 = vmatpush1.msra.mxu0 0.0
  %291 = vmatprep.subr.mxu0 0.0
  %292 = vmatpush1.msra.mxu0 0.0
  %293 = vmatprep.subr.mxu0 0.0
  %294 = vmatpush1.msra.mxu0 0.0
  %295 = vmatprep.subr.mxu0 0.0
  %296 = vmatpush1.msra.mxu0 0.0
  %297 = vmatprep.subr.mxu0 0.0
  %298 = vmatpush1.msra.mxu0 0.0
  %299 = vmatprep.subr.mxu0 0.0
  %300 = vmatpush1.msra.mxu0 0.0
  %301 = vmatprep.subr.mxu0 0.0
  %302 = vmatpush1.msra.mxu0 0.0
  %303 = vmatprep.subr.mxu0 0.0
  %304 = vmatpush1.msra.mxu0 0.0
  %305 = vmatprep.subr.mxu0 0.0
  %306 = vmatpush1.msra.mxu0 0.0
  %307 = vmatprep.subr.mxu0 0.0
  %308 = vmatpush1.msra.mxu0 0.0
  %309 = vmatprep.subr.mxu0 0.0
  %310 = vmatpush1.msra.mxu0 0.0
  %311 = vmatprep.subr.mxu0 0.0
  %312 = vmatpush1.msra.mxu0 0.0
  %313 = vmatprep.subr.mxu0 0.0
  %314 = vmatpush1.msra.mxu0 0.0
  %315 = vmatprep.subr.mxu0 0.0
  %316 = vmatpush1.msra.mxu0 0.0
  %317 = vmatprep.subr.mxu0 0.0
  %318 = vmatpush1.msra.mxu0 0.0
  %319 = vmatprep.subr.mxu0 0.0
  %320 = vmatpush1.msra.mxu0 0.0
  %321 = vmatprep.subr.mxu0 0.0
  %322 = vmatpush1.msra.mxu0 0.0
  %323 = vmatprep.subr.mxu0 0.0
  %324 = vmatpush1.msra.mxu0 0.0
  %325 = vmatprep.subr.mxu0 0.0
  %326 = vmatpush1.msra.mxu0 0.0
  %327 = vmatprep.subr.mxu0 0.0
  %328 = vmatpush1.msra.mxu0 0.0
  %329 = vmatprep.subr.mxu0 0.0
  %330 = vmatpush1.msra.mxu0 0.0
  %331 = vmatprep.subr.mxu0 0.0
  %332 = vmatpush1.msra.mxu0 0.0
  %333 = vmatprep.subr.mxu0 0.0
  %334 = vmatpush1.msra.mxu0 0.0
  %335 = vmatprep.subr.mxu0 0.0
  %336 = vmatpush1.msra.mxu0 0.0
  %337 = vmatprep.subr.mxu0 0.0
  %338 = vmatpush1.msra.mxu0 0.0
  %339 = vmatprep.subr.mxu0 0.0
  %340 = vmatpush1.msra.mxu0 0.0
  %341 = vmatprep.subr.mxu0 0.0
  %342 = vmatpush1.msra.mxu0 0.0
  %343 = vmatprep.subr.mxu0 0.0
  %344 = vmatpush1.msra.mxu0 0.0
  %345 = vmatprep.subr.mxu0 0.0
  %346 = vmatpush1.msra.mxu0 0.0
  %347 = vmatprep.mubr.f32.mxu0 0.0
  %348 = vmatmul.mubr.f32.gmra.mrb[0].mxu0 %v92
  %v349 = vpop.f32.mrb[0].mxu0
  %v350 = vadd.f32 %v88, %v349
  %v351 = vpop.f32.mrb[0].mxu0
  %352 = vmatprep.mubr.f32.mxu0 0.0
  %353 = vmatmul.mubr.f32.gmra.mrb[0].mxu0 %v95
  %v354 = vpop.f32.mrb[0].mxu0
  %v355 = vadd.f32 %v88, %v354
  %v356 = vpop.f32.mrb[0].mxu0
  %357 = vmatprep.mubr.f32.mxu0 0.0
  %358 = vmatmul.mubr.f32.gmra.mrb[0].mxu0 %v98
  %v359 = vpop.f32.mrb[0].mxu0
  %v360 = vadd.f32 %v88, %v359
  %v361 = vpop.f32.mrb[0].mxu0
  %362 = vmatprep.mubr.f32.mxu0 0.0
  %363 = vmatmul.mubr.f32.gmra.mrb[0].mxu0 %v101
  %v364 = vpop.f32.mrb[0].mxu0
  %v365 = vadd.f32 %v88, %v364
  %v366 = vpop.f32.mrb[0].mxu0
  %367 = vmatprep.mubr.f32.mxu0 0.0
  %368 = vmatmul.mubr.f32.gmra.mrb[0].mxu0 %v104
  %v369 = vpop.f32.mrb[0].mxu0
  %v370 = vadd.f32 %v88, %v369
  %v371 = vpop.f32.mrb[0].mxu0
  %372 = vmatprep.mubr.f32.mxu0 0.0
  %373 = vmatmul.mubr.f32.gmra.mrb[0].mxu0 %v107
  %v374 = vpop.f32.mrb[0].mxu0
  %v375 = vadd.f32 %v88, %v374
  %v376 = vpop.f32.mrb[0].mxu0
  %377 = vmatprep.mubr.f32.mxu0 0.0
  %378 = vmatmul.mubr.f32.gmra.mrb[0].mxu0 %v110
  %v379 = vpop.f32.mrb[0].mxu0
  %v380 = vadd.f32 %v88, %v379
  %v381 = vpop.f32.mrb[0].mxu0
  %382 = vmatprep.mubr.f32.mxu0 0.0
  %383 = vmatmul.mubr.f32.gmra.mrb[0].mxu0 %v113
  %v384 = vpop.f32.mrb[0].mxu0
  %v385 = vadd.f32 %v88, %v384
  %v386 = vpop.f32.mrb[0].mxu0
  %387 = vmatprep.mubr.f32.mxu0 0.0
  %388 = vmatmul.mubr.f32.gmra.mrb[0].mxu0 %v116
  %v389 = vpop.f32.mrb[0].mxu0
  %v390 = vadd.f32 %v88, %v389
  %v391 = vpop.f32.mrb[0].mxu0
  %392 = vmatprep.mubr.f32.mxu0 0.0
  %393 = vmatmul.mubr.f32.gmra.mrb[0].mxu0 %v119
  %v394 = vpop.f32.mrb[0].mxu0
  %v395 = vadd.f32 %v88, %v394
  %v396 = vpop.f32.mrb[0].mxu0
  %397 = vmatprep.mubr.f32.mxu0 0.0
  %398 = vmatmul.mubr.f32.gmra.mrb[0].mxu0 %v122
  %v399 = vpop.f32.mrb[0].mxu0
  %v400 = vadd.f32 %v88, %v399
  %v401 = vpop.f32.mrb[0].mxu0
  %402 = vmatprep.mubr.f32.mxu0 0.0
  %403 = vmatmul.mubr.f32.gmra.mrb[0].mxu0 %v125
  %v404 = vpop.f32.mrb[0].mxu0
  %v405 = vadd.f32 %v88, %v404
  %v406 = vpop.f32.mrb[0].mxu0
  %407 = vmatprep.mubr.f32.mxu0 0.0
  %408 = vmatmul.mubr.f32.gmra.mrb[0].mxu0 %v128
  %v409 = vpop.f32.mrb[0].mxu0
  %v410 = vadd.f32 %v88, %v409
  %v411 = vpop.f32.mrb[0].mxu0
  %412 = vmatprep.mubr.f32.mxu0 0.0
  %413 = vmatmul.mubr.f32.gmra.mrb[0].mxu0 %v131
  %v414 = vpop.f32.mrb[0].mxu0
  %v415 = vadd.f32 %v88, %v414
  %v416 = vpop.f32.mrb[0].mxu0
  %417 = vmatprep.mubr.f32.mxu0 0.0
  %418 = vmatmul.mubr.f32.gmra.mrb[0].mxu0 %v134
  %v419 = vpop.f32.mrb[0].mxu0
  %v420 = vadd.f32 %v88, %v419
  %v421 = vpop.f32.mrb[0].mxu0
  %422 = vmatprep.mubr.f32.mxu0 0.0
  %423 = vmatmul.mubr.f32.gmra.mrb[0].mxu0 %v137
  %v424 = vpop.f32.mrb[0].mxu0
  %v425 = vadd.f32 %v88, %v424
  %v426 = vpop.f32.mrb[0].mxu0
  %427 = vmatprep.mubr.f32.mxu0 0.0
  %428 = vmatmul.mubr.f32.gmra.mrb[0].mxu0 %v140
  %v429 = vpop.f32.mrb[0].mxu0
  %v430 = vadd.f32 %v88, %v429
  %v431 = vpop.f32.mrb[0].mxu0
  %432 = vmatprep.mubr.f32.mxu0 0.0
  %433 = vmatmul.mubr.f32.gmra.mrb[0].mxu0 %v143
  %v434 = vpop.f32.mrb[0].mxu0
  %v435 = vadd.f32 %v88, %v434
  %v436 = vpop.f32.mrb[0].mxu0
  %437 = vmatprep.mubr.f32.mxu0 0.0
  %438 = vmatmul.mubr.f32.gmra.mrb[0].mxu0 %v146
  %v439 = vpop.f32.mrb[0].mxu0
  %v440 = vadd.f32 %v88, %v439
  %v441 = vpop.f32.mrb[0].mxu0
  %442 = vmatprep.mubr.f32.mxu0 0.0
  %443 = vmatmul.mubr.f32.gmra.mrb[0].mxu0 %v149
  %v444 = vpop.f32.mrb[0].mxu0
  %v445 = vadd.f32 %v88, %v444
  %v446 = vpop.f32.mrb[0].mxu0
  %447 = vmatprep.mubr.f32.mxu0 0.0
  %448 = vmatmul.mubr.f32.gmra.mrb[0].mxu0 %v152
  %v449 = vpop.f32.mrb[0].mxu0
  %v450 = vadd.f32 %v88, %v449
  %v451 = vpop.f32.mrb[0].mxu0
  %452 = vmatprep.mubr.f32.mxu0 0.0
  %453 = vmatmul.mubr.f32.gmra.mrb[0].mxu0 %v155
  %v454 = vpop.f32.mrb[0].mxu0
  %v455 = vadd.f32 %v88, %v454
  %v456 = vpop.f32.mrb[0].mxu0
  %457 = vmatprep.mubr.f32.mxu0 0.0
  %458 = vmatmul.mubr.f32.gmra.mrb[0].mxu0 %v158
  %v459 = vpop.f32.mrb[0].mxu0
  %v460 = vadd.f32 %v88, %v459
  %v461 = vpop.f32.mrb[0].mxu0
  %462 = vmatprep.mubr.f32.mxu0 0.0
  %463 = vmatmul.mubr.f32.gmra.mrb[0].mxu0 %v161
  %v464 = vpop.f32.mrb[0].mxu0
  %v465 = vadd.f32 %v88, %v464
  %v466 = vpop.f32.mrb[0].mxu0
  %467 = vmatprep.mubr.f32.mxu0 0.0
  %468 = vmatmul.mubr.f32.gmra.mrb[0].mxu0 %v164
  %v469 = vpop.f32.mrb[0].mxu0
  %v470 = vadd.f32 %v88, %v469
  %v471 = vpop.f32.mrb[0].mxu0
  %472 = vmatprep.mubr.f32.mxu0 0.0
  %473 = vmatmul.mubr.f32.gmra.mrb[0].mxu0 %v167
  %v474 = vpop.f32.mrb[0].mxu0
  %v475 = vadd.f32 %v88, %v474
  %v476 = vpop.f32.mrb[0].mxu0
  %477 = vmatprep.mubr.f32.mxu0 0.0
  %478 = vmatmul.mubr.f32.gmra.mrb[0].mxu0 %v170
  %v479 = vpop.f32.mrb[0].mxu0
  %v480 = vadd.f32 %v88, %v479
  %v481 = vpop.f32.mrb[0].mxu0
  %482 = vmatprep.mubr.f32.mxu0 0.0
  %483 = vmatmul.mubr.f32.gmra.mrb[0].mxu0 %v173
  %v484 = vpop.f32.mrb[0].mxu0
  %v485 = vadd.f32 %v88, %v484
  %v486 = vpop.f32.mrb[0].mxu0
  %487 = vmatprep.mubr.f32.mxu0 0.0
  %488 = vmatmul.mubr.f32.gmra.mrb[0].mxu0 %v176
  %v489 = vpop.f32.mrb[0].mxu0
  %v490 = vadd.f32 %v88, %v489
  %v491 = vpop.f32.mrb[0].mxu0
  %492 = vmatprep.mubr.f32.mxu0 0.0
  %493 = vmatmul.mubr.f32.gmra.mrb[0].mxu0 %v179
  %v494 = vpop.f32.mrb[0].mxu0
  %v495 = vadd.f32 %v88, %v494
  %v496 = vpop.f32.mrb[0].mxu0
  %497 = vmatprep.mubr.f32.mxu0 0.0
  %498 = vmatmul.mubr.f32.gmra.mrb[0].mxu0 %v182
  %v499 = vpop.f32.mrb[0].mxu0
  %v500 = vadd.f32 %v88, %v499
  %v501 = vpop.f32.mrb[0].mxu0
  %502 = vmatprep.mubr.f32.mxu0 0.0
  %503 = vmatmul.mubr.f32.gmra.mrb[0].mxu0 %v185
  %v504 = vpop.f32.mrb[0].mxu0
  %v505 = vadd.f32 %v88, %v504
  %v506 = vpop.f32.mrb[0].mxu0
  %507 = vmatprep.mubr.f32.mxu0 0.0
  %508 = vmatmul.mubr.f32.gmra.mrb[0].mxu0 %v188
  %v509 = vpop.f32.mrb[0].mxu0
  %v510 = vadd.f32 %v88, %v509
  %v511 = vpop.f32.mrb[0].mxu0
  %512 = vmatprep.mubr.f32.mxu0 0.0
  %513 = vmatmul.mubr.f32.gmra.mrb[0].mxu0 %v191
  %v514 = vpop.f32.mrb[0].mxu0
  %v515 = vadd.f32 %v88, %v514
  %v516 = vpop.f32.mrb[0].mxu0
  %517 = vmatprep.mubr.f32.mxu0 0.0
  %518 = vmatmul.mubr.f32.gmra.mrb[0].mxu0 %v194
  %v519 = vpop.f32.mrb[0].mxu0
  %v520 = vadd.f32 %v88, %v519
  %v521 = vpop.f32.mrb[0].mxu0
  %522 = vmatprep.mubr.f32.mxu0 0.0
  %523 = vmatmul.mubr.f32.gmra.mrb[0].mxu0 %v197
  %v524 = vpop.f32.mrb[0].mxu0
  %v525 = vadd.f32 %v88, %v524
  %v526 = vpop.f32.mrb[0].mxu0
  %527 = vmatprep.mubr.f32.mxu0 0.0
  %528 = vmatmul.mubr.f32.gmra.mrb[0].mxu0 %v200
  %v529 = vpop.f32.mrb[0].mxu0
  %v530 = vadd.f32 %v88, %v529
  %v531 = vpop.f32.mrb[0].mxu0
  %532 = vmatprep.mubr.f32.mxu0 0.0
  %533 = vmatmul.mubr.f32.gmra.mrb[0].mxu0 %v203
  %v534 = vpop.f32.mrb[0].mxu0
  %v535 = vadd.f32 %v88, %v534
  %v536 = vpop.f32.mrb[0].mxu0
  %537 = vmatprep.mubr.f32.mxu0 0.0
  %538 = vmatmul.mubr.f32.gmra.mrb[0].mxu0 %v206
  %v539 = vpop.f32.mrb[0].mxu0
  %v540 = vadd.f32 %v88, %v539
  %v541 = vpop.f32.mrb[0].mxu0
  %542 = vmatprep.mubr.f32.mxu0 0.0
  %543 = vmatmul.mubr.f32.gmra.mrb[0].mxu0 %v209
  %v544 = vpop.f32.mrb[0].mxu0
  %v545 = vadd.f32 %v88, %v544
  %v546 = vpop.f32.mrb[0].mxu0
  %547 = vmatprep.mubr.f32.mxu0 0.0
  %548 = vmatmul.mubr.f32.gmra.mrb[0].mxu0 %v212
  %v549 = vpop.f32.mrb[0].mxu0
  %v550 = vadd.f32 %v88, %v549
  %v551 = vpop.f32.mrb[0].mxu0
  %552 = vmatprep.mubr.f32.mxu0 0.0
  %553 = vmatmul.mubr.f32.gmra.mrb[0].mxu0 %v215
  %v554 = vpop.f32.mrb[0].mxu0
  %v555 = vadd.f32 %v88, %v554
  %v556 = vpop.f32.mrb[0].mxu0
  %557 = vmatprep.mubr.f32.mxu0 0.0
  %558 = vmatmul.mubr.f32.gmra.mrb[0].mxu0 %v218
  %v559 = vpop.f32.mrb[0].mxu0
  %v560 = vadd.f32 %v88, %v559
  %v561 = vpop.f32.mrb[0].mxu0
  %562 = vmatprep.mubr.f32.mxu0 0.0
  %563 = vmatmul.mubr.f32.gmra.mrb[0].mxu0 %v221
  %v564 = vpop.f32.mrb[0].mxu0
  %v565 = vadd.f32 %v88, %v564
  %v566 = vpop.f32.mrb[0].mxu0
  %567 = vmatprep.mubr.f32.mxu0 0.0
  %568 = vmatmul.mubr.f32.gmra.mrb[0].mxu0 %v224
  %v569 = vpop.f32.mrb[0].mxu0
  %v570 = vadd.f32 %v88, %v569
  %v571 = vpop.f32.mrb[0].mxu0
  %572 = vmatprep.mubr.f32.mxu0 0.0
  %573 = vmatmul.mubr.f32.gmra.mrb[0].mxu0 %v227
  %v574 = vpop.f32.mrb[0].mxu0
  %v575 = vadd.f32 %v88, %v574
  %v576 = vpop.f32.mrb[0].mxu0
  %577 = vmatprep.mubr.f32.mxu0 0.0
  %578 = vmatmul.mubr.f32.gmra.mrb[0].mxu0 %v230
  %v579 = vpop.f32.mrb[0].mxu0
  %v580 = vadd.f32 %v88, %v579
  %v581 = vpop.f32.mrb[0].mxu0
  %582 = vmatprep.mubr.f32.mxu0 0.0
  %583 = vmatmul.mubr.f32.gmra.mrb[0].mxu0 %v233
  %v584 = vpop.f32.mrb[0].mxu0
  %v585 = vadd.f32 %v88, %v584
  %v586 = vpop.f32.mrb[0].mxu0
  %587 = vmatprep.mubr.f32.mxu0 0.0
  %588 = vmatmul.mubr.f32.gmra.mrb[0].mxu0 %v236
  %v589 = vpop.f32.mrb[0].mxu0
  %v590 = vadd.f32 %v88, %v589
  %v591 = vpop.f32.mrb[0].mxu0
  %592 = vmatprep.mubr.f32.mxu0 0.0
  %593 = vmatmul.mubr.f32.gmra.mrb[0].mxu0 %v239
  %v594 = vpop.f32.mrb[0].mxu0
  %v595 = vadd.f32 %v88, %v594
  %v596 = vpop.f32.mrb[0].mxu0
  %597 = vmatprep.mubr.f32.mxu0 0.0
  %598 = vmatmul.mubr.f32.gmra.mrb[0].mxu0 %v242
  %v599 = vpop.f32.mrb[0].mxu0
  %v600 = vadd.f32 %v88, %v599
  %v601 = vpop.f32.mrb[0].mxu0
  %602 = vmatprep.mubr.f32.mxu0 0.0
  %603 = vmatmul.mubr.f32.gmra.mrb[0].mxu0 %v245
  %v604 = vpop.f32.mrb[0].mxu0
  %v605 = vadd.f32 %v88, %v604
  %v606 = vpop.f32.mrb[0].mxu0
  %607 = vmatprep.mubr.f32.mxu0 0.0
  %608 = vmatmul.mubr.f32.gmra.mrb[0].mxu0 %v248
  %v609 = vpop.f32.mrb[0].mxu0
  %v610 = vadd.f32 %v88, %v609
  %v611 = vpop.f32.mrb[0].mxu0
  %612 = vmatprep.mubr.f32.mxu0 0.0
  %613 = vmatmul.mubr.f32.gmra.mrb[0].mxu0 %v251
  %v614 = vpop.f32.mrb[0].mxu0
  %v615 = vadd.f32 %v88, %v614
  %v616 = vpop.f32.mrb[0].mxu0
  %617 = vmatprep.mubr.f32.mxu0 0.0
  %618 = vmatmul.mubr.f32.gmra.mrb[0].mxu0 %v254
  %v619 = vpop.f32.mrb[0].mxu0
  %v620 = vadd.f32 %v88, %v619
  %v621 = vpop.f32.mrb[0].mxu0
  %622 = vmatprep.mubr.f32.mxu0 0.0
  %623 = vmatmul.mubr.f32.gmra.mrb[0].mxu0 %v257
  %v624 = vpop.f32.mrb[0].mxu0
  %v625 = vadd.f32 %v88, %v624
  %v626 = vpop.f32.mrb[0].mxu0
  %627 = vmatprep.mubr.f32.mxu0 0.0
  %628 = vmatmul.mubr.f32.gmra.mrb[0].mxu0 %v260
  %v629 = vpop.f32.mrb[0].mxu0
  %v630 = vadd.f32 %v88, %v629
  %v631 = vpop.f32.mrb[0].mxu0
  %632 = vmatprep.mubr.f32.mxu0 0.0
  %633 = vmatmul.mubr.f32.gmra.mrb[0].mxu0 %v263
  %v634 = vpop.f32.mrb[0].mxu0
  %v635 = vadd.f32 %v88, %v634
  %v636 = vpop.f32.mrb[0].mxu0
  %637 = vmatprep.mubr.f32.mxu0 0.0
  %638 = vmatmul.mubr.f32.gmra.mrb[0].mxu0 %v266
  %v639 = vpop.f32.mrb[0].mxu0
  %v640 = vadd.f32 %v88, %v639
  %v641 = vpop.f32.mrb[0].mxu0
  %642 = vmatprep.mubr.f32.mxu0 0.0
  %643 = vmatmul.mubr.f32.gmra.mrb[0].mxu0 %v269
  %v644 = vpop.f32.mrb[0].mxu0
  %v645 = vadd.f32 %v88, %v644
  %v646 = vpop.f32.mrb[0].mxu0
  %647 = vmatprep.mubr.f32.mxu0 0.0
  %648 = vmatmul.mubr.f32.gmra.mrb[0].mxu0 %v272
  %v649 = vpop.f32.mrb[0].mxu0
  %v650 = vadd.f32 %v88, %v649
  %v651 = vpop.f32.mrb[0].mxu0
  %652 = vmatprep.mubr.f32.mxu0 0.0
  %653 = vmatmul.mubr.f32.gmra.mrb[0].mxu0 %v275
  %v654 = vpop.f32.mrb[0].mxu0
  %v655 = vadd.f32 %v88, %v654
  %v656 = vpop.f32.mrb[0].mxu0
  %657 = vmatprep.mubr.f32.mxu0 0.0
  %658 = vmatmul.mubr.f32.gmra.mrb[0].mxu0 %v278
  %v659 = vpop.f32.mrb[0].mxu0
  %v660 = vadd.f32 %v88, %v659
  %v661 = vpop.f32.mrb[0].mxu0
  %662 = vmatprep.mubr.f32.mxu0 0.0
  %663 = vmatmul.mubr.f32.gmra.mrb[0].mxu0 %v281
  %v664 = vpop.f32.mrb[0].mxu0
  %v665 = vadd.f32 %v88, %v664
  %v666 = vpop.f32.mrb[0].mxu0
  %667 = vdwg.mxu0
  %v668 = vld [vmem:[%s1] sm:$0xff]
  %v669 = vld [vmem:[%s1 + $0x8] sm:$0xff]
  %v670 = vld [vmem:[%s1 + $0x10] sm:$0xff]
  %v671 = vld [vmem:[%s1 + $0x18] sm:$0xff]
  %v672 = vld [vmem:[%s1 + $0x20] sm:$0xff]
  %v673 = vld [vmem:[%s1 + $0x28] sm:$0xff]
  %v674 = vld [vmem:[%s1 + $0x30] sm:$0xff]
  %v675 = vld [vmem:[%s1 + $0x38] sm:$0xff]
  %v676 = vld [vmem:[%s1 + $0x40] sm:$0xff]
  %v677 = vld [vmem:[%s1 + $0x48] sm:$0xff]
  %v678 = vld [vmem:[%s1 + $0x50] sm:$0xff]
  %v679 = vld [vmem:[%s1 + $0x58] sm:$0xff]
  %v680 = vld [vmem:[%s1 + $0x60] sm:$0xff]
  %v681 = vld [vmem:[%s1 + $0x68] sm:$0xff]
  %v682 = vld [vmem:[%s1 + $0x70] sm:$0xff]
  %v683 = vld [vmem:[%s1 + $0x78] sm:$0xff]
  %v684 = vld [vmem:[%s1 + $0x80] sm:$0xff]
  %v685 = vld [vmem:[%s1 + $0x88] sm:$0xff]
  %v686 = vld [vmem:[%s1 + $0x90] sm:$0xff]
  %v687 = vld [vmem:[%s1 + $0x98] sm:$0xff]
  %v688 = vld [vmem:[%s1 + $0xa0] sm:$0xff]
  %v689 = vld [vmem:[%s1 + $0xa8] sm:$0xff]
  %v690 = vld [vmem:[%s1 + $0xb0] sm:$0xff]
  %v691 = vld [vmem:[%s1 + $0xb8] sm:$0xff]
  %v692 = vld [vmem:[%s1 + $0xc0] sm:$0xff]
  %v693 = vld [vmem:[%s1 + $0xc8] sm:$0xff]
  %v694 = vld [vmem:[%s1 + $0xd0] sm:$0xff]
  %v695 = vld [vmem:[%s1 + $0xd8] sm:$0xff]
  %v696 = vld [vmem:[%s1 + $0xe0] sm:$0xff]
  %v697 = vld [vmem:[%s1 + $0xe8] sm:$0xff]
  %v698 = vld [vmem:[%s1 + $0xf0] sm:$0xff]
  %v699 = vld [vmem:[%s1 + $0xf8] sm:$0xff]
  %v700 = vld [vmem:[%s1 + $0x100] sm:$0xff]
  %v701 = vld [vmem:[%s1 + $0x108] sm:$0xff]
  %v702 = vld [vmem:[%s1 + $0x110] sm:$0xff]
  %v703 = vld [vmem:[%s1 + $0x118] sm:$0xff]
  %v704 = vld [vmem:[%s1 + $0x120] sm:$0xff]
  %v705 = vld [vmem:[%s1 + $0x128] sm:$0xff]
  %v706 = vld [vmem:[%s1 + $0x130] sm:$0xff]
  %v707 = vld [vmem:[%s1 + $0x138] sm:$0xff]
  %v708 = vld [vmem:[%s1 + $0x140] sm:$0xff]
  %v709 = vld [vmem:[%s1 + $0x148] sm:$0xff]
  %v710 = vld [vmem:[%s1 + $0x150] sm:$0xff]
  %v711 = vld [vmem:[%s1 + $0x158] sm:$0xff]
  %v712 = vld [vmem:[%s1 + $0x160] sm:$0xff]
  %v713 = vld [vmem:[%s1 + $0x168] sm:$0xff]
  %v714 = vld [vmem:[%s1 + $0x170] sm:$0xff]
  %v715 = vld [vmem:[%s1 + $0x178] sm:$0xff]
  %v716 = vld [vmem:[%s1 + $0x180] sm:$0xff]
  %v717 = vld [vmem:[%s1 + $0x188] sm:$0xff]
  %v718 = vld [vmem:[%s1 + $0x190] sm:$0xff]
  %v719 = vld [vmem:[%s1 + $0x198] sm:$0xff]
  %v720 = vld [vmem:[%s1 + $0x1a0] sm:$0xff]
  %v721 = vld [vmem:[%s1 + $0x1a8] sm:$0xff]
  %v722 = vld [vmem:[%s1 + $0x1b0] sm:$0xff]
  %v723 = vld [vmem:[%s1 + $0x1b8] sm:$0xff]
  %v724 = vld [vmem:[%s1 + $0x1c0] sm:$0xff]
  %v725 = vld [vmem:[%s1 + $0x1c8] sm:$0xff]
  %v726 = vld [vmem:[%s1 + $0x1d0] sm:$0xff]
  %v727 = vld [vmem:[%s1 + $0x1d8] sm:$0xff]
  %v728 = vld [vmem:[%s1 + $0x1e0] sm:$0xff]
  %v729 = vld [vmem:[%s1 + $0x1e8] sm:$0xff]
  %v730 = vld [vmem:[%s1 + $0x1f0] sm:$0xff]
  %v731 = vld [vmem:[%s1 + $0x1f8] sm:$0xff]
  %v732 = vadd.f32 %v350, %v668
  %v733 = vadd.f32 %v355, %v669
  %v734 = vadd.f32 %v360, %v670
  %v735 = vadd.f32 %v365, %v671
  %v736 = vadd.f32 %v370, %v672
  %v737 = vadd.f32 %v375, %v673
  %v738 = vadd.f32 %v380, %v674
  %v739 = vadd.f32 %v385, %v675
  %v740 = vadd.f32 %v390, %v676
  %v741 = vadd.f32 %v395, %v677
  %v742 = vadd.f32 %v400, %v678
  %v743 = vadd.f32 %v405, %v679
  %v744 = vadd.f32 %v410, %v680
  %v745 = vadd.f32 %v415, %v681
  %v746 = vadd.f32 %v420, %v682
  %v747 = vadd.f32 %v425, %v683
  %v748 = vadd.f32 %v430, %v684
  %v749 = vadd.f32 %v435, %v685
  %v750 = vadd.f32 %v440, %v686
  %v751 = vadd.f32 %v445, %v687
  %v752 = vadd.f32 %v450, %v688
  %v753 = vadd.f32 %v455, %v689
  %v754 = vadd.f32 %v460, %v690
  %v755 = vadd.f32 %v465, %v691
  %v756 = vadd.f32 %v470, %v692
  %v757 = vadd.f32 %v475, %v693
  %v758 = vadd.f32 %v480, %v694
  %v759 = vadd.f32 %v485, %v695
  %v760 = vadd.f32 %v490, %v696
  %v761 = vadd.f32 %v495, %v697
  %v762 = vadd.f32 %v500, %v698
  %v763 = vadd.f32 %v505, %v699
  %v764 = vadd.f32 %v510, %v700
  %v765 = vadd.f32 %v515, %v701
  %v766 = vadd.f32 %v520, %v702
  %v767 = vadd.f32 %v525, %v703
  %v768 = vadd.f32 %v530, %v704
  %v769 = vadd.f32 %v535, %v705
  %v770 = vadd.f32 %v540, %v706
  %v771 = vadd.f32 %v545, %v707
  %v772 = vadd.f32 %v550, %v708
  %v773 = vadd.f32 %v555, %v709
  %v774 = vadd.f32 %v560, %v710
  %v775 = vadd.f32 %v565, %v711
  %v776 = vadd.f32 %v570, %v712
  %v777 = vadd.f32 %v575, %v713
  %v778 = vadd.f32 %v580, %v714
  %v779 = vadd.f32 %v585, %v715
  %v780 = vadd.f32 %v590, %v716
  %v781 = vadd.f32 %v595, %v717
  %v782 = vadd.f32 %v600, %v718
  %v783 = vadd.f32 %v605, %v719
  %v784 = vadd.f32 %v610, %v720
  %v785 = vadd.f32 %v615, %v721
  %v786 = vadd.f32 %v620, %v722
  %v787 = vadd.f32 %v625, %v723
  %v788 = vadd.f32 %v630, %v724
  %v789 = vadd.f32 %v635, %v725
  %v790 = vadd.f32 %v640, %v726
  %v791 = vadd.f32 %v645, %v727
  %v792 = vadd.f32 %v650, %v728
  %v793 = vadd.f32 %v655, %v729
  %v794 = vadd.f32 %v660, %v730
  %v795 = vadd.f32 %v665, %v731
  %v796 = vmul.f32 %v732, 0.5
  %v797 = vmul.f32 %v733, 0.5
  %v798 = vmul.f32 %v734, 0.5
  %v799 = vmul.f32 %v735, 0.5
  %v800 = vmul.f32 %v736, 0.5
  %v801 = vmul.f32 %v737, 0.5
  %v802 = vmul.f32 %v738, 0.5
  %v803 = vmul.f32 %v739, 0.5
  %v804 = vmul.f32 %v740, 0.5
  %v805 = vmul.f32 %v741, 0.5
  %v806 = vmul.f32 %v742, 0.5
  %v807 = vmul.f32 %v743, 0.5
  %v808 = vmul.f32 %v744, 0.5
  %v809 = vmul.f32 %v745, 0.5
  %v810 = vmul.f32 %v746, 0.5
  %v811 = vmul.f32 %v747, 0.5
  %v812 = vmul.f32 %v748, 0.5
  %v813 = vmul.f32 %v749, 0.5
  %v814 = vmul.f32 %v750, 0.5
  %v815 = vmul.f32 %v751, 0.5
  %v816 = vmul.f32 %v752, 0.5
  %v817 = vmul.f32 %v753, 0.5
  %v818 = vmul.f32 %v754, 0.5
  %v819 = vmul.f32 %v755, 0.5
  %v820 = vmul.f32 %v756, 0.5
  %v821 = vmul.f32 %v757, 0.5
  %v822 = vmul.f32 %v758, 0.5
  %v823 = vmul.f32 %v759, 0.5
  %v824 = vmul.f32 %v760, 0.5
  %v825 = vmul.f32 %v761, 0.5
  %v826 = vmul.f32 %v762, 0.5
  %v827 = vmul.f32 %v763, 0.5
  %v828 = vmul.f32 %v764, 0.5
  %v829 = vmul.f32 %v765, 0.5
  %v830 = vmul.f32 %v766, 0.5
  %v831 = vmul.f32 %v767, 0.5
  %v832 = vmul.f32 %v768, 0.5
  %v833 = vmul.f32 %v769, 0.5
  %v834 = vmul.f32 %v770, 0.5
  %v835 = vmul.f32 %v771, 0.5
  %v836 = vmul.f32 %v772, 0.5
  %v837 = vmul.f32 %v773, 0.5
  %v838 = vmul.f32 %v774, 0.5
  %v839 = vmul.f32 %v775, 0.5
  %v840 = vmul.f32 %v776, 0.5
  %v841 = vmul.f32 %v777, 0.5
  %v842 = vmul.f32 %v778, 0.5
  %v843 = vmul.f32 %v779, 0.5
  %v844 = vmul.f32 %v780, 0.5
  %v845 = vmul.f32 %v781, 0.5
  %v846 = vmul.f32 %v782, 0.5
  %v847 = vmul.f32 %v783, 0.5
  %v848 = vmul.f32 %v784, 0.5
  %v849 = vmul.f32 %v785, 0.5
  %v850 = vmul.f32 %v786, 0.5
  %v851 = vmul.f32 %v787, 0.5
  %v852 = vmul.f32 %v788, 0.5
  %v853 = vmul.f32 %v789, 0.5
  %v854 = vmul.f32 %v790, 0.5
  %v855 = vmul.f32 %v791, 0.5
  %v856 = vmul.f32 %v792, 0.5
  %v857 = vmul.f32 %v793, 0.5
  %v858 = vmul.f32 %v794, 0.5
  %v859 = vmul.f32 %v795, 0.5
  %v860 = vrcp.pop 1.4142135
  %v861 = vmul.f32 %v732, %v860
  %v862 = vmul.f32 %v733, %v860
  %v863 = vmul.f32 %v734, %v860
  %v864 = vmul.f32 %v735, %v860
  %v865 = vmul.f32 %v736, %v860
  %v866 = vmul.f32 %v737, %v860
  %v867 = vmul.f32 %v738, %v860
  %v868 = vmul.f32 %v739, %v860
  %v869 = vmul.f32 %v740, %v860
  %v870 = vmul.f32 %v741, %v860
  %v871 = vmul.f32 %v742, %v860
  %v872 = vmul.f32 %v743, %v860
  %v873 = vmul.f32 %v744, %v860
  %v874 = vmul.f32 %v745, %v860
  %v875 = vmul.f32 %v746, %v860
  %v876 = vmul.f32 %v747, %v860
  %v877 = vmul.f32 %v748, %v860
  %v878 = vmul.f32 %v749, %v860
  %v879 = vmul.f32 %v750, %v860
  %v880 = vmul.f32 %v751, %v860
  %v881 = vmul.f32 %v752, %v860
  %v882 = vmul.f32 %v753, %v860
  %v883 = vmul.f32 %v754, %v860
  %v884 = vmul.f32 %v755, %v860
  %v885 = vmul.f32 %v756, %v860
  %v886 = vmul.f32 %v757, %v860
  %v887 = vmul.f32 %v758, %v860
  %v888 = vmul.f32 %v759, %v860
  %v889 = vmul.f32 %v760, %v860
  %v890 = vmul.f32 %v761, %v860
  %v891 = vmul.f32 %v762, %v860
  %v892 = vmul.f32 %v763, %v860
  %v893 = vmul.f32 %v764, %v860
  %v894 = vmul.f32 %v765, %v860
  %v895 = vmul.f32 %v766, %v860
  %v896 = vmul.f32 %v767, %v860
  %v897 = vmul.f32 %v768, %v860
  %v898 = vmul.f32 %v769, %v860
  %v899 = vmul.f32 %v770, %v860
  %v900 = vmul.f32 %v771, %v860
  %v901 = vmul.f32 %v772, %v860
  %v902 = vmul.f32 %v773, %v860
  %v903 = vmul.f32 %v774, %v860
  %v904 = vmul.f32 %v775, %v860
  %v905 = vmul.f32 %v776, %v860
  %v906 = vmul.f32 %v777, %v860
  %v907 = vmul.f32 %v778, %v860
  %v908 = vmul.f32 %v779, %v860
  %v909 = vmul.f32 %v780, %v860
  %v910 = vmul.f32 %v781, %v860
  %v911 = vmul.f32 %v782, %v860
  %v912 = vmul.f32 %v783, %v860
  %v913 = vmul.f32 %v784, %v860
  %v914 = vmul.f32 %v785, %v860
  %v915 = vmul.f32 %v786, %v860
  %v916 = vmul.f32 %v787, %v860
  %v917 = vmul.f32 %v788, %v860
  %v918 = vmul.f32 %v789, %v860
  %v919 = vmul.f32 %v790, %v860
  %v920 = vmul.f32 %v791, %v860
  %v921 = vmul.f32 %v792, %v860
  %v922 = vmul.f32 %v793, %v860
  %v923 = vmul.f32 %v794, %v860
  %v924 = vmul.f32 %v795, %v860
  %v925 = verf.f32.pop %v861
  %v926 = verf.f32.pop %v862
  %v927 = verf.f32.pop %v863
  %v928 = verf.f32.pop %v864
  %v929 = verf.f32.pop %v865
  %v930 = verf.f32.pop %v866
  %v931 = verf.f32.pop %v867
  %v932 = verf.f32.pop %v868
  %v933 = verf.f32.pop %v869
  %v934 = verf.f32.pop %v870
  %v935 = verf.f32.pop %v871
  %v936 = verf.f32.pop %v872
  %v937 = verf.f32.pop %v873
  %v938 = verf.f32.pop %v874
  %v939 = verf.f32.pop %v875
  %v940 = verf.f32.pop %v876
  %v941 = verf.f32.pop %v877
  %v942 = verf.f32.pop %v878
  %v943 = verf.f32.pop %v879
  %v944 = verf.f32.pop %v880
  %v945 = verf.f32.pop %v881
  %v946 = verf.f32.pop %v882
  %v947 = verf.f32.pop %v883
  %v948 = verf.f32.pop %v884
  %v949 = verf.f32.pop %v885
  %v950 = verf.f32.pop %v886
  %v951 = verf.f32.pop %v887
  %v952 = verf.f32.pop %v888
  %v953 = verf.f32.pop %v889
  %v954 = verf.f32.pop %v890
  %v955 = verf.f32.pop %v891
  %v956 = verf.f32.pop %v892
  %v957 = verf.f32.pop %v893
  %v958 = verf.f32.pop %v894
  %v959 = verf.f32.pop %v895
  %v960 = verf.f32.pop %v896
  %v961 = verf.f32.pop %v897
  %v962 = verf.f32.pop %v898
  %v963 = verf.f32.pop %v899
  %v964 = verf.f32.pop %v900
  %v965 = verf.f32.pop %v901
  %v966 = verf.f32.pop %v902
  %v967 = verf.f32.pop %v903
  %v968 = verf.f32.pop %v904
  %v969 = verf.f32.pop %v905
  %v970 = verf.f32.pop %v906
  %v971 = verf.f32.pop %v907
  %v972 = verf.f32.pop %v908
  %v973 = verf.f32.pop %v909
  %v974 = verf.f32.pop %v910
  %v975 = verf.f32.pop %v911
  %v976 = verf.f32.pop %v912
  %v977 = verf.f32.pop %v913
  %v978 = verf.f32.pop %v914
  %v979 = verf.f32.pop %v915
  %v980 = verf.f32.pop %v916
  %v981 = verf.f32.pop %v917
  %v982 = verf.f32.pop %v918
  %v983 = verf.f32.pop %v919
  %v984 = verf.f32.pop %v920
  %v985 = verf.f32.pop %v921
  %v986 = verf.f32.pop %v922
  %v987 = verf.f32.pop %v923
  %v988 = verf.f32.pop %v924
  %v989 = vadd.f32 %v925, 1.0
  %v990 = vadd.f32 %v926, 1.0
  %v991 = vadd.f32 %v927, 1.0
  %v992 = vadd.f32 %v928, 1.0
  %v993 = vadd.f32 %v929, 1.0
  %v994 = vadd.f32 %v930, 1.0
  %v995 = vadd.f32 %v931, 1.0
  %v996 = vadd.f32 %v932, 1.0
  %v997 = vadd.f32 %v933, 1.0
  %v998 = vadd.f32 %v934, 1.0
  %v999 = vadd.f32 %v935, 1.0
  %v1000 = vadd.f32 %v936, 1.0
  %v1001 = vadd.f32 %v937, 1.0
  %v1002 = vadd.f32 %v938, 1.0
  %v1003 = vadd.f32 %v939, 1.0
  %v1004 = vadd.f32 %v940, 1.0
  %v1005 = vadd.f32 %v941, 1.0
  %v1006 = vadd.f32 %v942, 1.0
  %v1007 = vadd.f32 %v943, 1.0
  %v1008 = vadd.f32 %v944, 1.0
  %v1009 = vadd.f32 %v945, 1.0
  %v1010 = vadd.f32 %v946, 1.0
  %v1011 = vadd.f32 %v947, 1.0
  %v1012 = vadd.f32 %v948, 1.0
  %v1013 = vadd.f32 %v949, 1.0
  %v1014 = vadd.f32 %v950, 1.0
  %v1015 = vadd.f32 %v951, 1.0
  %v1016 = vadd.f32 %v952, 1.0
  %v1017 = vadd.f32 %v953, 1.0
  %v1018 = vadd.f32 %v954, 1.0
  %v1019 = vadd.f32 %v955, 1.0
  %v1020 = vadd.f32 %v956, 1.0
  %v1021 = vadd.f32 %v957, 1.0
  %v1022 = vadd.f32 %v958, 1.0
  %v1023 = vadd.f32 %v959, 1.0
  %v1024 = vadd.f32 %v960, 1.0
  %v1025 = vadd.f32 %v961, 1.0
  %v1026 = vadd.f32 %v962, 1.0
  %v1027 = vadd.f32 %v963, 1.0
  %v1028 = vadd.f32 %v964, 1.0
  %v1029 = vadd.f32 %v965, 1.0
  %v1030 = vadd.f32 %v966, 1.0
  %v1031 = vadd.f32 %v967, 1.0
  %v1032 = vadd.f32 %v968, 1.0
  %v1033 = vadd.f32 %v969, 1.0
  %v1034 = vadd.f32 %v970, 1.0
  %v1035 = vadd.f32 %v971, 1.0
  %v1036 = vadd.f32 %v972, 1.0
  %v1037 = vadd.f32 %v973, 1.0
  %v1038 = vadd.f32 %v974, 1.0
  %v1039 = vadd.f32 %v975, 1.0
  %v1040 = vadd.f32 %v976, 1.0
  %v1041 = vadd.f32 %v977, 1.0
  %v1042 = vadd.f32 %v978, 1.0
  %v1043 = vadd.f32 %v979, 1.0
  %v1044 = vadd.f32 %v980, 1.0
  %v1045 = vadd.f32 %v981, 1.0
  %v1046 = vadd.f32 %v982, 1.0
  %v1047 = vadd.f32 %v983, 1.0
  %v1048 = vadd.f32 %v984, 1.0
  %v1049 = vadd.f32 %v985, 1.0
  %v1050 = vadd.f32 %v986, 1.0
  %v1051 = vadd.f32 %v987, 1.0
  %v1052 = vadd.f32 %v988, 1.0
  %v1053 = vmul.f32 %v796, %v989
  %v1054 = vmul.f32 %v797, %v990
  %v1055 = vmul.f32 %v798, %v991
  %v1056 = vmul.f32 %v799, %v992
  %v1057 = vmul.f32 %v800, %v993
  %v1058 = vmul.f32 %v801, %v994
  %v1059 = vmul.f32 %v802, %v995
  %v1060 = vmul.f32 %v803, %v996
  %v1061 = vmul.f32 %v804, %v997
  %v1062 = vmul.f32 %v805, %v998
  %v1063 = vmul.f32 %v806, %v999
  %v1064 = vmul.f32 %v807, %v1000
  %v1065 = vmul.f32 %v808, %v1001
  %v1066 = vmul.f32 %v809, %v1002
  %v1067 = vmul.f32 %v810, %v1003
  %v1068 = vmul.f32 %v811, %v1004
  %v1069 = vmul.f32 %v812, %v1005
  %v1070 = vmul.f32 %v813, %v1006
  %v1071 = vmul.f32 %v814, %v1007
  %v1072 = vmul.f32 %v815, %v1008
  %v1073 = vmul.f32 %v816, %v1009
  %v1074 = vmul.f32 %v817, %v1010
  %v1075 = vmul.f32 %v818, %v1011
  %v1076 = vmul.f32 %v819, %v1012
  %v1077 = vmul.f32 %v820, %v1013
  %v1078 = vmul.f32 %v821, %v1014
  %v1079 = vmul.f32 %v822, %v1015
  %v1080 = vmul.f32 %v823, %v1016
  %v1081 = vmul.f32 %v824, %v1017
  %v1082 = vmul.f32 %v825, %v1018
  %v1083 = vmul.f32 %v826, %v1019
  %v1084 = vmul.f32 %v827, %v1020
  %v1085 = vmul.f32 %v828, %v1021
  %v1086 = vmul.f32 %v829, %v1022
  %v1087 = vmul.f32 %v830, %v1023
  %v1088 = vmul.f32 %v831, %v1024
  %v1089 = vmul.f32 %v832, %v1025
  %v1090 = vmul.f32 %v833, %v1026
  %v1091 = vmul.f32 %v834, %v1027
  %v1092 = vmul.f32 %v835, %v1028
  %v1093 = vmul.f32 %v836, %v1029
  %v1094 = vmul.f32 %v837, %v1030
  %v1095 = vmul.f32 %v838, %v1031
  %v1096 = vmul.f32 %v839, %v1032
  %v1097 = vmul.f32 %v840, %v1033
  %v1098 = vmul.f32 %v841, %v1034
  %v1099 = vmul.f32 %v842, %v1035
  %v1100 = vmul.f32 %v843, %v1036
  %v1101 = vmul.f32 %v844, %v1037
  %v1102 = vmul.f32 %v845, %v1038
  %v1103 = vmul.f32 %v846, %v1039
  %v1104 = vmul.f32 %v847, %v1040
  %v1105 = vmul.f32 %v848, %v1041
  %v1106 = vmul.f32 %v849, %v1042
  %v1107 = vmul.f32 %v850, %v1043
  %v1108 = vmul.f32 %v851, %v1044
  %v1109 = vmul.f32 %v852, %v1045
  %v1110 = vmul.f32 %v853, %v1046
  %v1111 = vmul.f32 %v854, %v1047
  %v1112 = vmul.f32 %v855, %v1048
  %v1113 = vmul.f32 %v856, %v1049
  %v1114 = vmul.f32 %v857, %v1050
  %v1115 = vmul.f32 %v858, %v1051
  %v1116 = vmul.f32 %v859, %v1052
  %1117 = vst.msk [vmem:[%s4] sm:$0xff] %vm90, %v1053
  %1118 = vst.msk [vmem:[%s4 + $0x8] sm:$0xff] %vm90, %v1054
  %1119 = vst.msk [vmem:[%s4 + $0x10] sm:$0xff] %vm90, %v1055
  %1120 = vst.msk [vmem:[%s4 + $0x18] sm:$0xff] %vm90, %v1056
  %1121 = vst.msk [vmem:[%s4 + $0x20] sm:$0xff] %vm90, %v1057
  %1122 = vst.msk [vmem:[%s4 + $0x28] sm:$0xff] %vm90, %v1058
  %1123 = vst.msk [vmem:[%s4 + $0x30] sm:$0xff] %vm90, %v1059
  %1124 = vst.msk [vmem:[%s4 + $0x38] sm:$0xff] %vm90, %v1060
  %1125 = vst.msk [vmem:[%s4 + $0x40] sm:$0xff] %vm90, %v1061
  %1126 = vst.msk [vmem:[%s4 + $0x48] sm:$0xff] %vm90, %v1062
  %1127 = vst.msk [vmem:[%s4 + $0x50] sm:$0xff] %vm90, %v1063
  %1128 = vst.msk [vmem:[%s4 + $0x58] sm:$0xff] %vm90, %v1064
  %1129 = vst.msk [vmem:[%s4 + $0x60] sm:$0xff] %vm90, %v1065
  %1130 = vst.msk [vmem:[%s4 + $0x68] sm:$0xff] %vm90, %v1066
  %1131 = vst.msk [vmem:[%s4 + $0x70] sm:$0xff] %vm90, %v1067
  %1132 = vst.msk [vmem:[%s4 + $0x78] sm:$0xff] %vm90, %v1068
  %1133 = vst.msk [vmem:[%s4 + $0x80] sm:$0xff] %vm90, %v1069
  %1134 = vst.msk [vmem:[%s4 + $0x88] sm:$0xff] %vm90, %v1070
  %1135 = vst.msk [vmem:[%s4 + $0x90] sm:$0xff] %vm90, %v1071
  %1136 = vst.msk [vmem:[%s4 + $0x98] sm:$0xff] %vm90, %v1072
  %1137 = vst.msk [vmem:[%s4 + $0xa0] sm:$0xff] %vm90, %v1073
  %1138 = vst.msk [vmem:[%s4 + $0xa8] sm:$0xff] %vm90, %v1074
  %1139 = vst.msk [vmem:[%s4 + $0xb0] sm:$0xff] %vm90, %v1075
  %1140 = vst.msk [vmem:[%s4 + $0xb8] sm:$0xff] %vm90, %v1076
  %1141 = vst.msk [vmem:[%s4 + $0xc0] sm:$0xff] %vm90, %v1077
  %1142 = vst.msk [vmem:[%s4 + $0xc8] sm:$0xff] %vm90, %v1078
  %1143 = vst.msk [vmem:[%s4 + $0xd0] sm:$0xff] %vm90, %v1079
  %1144 = vst.msk [vmem:[%s4 + $0xd8] sm:$0xff] %vm90, %v1080
  %1145 = vst.msk [vmem:[%s4 + $0xe0] sm:$0xff] %vm90, %v1081
  %1146 = vst.msk [vmem:[%s4 + $0xe8] sm:$0xff] %vm90, %v1082
  %1147 = vst.msk [vmem:[%s4 + $0xf0] sm:$0xff] %vm90, %v1083
  %1148 = vst.msk [vmem:[%s4 + $0xf8] sm:$0xff] %vm90, %v1084
  %1149 = vst.msk [vmem:[%s4 + $0x100] sm:$0xff] %vm90, %v1085
  %1150 = vst.msk [vmem:[%s4 + $0x108] sm:$0xff] %vm90, %v1086
  %1151 = vst.msk [vmem:[%s4 + $0x110] sm:$0xff] %vm90, %v1087
  %1152 = vst.msk [vmem:[%s4 + $0x118] sm:$0xff] %vm90, %v1088
  %1153 = vst.msk [vmem:[%s4 + $0x120] sm:$0xff] %vm90, %v1089
  %1154 = vst.msk [vmem:[%s4 + $0x128] sm:$0xff] %vm90, %v1090
  %1155 = vst.msk [vmem:[%s4 + $0x130] sm:$0xff] %vm90, %v1091
  %1156 = vst.msk [vmem:[%s4 + $0x138] sm:$0xff] %vm90, %v1092
  %1157 = vst.msk [vmem:[%s4 + $0x140] sm:$0xff] %vm90, %v1093
  %1158 = vst.msk [vmem:[%s4 + $0x148] sm:$0xff] %vm90, %v1094
  %1159 = vst.msk [vmem:[%s4 + $0x150] sm:$0xff] %vm90, %v1095
  %1160 = vst.msk [vmem:[%s4 + $0x158] sm:$0xff] %vm90, %v1096
  %1161 = vst.msk [vmem:[%s4 + $0x160] sm:$0xff] %vm90, %v1097
  %1162 = vst.msk [vmem:[%s4 + $0x168] sm:$0xff] %vm90, %v1098
  %1163 = vst.msk [vmem:[%s4 + $0x170] sm:$0xff] %vm90, %v1099
  %1164 = vst.msk [vmem:[%s4 + $0x178] sm:$0xff] %vm90, %v1100
  %1165 = vst.msk [vmem:[%s4 + $0x180] sm:$0xff] %vm90, %v1101
  %1166 = vst.msk [vmem:[%s4 + $0x188] sm:$0xff] %vm90, %v1102
  %1167 = vst.msk [vmem:[%s4 + $0x190] sm:$0xff] %vm90, %v1103
  %1168 = vst.msk [vmem:[%s4 + $0x198] sm:$0xff] %vm90, %v1104
  %1169 = vst.msk [vmem:[%s4 + $0x1a0] sm:$0xff] %vm90, %v1105
  %1170 = vst.msk [vmem:[%s4 + $0x1a8] sm:$0xff] %vm90, %v1106
  %1171 = vst.msk [vmem:[%s4 + $0x1b0] sm:$0xff] %vm90, %v1107
  %1172 = vst.msk [vmem:[%s4 + $0x1b8] sm:$0xff] %vm90, %v1108
  %1173 = vst.msk [vmem:[%s4 + $0x1c0] sm:$0xff] %vm90, %v1109
  %1174 = vst.msk [vmem:[%s4 + $0x1c8] sm:$0xff] %vm90, %v1110
  %1175 = vst.msk [vmem:[%s4 + $0x1d0] sm:$0xff] %vm90, %v1111
  %1176 = vst.msk [vmem:[%s4 + $0x1d8] sm:$0xff] %vm90, %v1112
  %1177 = vst.msk [vmem:[%s4 + $0x1e0] sm:$0xff] %vm90, %v1113
  %1178 = vst.msk [vmem:[%s4 + $0x1e8] sm:$0xff] %vm90, %v1114
  %1179 = vst.msk [vmem:[%s4 + $0x1f0] sm:$0xff] %vm90, %v1115
  %1180 = vst.msk [vmem:[%s4 + $0x1f8] sm:$0xff] %vm90, %v1116
  // Predicated region
  $region18: #{fno2d_forward.10} parent=0 // pred_check
    _
  $region19: #{fno2d_forward.10} parent=0 // pred_check_branch
    %1182 = sbr.rel (0) target = $region21
  $region20: #{fno2d_forward.10} parent=0 // pred_region
    _
  $region21: #{fno2d_forward.10} parent=0 // pred_fallthru
    _
  // Predicated region
  $region22: #{fno2d_forward.10} parent=0 // pred_check
    _
  $region23: #{fno2d_forward.10} parent=0 // pred_check_branch
    %1184 = sbr.rel (0) target = $region25
  $region24: #{fno2d_forward.10} parent=0 // pred_region
    _
  $region25: #{fno2d_forward.10} parent=0 // pred_fallthru
    _

// kernel: fno2d_forward.14
$region0: #{fno2d_forward.14}
  #allocation0 [shape = 'u32[]', space=smem, size = 0x4, offset = 0x4, fixed_abs, tag = 'smem constant byte address 0x4 - core index']
  #allocation1 [shape = 'u32[144,128]{1,0:T(1,128)}', space=vmem, size = 0x12000, scoped, tag = 'internal scratch']
  %s0 = inlined_call_operand.vmem [shape: f32[512,16], index: 0, kind: input, shape index: {}]
  %s1 = inlined_call_operand.vmem [shape: f32[512,16], index: 1, kind: input, shape index: {}]
  %s2 = inlined_call_operand.vmem [shape: f32[16,16], index: 2, kind: input, shape index: {}]
  %s3 = inlined_call_operand.vmem [shape: f32[1,16], index: 3, kind: input, shape index: {}]
  %s4 = inlined_call_operand.vmem [shape: f32[512,16], index: 4, kind: output, shape index: {}]
  %s5 = sld [smem:[#allocation0]]
  $region26: #{fno2d_forward.14} parent=0
    _
  %s7 = ssub.s32 1, %s5
  %s8 = scalar_select 0, %s7, %s5
  // Predicated region
  $region2: #{fno2d_forward.14} parent=0 // pred_check
    _
  $region3: #{fno2d_forward.14} parent=0 // pred_check_branch
    %10 = sbr.rel (0) target = $region5
  $region4: #{fno2d_forward.14} parent=0 // pred_region
    _
  $region5: #{fno2d_forward.14} parent=0 // pred_fallthru
    _
  // Predicated region
  $region6: #{fno2d_forward.14} parent=0 // pred_check
    _
  $region7: #{fno2d_forward.14} parent=0 // pred_check_branch
    %12 = sbr.rel (0) target = $region9
  $region8: #{fno2d_forward.14} parent=0 // pred_region
    _
  $region9: #{fno2d_forward.14} parent=0 // pred_fallthru
    _
  // Predicated region
  $region10: #{fno2d_forward.14} parent=0 // pred_check
    _
  $region11: #{fno2d_forward.14} parent=0 // pred_check_branch
    %14 = sbr.rel (0) target = $region13
  $region12: #{fno2d_forward.14} parent=0 // pred_region
    _
  $region13: #{fno2d_forward.14} parent=0 // pred_fallthru
    _
  // Predicated region
  $region14: #{fno2d_forward.14} parent=0 // pred_check
    _
  $region15: #{fno2d_forward.14} parent=0 // pred_check_branch
    %16 = sbr.rel (0) target = $region17
  $region16: #{fno2d_forward.14} parent=0 // pred_region
    _
  $region17: #{fno2d_forward.14} parent=0 // pred_fallthru
    _
  %v17 = vld [vmem:[%s0] sm:$0xff]
  %v18 = vld [vmem:[%s0 + $0x8] sm:$0xff]
  %v19 = vld [vmem:[%s0 + $0x10] sm:$0xff]
  %v20 = vld [vmem:[%s0 + $0x18] sm:$0xff]
  %v21 = vld [vmem:[%s0 + $0x20] sm:$0xff]
  %v22 = vld [vmem:[%s0 + $0x28] sm:$0xff]
  %v23 = vld [vmem:[%s0 + $0x30] sm:$0xff]
  %v24 = vld [vmem:[%s0 + $0x38] sm:$0xff]
  %v25 = vld [vmem:[%s0 + $0x40] sm:$0xff]
  %v26 = vld [vmem:[%s0 + $0x48] sm:$0xff]
  %v27 = vld [vmem:[%s0 + $0x50] sm:$0xff]
  %v28 = vld [vmem:[%s0 + $0x58] sm:$0xff]
  %v29 = vld [vmem:[%s0 + $0x60] sm:$0xff]
  %v30 = vld [vmem:[%s0 + $0x68] sm:$0xff]
  %v31 = vld [vmem:[%s0 + $0x70] sm:$0xff]
  %v32 = vld [vmem:[%s0 + $0x78] sm:$0xff]
  %v33 = vld [vmem:[%s0 + $0x80] sm:$0xff]
  %v34 = vld [vmem:[%s0 + $0x88] sm:$0xff]
  %v35 = vld [vmem:[%s0 + $0x90] sm:$0xff]
  %v36 = vld [vmem:[%s0 + $0x98] sm:$0xff]
  %v37 = vld [vmem:[%s0 + $0xa0] sm:$0xff]
  %v38 = vld [vmem:[%s0 + $0xa8] sm:$0xff]
  %v39 = vld [vmem:[%s0 + $0xb0] sm:$0xff]
  %v40 = vld [vmem:[%s0 + $0xb8] sm:$0xff]
  %v41 = vld [vmem:[%s0 + $0xc0] sm:$0xff]
  %v42 = vld [vmem:[%s0 + $0xc8] sm:$0xff]
  %v43 = vld [vmem:[%s0 + $0xd0] sm:$0xff]
  %v44 = vld [vmem:[%s0 + $0xd8] sm:$0xff]
  %v45 = vld [vmem:[%s0 + $0xe0] sm:$0xff]
  %v46 = vld [vmem:[%s0 + $0xe8] sm:$0xff]
  %v47 = vld [vmem:[%s0 + $0xf0] sm:$0xff]
  %v48 = vld [vmem:[%s0 + $0xf8] sm:$0xff]
  %v49 = vld [vmem:[%s0 + $0x100] sm:$0xff]
  %v50 = vld [vmem:[%s0 + $0x108] sm:$0xff]
  %v51 = vld [vmem:[%s0 + $0x110] sm:$0xff]
  %v52 = vld [vmem:[%s0 + $0x118] sm:$0xff]
  %v53 = vld [vmem:[%s0 + $0x120] sm:$0xff]
  %v54 = vld [vmem:[%s0 + $0x128] sm:$0xff]
  %v55 = vld [vmem:[%s0 + $0x130] sm:$0xff]
  %v56 = vld [vmem:[%s0 + $0x138] sm:$0xff]
  %v57 = vld [vmem:[%s0 + $0x140] sm:$0xff]
  %v58 = vld [vmem:[%s0 + $0x148] sm:$0xff]
  %v59 = vld [vmem:[%s0 + $0x150] sm:$0xff]
  %v60 = vld [vmem:[%s0 + $0x158] sm:$0xff]
  %v61 = vld [vmem:[%s0 + $0x160] sm:$0xff]
  %v62 = vld [vmem:[%s0 + $0x168] sm:$0xff]
  %v63 = vld [vmem:[%s0 + $0x170] sm:$0xff]
  %v64 = vld [vmem:[%s0 + $0x178] sm:$0xff]
  %v65 = vld [vmem:[%s0 + $0x180] sm:$0xff]
  %v66 = vld [vmem:[%s0 + $0x188] sm:$0xff]
  %v67 = vld [vmem:[%s0 + $0x190] sm:$0xff]
  %v68 = vld [vmem:[%s0 + $0x198] sm:$0xff]
  %v69 = vld [vmem:[%s0 + $0x1a0] sm:$0xff]
  %v70 = vld [vmem:[%s0 + $0x1a8] sm:$0xff]
  %v71 = vld [vmem:[%s0 + $0x1b0] sm:$0xff]
  %v72 = vld [vmem:[%s0 + $0x1b8] sm:$0xff]
  %v73 = vld [vmem:[%s0 + $0x1c0] sm:$0xff]
  %v74 = vld [vmem:[%s0 + $0x1c8] sm:$0xff]
  %v75 = vld [vmem:[%s0 + $0x1d0] sm:$0xff]
  %v76 = vld [vmem:[%s0 + $0x1d8] sm:$0xff]
  %v77 = vld [vmem:[%s0 + $0x1e0] sm:$0xff]
  %v78 = vld [vmem:[%s0 + $0x1e8] sm:$0xff]
  %v79 = vld [vmem:[%s0 + $0x1f0] sm:$0xff]
  %v80 = vld [vmem:[%s0 + $0x1f8] sm:$0xff]
  %v81 = vld [vmem:[%s2] sm:$0xff]
  %v82 = vld [vmem:[%s2 + $0x8] sm:$0xff]
  %v83 = vld [vmem:[%s3] sm:$0x1]
  %v85 = vlaneseq
  %v86 = vshrl.u32 %v85, 7
  %v87 = vsub.s32 0, %v86
  %v88 = vrot.slane %v83, %v87
  %vm90 = vcmask 130048
  %v92 = vsel %vm90, %v17, 0
  %v95 = vsel %vm90, %v18, 0
  %v98 = vsel %vm90, %v19, 0
  %v101 = vsel %vm90, %v20, 0
  %v104 = vsel %vm90, %v21, 0
  %v107 = vsel %vm90, %v22, 0
  %v110 = vsel %vm90, %v23, 0
  %v113 = vsel %vm90, %v24, 0
  %v116 = vsel %vm90, %v25, 0
  %v119 = vsel %vm90, %v26, 0
  %v122 = vsel %vm90, %v27, 0
  %v125 = vsel %vm90, %v28, 0
  %v128 = vsel %vm90, %v29, 0
  %v131 = vsel %vm90, %v30, 0
  %v134 = vsel %vm90, %v31, 0
  %v137 = vsel %vm90, %v32, 0
  %v140 = vsel %vm90, %v33, 0
  %v143 = vsel %vm90, %v34, 0
  %v146 = vsel %vm90, %v35, 0
  %v149 = vsel %vm90, %v36, 0
  %v152 = vsel %vm90, %v37, 0
  %v155 = vsel %vm90, %v38, 0
  %v158 = vsel %vm90, %v39, 0
  %v161 = vsel %vm90, %v40, 0
  %v164 = vsel %vm90, %v41, 0
  %v167 = vsel %vm90, %v42, 0
  %v170 = vsel %vm90, %v43, 0
  %v173 = vsel %vm90, %v44, 0
  %v176 = vsel %vm90, %v45, 0
  %v179 = vsel %vm90, %v46, 0
  %v182 = vsel %vm90, %v47, 0
  %v185 = vsel %vm90, %v48, 0
  %v188 = vsel %vm90, %v49, 0
  %v191 = vsel %vm90, %v50, 0
  %v194 = vsel %vm90, %v51, 0
  %v197 = vsel %vm90, %v52, 0
  %v200 = vsel %vm90, %v53, 0
  %v203 = vsel %vm90, %v54, 0
  %v206 = vsel %vm90, %v55, 0
  %v209 = vsel %vm90, %v56, 0
  %v212 = vsel %vm90, %v57, 0
  %v215 = vsel %vm90, %v58, 0
  %v218 = vsel %vm90, %v59, 0
  %v221 = vsel %vm90, %v60, 0
  %v224 = vsel %vm90, %v61, 0
  %v227 = vsel %vm90, %v62, 0
  %v230 = vsel %vm90, %v63, 0
  %v233 = vsel %vm90, %v64, 0
  %v236 = vsel %vm90, %v65, 0
  %v239 = vsel %vm90, %v66, 0
  %v242 = vsel %vm90, %v67, 0
  %v245 = vsel %vm90, %v68, 0
  %v248 = vsel %vm90, %v69, 0
  %v251 = vsel %vm90, %v70, 0
  %v254 = vsel %vm90, %v71, 0
  %v257 = vsel %vm90, %v72, 0
  %v260 = vsel %vm90, %v73, 0
  %v263 = vsel %vm90, %v74, 0
  %v266 = vsel %vm90, %v75, 0
  %v269 = vsel %vm90, %v76, 0
  %v272 = vsel %vm90, %v77, 0
  %v275 = vsel %vm90, %v78, 0
  %v278 = vsel %vm90, %v79, 0
  %v281 = vsel %vm90, %v80, 0
  %283 = vmatprep.subr.mxu0 0.0
  %284 = vmatpush1.msra.mxu0 %v81
  %285 = vmatprep.subr.mxu0 0.0
  %286 = vmatpush1.msra.mxu0 %v82
  %287 = vmatprep.subr.mxu0 0.0
  %288 = vmatpush1.msra.mxu0 0.0
  %289 = vmatprep.subr.mxu0 0.0
  %290 = vmatpush1.msra.mxu0 0.0
  %291 = vmatprep.subr.mxu0 0.0
  %292 = vmatpush1.msra.mxu0 0.0
  %293 = vmatprep.subr.mxu0 0.0
  %294 = vmatpush1.msra.mxu0 0.0
  %295 = vmatprep.subr.mxu0 0.0
  %296 = vmatpush1.msra.mxu0 0.0
  %297 = vmatprep.subr.mxu0 0.0
  %298 = vmatpush1.msra.mxu0 0.0
  %299 = vmatprep.subr.mxu0 0.0
  %300 = vmatpush1.msra.mxu0 0.0
  %301 = vmatprep.subr.mxu0 0.0
  %302 = vmatpush1.msra.mxu0 0.0
  %303 = vmatprep.subr.mxu0 0.0
  %304 = vmatpush1.msra.mxu0 0.0
  %305 = vmatprep.subr.mxu0 0.0
  %306 = vmatpush1.msra.mxu0 0.0
  %307 = vmatprep.subr.mxu0 0.0
  %308 = vmatpush1.msra.mxu0 0.0
  %309 = vmatprep.subr.mxu0 0.0
  %310 = vmatpush1.msra.mxu0 0.0
  %311 = vmatprep.subr.mxu0 0.0
  %312 = vmatpush1.msra.mxu0 0.0
  %313 = vmatprep.subr.mxu0 0.0
  %314 = vmatpush1.msra.mxu0 0.0
  %315 = vmatprep.subr.mxu0 0.0
  %316 = vmatpush1.msra.mxu0 0.0
  %317 = vmatprep.subr.mxu0 0.0
  %318 = vmatpush1.msra.mxu0 0.0
  %319 = vmatprep.subr.mxu0 0.0
  %320 = vmatpush1.msra.mxu0 0.0
  %321 = vmatprep.subr.mxu0 0.0
  %322 = vmatpush1.msra.mxu0 0.0
  %323 = vmatprep.subr.mxu0 0.0
  %324 = vmatpush1.msra.mxu0 0.0
  %325 = vmatprep.subr.mxu0 0.0
  %326 = vmatpush1.msra.mxu0 0.0
  %327 = vmatprep.subr.mxu0 0.0
  %328 = vmatpush1.msra.mxu0 0.0
  %329 = vmatprep.subr.mxu0 0.0
  %330 = vmatpush1.msra.mxu0 0.0
  %331 = vmatprep.subr.mxu0 0.0
  %332 = vmatpush1.msra.mxu0 0.0
  %333 = vmatprep.subr.mxu0 0.0
  %334 = vmatpush1.msra.mxu0 0.0
  %335 = vmatprep.subr.mxu0 0.0
  %336 = vmatpush1.msra.mxu0 0.0
  %337 = vmatprep.subr.mxu0 0.0
  %338 = vmatpush1.msra.mxu0 0.0
  %339 = vmatprep.subr.mxu0 0.0
  %340 = vmatpush1.msra.mxu0 0.0
  %341 = vmatprep.subr.mxu0 0.0
  %342 = vmatpush1.msra.mxu0 0.0
  %343 = vmatprep.subr.mxu0 0.0
  %344 = vmatpush1.msra.mxu0 0.0
  %345 = vmatprep.subr.mxu0 0.0
  %346 = vmatpush1.msra.mxu0 0.0
  %347 = vmatprep.mubr.f32.mxu0 0.0
  %348 = vmatmul.mubr.f32.gmra.mrb[0].mxu0 %v92
  %v349 = vpop.f32.mrb[0].mxu0
  %v350 = vadd.f32 %v88, %v349
  %v351 = vpop.f32.mrb[0].mxu0
  %352 = vmatprep.mubr.f32.mxu0 0.0
  %353 = vmatmul.mubr.f32.gmra.mrb[0].mxu0 %v95
  %v354 = vpop.f32.mrb[0].mxu0
  %v355 = vadd.f32 %v88, %v354
  %v356 = vpop.f32.mrb[0].mxu0
  %357 = vmatprep.mubr.f32.mxu0 0.0
  %358 = vmatmul.mubr.f32.gmra.mrb[0].mxu0 %v98
  %v359 = vpop.f32.mrb[0].mxu0
  %v360 = vadd.f32 %v88, %v359
  %v361 = vpop.f32.mrb[0].mxu0
  %362 = vmatprep.mubr.f32.mxu0 0.0
  %363 = vmatmul.mubr.f32.gmra.mrb[0].mxu0 %v101
  %v364 = vpop.f32.mrb[0].mxu0
  %v365 = vadd.f32 %v88, %v364
  %v366 = vpop.f32.mrb[0].mxu0
  %367 = vmatprep.mubr.f32.mxu0 0.0
  %368 = vmatmul.mubr.f32.gmra.mrb[0].mxu0 %v104
  %v369 = vpop.f32.mrb[0].mxu0
  %v370 = vadd.f32 %v88, %v369
  %v371 = vpop.f32.mrb[0].mxu0
  %372 = vmatprep.mubr.f32.mxu0 0.0
  %373 = vmatmul.mubr.f32.gmra.mrb[0].mxu0 %v107
  %v374 = vpop.f32.mrb[0].mxu0
  %v375 = vadd.f32 %v88, %v374
  %v376 = vpop.f32.mrb[0].mxu0
  %377 = vmatprep.mubr.f32.mxu0 0.0
  %378 = vmatmul.mubr.f32.gmra.mrb[0].mxu0 %v110
  %v379 = vpop.f32.mrb[0].mxu0
  %v380 = vadd.f32 %v88, %v379
  %v381 = vpop.f32.mrb[0].mxu0
  %382 = vmatprep.mubr.f32.mxu0 0.0
  %383 = vmatmul.mubr.f32.gmra.mrb[0].mxu0 %v113
  %v384 = vpop.f32.mrb[0].mxu0
  %v385 = vadd.f32 %v88, %v384
  %v386 = vpop.f32.mrb[0].mxu0
  %387 = vmatprep.mubr.f32.mxu0 0.0
  %388 = vmatmul.mubr.f32.gmra.mrb[0].mxu0 %v116
  %v389 = vpop.f32.mrb[0].mxu0
  %v390 = vadd.f32 %v88, %v389
  %v391 = vpop.f32.mrb[0].mxu0
  %392 = vmatprep.mubr.f32.mxu0 0.0
  %393 = vmatmul.mubr.f32.gmra.mrb[0].mxu0 %v119
  %v394 = vpop.f32.mrb[0].mxu0
  %v395 = vadd.f32 %v88, %v394
  %v396 = vpop.f32.mrb[0].mxu0
  %397 = vmatprep.mubr.f32.mxu0 0.0
  %398 = vmatmul.mubr.f32.gmra.mrb[0].mxu0 %v122
  %v399 = vpop.f32.mrb[0].mxu0
  %v400 = vadd.f32 %v88, %v399
  %v401 = vpop.f32.mrb[0].mxu0
  %402 = vmatprep.mubr.f32.mxu0 0.0
  %403 = vmatmul.mubr.f32.gmra.mrb[0].mxu0 %v125
  %v404 = vpop.f32.mrb[0].mxu0
  %v405 = vadd.f32 %v88, %v404
  %v406 = vpop.f32.mrb[0].mxu0
  %407 = vmatprep.mubr.f32.mxu0 0.0
  %408 = vmatmul.mubr.f32.gmra.mrb[0].mxu0 %v128
  %v409 = vpop.f32.mrb[0].mxu0
  %v410 = vadd.f32 %v88, %v409
  %v411 = vpop.f32.mrb[0].mxu0
  %412 = vmatprep.mubr.f32.mxu0 0.0
  %413 = vmatmul.mubr.f32.gmra.mrb[0].mxu0 %v131
  %v414 = vpop.f32.mrb[0].mxu0
  %v415 = vadd.f32 %v88, %v414
  %v416 = vpop.f32.mrb[0].mxu0
  %417 = vmatprep.mubr.f32.mxu0 0.0
  %418 = vmatmul.mubr.f32.gmra.mrb[0].mxu0 %v134
  %v419 = vpop.f32.mrb[0].mxu0
  %v420 = vadd.f32 %v88, %v419
  %v421 = vpop.f32.mrb[0].mxu0
  %422 = vmatprep.mubr.f32.mxu0 0.0
  %423 = vmatmul.mubr.f32.gmra.mrb[0].mxu0 %v137
  %v424 = vpop.f32.mrb[0].mxu0
  %v425 = vadd.f32 %v88, %v424
  %v426 = vpop.f32.mrb[0].mxu0
  %427 = vmatprep.mubr.f32.mxu0 0.0
  %428 = vmatmul.mubr.f32.gmra.mrb[0].mxu0 %v140
  %v429 = vpop.f32.mrb[0].mxu0
  %v430 = vadd.f32 %v88, %v429
  %v431 = vpop.f32.mrb[0].mxu0
  %432 = vmatprep.mubr.f32.mxu0 0.0
  %433 = vmatmul.mubr.f32.gmra.mrb[0].mxu0 %v143
  %v434 = vpop.f32.mrb[0].mxu0
  %v435 = vadd.f32 %v88, %v434
  %v436 = vpop.f32.mrb[0].mxu0
  %437 = vmatprep.mubr.f32.mxu0 0.0
  %438 = vmatmul.mubr.f32.gmra.mrb[0].mxu0 %v146
  %v439 = vpop.f32.mrb[0].mxu0
  %v440 = vadd.f32 %v88, %v439
  %v441 = vpop.f32.mrb[0].mxu0
  %442 = vmatprep.mubr.f32.mxu0 0.0
  %443 = vmatmul.mubr.f32.gmra.mrb[0].mxu0 %v149
  %v444 = vpop.f32.mrb[0].mxu0
  %v445 = vadd.f32 %v88, %v444
  %v446 = vpop.f32.mrb[0].mxu0
  %447 = vmatprep.mubr.f32.mxu0 0.0
  %448 = vmatmul.mubr.f32.gmra.mrb[0].mxu0 %v152
  %v449 = vpop.f32.mrb[0].mxu0
  %v450 = vadd.f32 %v88, %v449
  %v451 = vpop.f32.mrb[0].mxu0
  %452 = vmatprep.mubr.f32.mxu0 0.0
  %453 = vmatmul.mubr.f32.gmra.mrb[0].mxu0 %v155
  %v454 = vpop.f32.mrb[0].mxu0
  %v455 = vadd.f32 %v88, %v454
  %v456 = vpop.f32.mrb[0].mxu0
  %457 = vmatprep.mubr.f32.mxu0 0.0
  %458 = vmatmul.mubr.f32.gmra.mrb[0].mxu0 %v158
  %v459 = vpop.f32.mrb[0].mxu0
  %v460 = vadd.f32 %v88, %v459
  %v461 = vpop.f32.mrb[0].mxu0
  %462 = vmatprep.mubr.f32.mxu0 0.0
  %463 = vmatmul.mubr.f32.gmra.mrb[0].mxu0 %v161
  %v464 = vpop.f32.mrb[0].mxu0
  %v465 = vadd.f32 %v88, %v464
  %v466 = vpop.f32.mrb[0].mxu0
  %467 = vmatprep.mubr.f32.mxu0 0.0
  %468 = vmatmul.mubr.f32.gmra.mrb[0].mxu0 %v164
  %v469 = vpop.f32.mrb[0].mxu0
  %v470 = vadd.f32 %v88, %v469
  %v471 = vpop.f32.mrb[0].mxu0
  %472 = vmatprep.mubr.f32.mxu0 0.0
  %473 = vmatmul.mubr.f32.gmra.mrb[0].mxu0 %v167
  %v474 = vpop.f32.mrb[0].mxu0
  %v475 = vadd.f32 %v88, %v474
  %v476 = vpop.f32.mrb[0].mxu0
  %477 = vmatprep.mubr.f32.mxu0 0.0
  %478 = vmatmul.mubr.f32.gmra.mrb[0].mxu0 %v170
  %v479 = vpop.f32.mrb[0].mxu0
  %v480 = vadd.f32 %v88, %v479
  %v481 = vpop.f32.mrb[0].mxu0
  %482 = vmatprep.mubr.f32.mxu0 0.0
  %483 = vmatmul.mubr.f32.gmra.mrb[0].mxu0 %v173
  %v484 = vpop.f32.mrb[0].mxu0
  %v485 = vadd.f32 %v88, %v484
  %v486 = vpop.f32.mrb[0].mxu0
  %487 = vmatprep.mubr.f32.mxu0 0.0
  %488 = vmatmul.mubr.f32.gmra.mrb[0].mxu0 %v176
  %v489 = vpop.f32.mrb[0].mxu0
  %v490 = vadd.f32 %v88, %v489
  %v491 = vpop.f32.mrb[0].mxu0
  %492 = vmatprep.mubr.f32.mxu0 0.0
  %493 = vmatmul.mubr.f32.gmra.mrb[0].mxu0 %v179
  %v494 = vpop.f32.mrb[0].mxu0
  %v495 = vadd.f32 %v88, %v494
  %v496 = vpop.f32.mrb[0].mxu0
  %497 = vmatprep.mubr.f32.mxu0 0.0
  %498 = vmatmul.mubr.f32.gmra.mrb[0].mxu0 %v182
  %v499 = vpop.f32.mrb[0].mxu0
  %v500 = vadd.f32 %v88, %v499
  %v501 = vpop.f32.mrb[0].mxu0
  %502 = vmatprep.mubr.f32.mxu0 0.0
  %503 = vmatmul.mubr.f32.gmra.mrb[0].mxu0 %v185
  %v504 = vpop.f32.mrb[0].mxu0
  %v505 = vadd.f32 %v88, %v504
  %v506 = vpop.f32.mrb[0].mxu0
  %507 = vmatprep.mubr.f32.mxu0 0.0
  %508 = vmatmul.mubr.f32.gmra.mrb[0].mxu0 %v188
  %v509 = vpop.f32.mrb[0].mxu0
  %v510 = vadd.f32 %v88, %v509
  %v511 = vpop.f32.mrb[0].mxu0
  %512 = vmatprep.mubr.f32.mxu0 0.0
  %513 = vmatmul.mubr.f32.gmra.mrb[0].mxu0 %v191
  %v514 = vpop.f32.mrb[0].mxu0
  %v515 = vadd.f32 %v88, %v514
  %v516 = vpop.f32.mrb[0].mxu0
  %517 = vmatprep.mubr.f32.mxu0 0.0
  %518 = vmatmul.mubr.f32.gmra.mrb[0].mxu0 %v194
  %v519 = vpop.f32.mrb[0].mxu0
  %v520 = vadd.f32 %v88, %v519
  %v521 = vpop.f32.mrb[0].mxu0
  %522 = vmatprep.mubr.f32.mxu0 0.0
  %523 = vmatmul.mubr.f32.gmra.mrb[0].mxu0 %v197
  %v524 = vpop.f32.mrb[0].mxu0
  %v525 = vadd.f32 %v88, %v524
  %v526 = vpop.f32.mrb[0].mxu0
  %527 = vmatprep.mubr.f32.mxu0 0.0
  %528 = vmatmul.mubr.f32.gmra.mrb[0].mxu0 %v200
  %v529 = vpop.f32.mrb[0].mxu0
  %v530 = vadd.f32 %v88, %v529
  %v531 = vpop.f32.mrb[0].mxu0
  %532 = vmatprep.mubr.f32.mxu0 0.0
  %533 = vmatmul.mubr.f32.gmra.mrb[0].mxu0 %v203
  %v534 = vpop.f32.mrb[0].mxu0
  %v535 = vadd.f32 %v88, %v534
  %v536 = vpop.f32.mrb[0].mxu0
  %537 = vmatprep.mubr.f32.mxu0 0.0
  %538 = vmatmul.mubr.f32.gmra.mrb[0].mxu0 %v206
  %v539 = vpop.f32.mrb[0].mxu0
  %v540 = vadd.f32 %v88, %v539
  %v541 = vpop.f32.mrb[0].mxu0
  %542 = vmatprep.mubr.f32.mxu0 0.0
  %543 = vmatmul.mubr.f32.gmra.mrb[0].mxu0 %v209
  %v544 = vpop.f32.mrb[0].mxu0
  %v545 = vadd.f32 %v88, %v544
  %v546 = vpop.f32.mrb[0].mxu0
  %547 = vmatprep.mubr.f32.mxu0 0.0
  %548 = vmatmul.mubr.f32.gmra.mrb[0].mxu0 %v212
  %v549 = vpop.f32.mrb[0].mxu0
  %v550 = vadd.f32 %v88, %v549
  %v551 = vpop.f32.mrb[0].mxu0
  %552 = vmatprep.mubr.f32.mxu0 0.0
  %553 = vmatmul.mubr.f32.gmra.mrb[0].mxu0 %v215
  %v554 = vpop.f32.mrb[0].mxu0
  %v555 = vadd.f32 %v88, %v554
  %v556 = vpop.f32.mrb[0].mxu0
  %557 = vmatprep.mubr.f32.mxu0 0.0
  %558 = vmatmul.mubr.f32.gmra.mrb[0].mxu0 %v218
  %v559 = vpop.f32.mrb[0].mxu0
  %v560 = vadd.f32 %v88, %v559
  %v561 = vpop.f32.mrb[0].mxu0
  %562 = vmatprep.mubr.f32.mxu0 0.0
  %563 = vmatmul.mubr.f32.gmra.mrb[0].mxu0 %v221
  %v564 = vpop.f32.mrb[0].mxu0
  %v565 = vadd.f32 %v88, %v564
  %v566 = vpop.f32.mrb[0].mxu0
  %567 = vmatprep.mubr.f32.mxu0 0.0
  %568 = vmatmul.mubr.f32.gmra.mrb[0].mxu0 %v224
  %v569 = vpop.f32.mrb[0].mxu0
  %v570 = vadd.f32 %v88, %v569
  %v571 = vpop.f32.mrb[0].mxu0
  %572 = vmatprep.mubr.f32.mxu0 0.0
  %573 = vmatmul.mubr.f32.gmra.mrb[0].mxu0 %v227
  %v574 = vpop.f32.mrb[0].mxu0
  %v575 = vadd.f32 %v88, %v574
  %v576 = vpop.f32.mrb[0].mxu0
  %577 = vmatprep.mubr.f32.mxu0 0.0
  %578 = vmatmul.mubr.f32.gmra.mrb[0].mxu0 %v230
  %v579 = vpop.f32.mrb[0].mxu0
  %v580 = vadd.f32 %v88, %v579
  %v581 = vpop.f32.mrb[0].mxu0
  %582 = vmatprep.mubr.f32.mxu0 0.0
  %583 = vmatmul.mubr.f32.gmra.mrb[0].mxu0 %v233
  %v584 = vpop.f32.mrb[0].mxu0
  %v585 = vadd.f32 %v88, %v584
  %v586 = vpop.f32.mrb[0].mxu0
  %587 = vmatprep.mubr.f32.mxu0 0.0
  %588 = vmatmul.mubr.f32.gmra.mrb[0].mxu0 %v236
  %v589 = vpop.f32.mrb[0].mxu0
  %v590 = vadd.f32 %v88, %v589
  %v591 = vpop.f32.mrb[0].mxu0
  %592 = vmatprep.mubr.f32.mxu0 0.0
  %593 = vmatmul.mubr.f32.gmra.mrb[0].mxu0 %v239
  %v594 = vpop.f32.mrb[0].mxu0
  %v595 = vadd.f32 %v88, %v594
  %v596 = vpop.f32.mrb[0].mxu0
  %597 = vmatprep.mubr.f32.mxu0 0.0
  %598 = vmatmul.mubr.f32.gmra.mrb[0].mxu0 %v242
  %v599 = vpop.f32.mrb[0].mxu0
  %v600 = vadd.f32 %v88, %v599
  %v601 = vpop.f32.mrb[0].mxu0
  %602 = vmatprep.mubr.f32.mxu0 0.0
  %603 = vmatmul.mubr.f32.gmra.mrb[0].mxu0 %v245
  %v604 = vpop.f32.mrb[0].mxu0
  %v605 = vadd.f32 %v88, %v604
  %v606 = vpop.f32.mrb[0].mxu0
  %607 = vmatprep.mubr.f32.mxu0 0.0
  %608 = vmatmul.mubr.f32.gmra.mrb[0].mxu0 %v248
  %v609 = vpop.f32.mrb[0].mxu0
  %v610 = vadd.f32 %v88, %v609
  %v611 = vpop.f32.mrb[0].mxu0
  %612 = vmatprep.mubr.f32.mxu0 0.0
  %613 = vmatmul.mubr.f32.gmra.mrb[0].mxu0 %v251
  %v614 = vpop.f32.mrb[0].mxu0
  %v615 = vadd.f32 %v88, %v614
  %v616 = vpop.f32.mrb[0].mxu0
  %617 = vmatprep.mubr.f32.mxu0 0.0
  %618 = vmatmul.mubr.f32.gmra.mrb[0].mxu0 %v254
  %v619 = vpop.f32.mrb[0].mxu0
  %v620 = vadd.f32 %v88, %v619
  %v621 = vpop.f32.mrb[0].mxu0
  %622 = vmatprep.mubr.f32.mxu0 0.0
  %623 = vmatmul.mubr.f32.gmra.mrb[0].mxu0 %v257
  %v624 = vpop.f32.mrb[0].mxu0
  %v625 = vadd.f32 %v88, %v624
  %v626 = vpop.f32.mrb[0].mxu0
  %627 = vmatprep.mubr.f32.mxu0 0.0
  %628 = vmatmul.mubr.f32.gmra.mrb[0].mxu0 %v260
  %v629 = vpop.f32.mrb[0].mxu0
  %v630 = vadd.f32 %v88, %v629
  %v631 = vpop.f32.mrb[0].mxu0
  %632 = vmatprep.mubr.f32.mxu0 0.0
  %633 = vmatmul.mubr.f32.gmra.mrb[0].mxu0 %v263
  %v634 = vpop.f32.mrb[0].mxu0
  %v635 = vadd.f32 %v88, %v634
  %v636 = vpop.f32.mrb[0].mxu0
  %637 = vmatprep.mubr.f32.mxu0 0.0
  %638 = vmatmul.mubr.f32.gmra.mrb[0].mxu0 %v266
  %v639 = vpop.f32.mrb[0].mxu0
  %v640 = vadd.f32 %v88, %v639
  %v641 = vpop.f32.mrb[0].mxu0
  %642 = vmatprep.mubr.f32.mxu0 0.0
  %643 = vmatmul.mubr.f32.gmra.mrb[0].mxu0 %v269
  %v644 = vpop.f32.mrb[0].mxu0
  %v645 = vadd.f32 %v88, %v644
  %v646 = vpop.f32.mrb[0].mxu0
  %647 = vmatprep.mubr.f32.mxu0 0.0
  %648 = vmatmul.mubr.f32.gmra.mrb[0].mxu0 %v272
  %v649 = vpop.f32.mrb[0].mxu0
  %v650 = vadd.f32 %v88, %v649
  %v651 = vpop.f32.mrb[0].mxu0
  %652 = vmatprep.mubr.f32.mxu0 0.0
  %653 = vmatmul.mubr.f32.gmra.mrb[0].mxu0 %v275
  %v654 = vpop.f32.mrb[0].mxu0
  %v655 = vadd.f32 %v88, %v654
  %v656 = vpop.f32.mrb[0].mxu0
  %657 = vmatprep.mubr.f32.mxu0 0.0
  %658 = vmatmul.mubr.f32.gmra.mrb[0].mxu0 %v278
  %v659 = vpop.f32.mrb[0].mxu0
  %v660 = vadd.f32 %v88, %v659
  %v661 = vpop.f32.mrb[0].mxu0
  %662 = vmatprep.mubr.f32.mxu0 0.0
  %663 = vmatmul.mubr.f32.gmra.mrb[0].mxu0 %v281
  %v664 = vpop.f32.mrb[0].mxu0
  %v665 = vadd.f32 %v88, %v664
  %v666 = vpop.f32.mrb[0].mxu0
  %667 = vdwg.mxu0
  %v668 = vld [vmem:[%s1] sm:$0xff]
  %v669 = vld [vmem:[%s1 + $0x8] sm:$0xff]
  %v670 = vld [vmem:[%s1 + $0x10] sm:$0xff]
  %v671 = vld [vmem:[%s1 + $0x18] sm:$0xff]
  %v672 = vld [vmem:[%s1 + $0x20] sm:$0xff]
  %v673 = vld [vmem:[%s1 + $0x28] sm:$0xff]
  %v674 = vld [vmem:[%s1 + $0x30] sm:$0xff]
  %v675 = vld [vmem:[%s1 + $0x38] sm:$0xff]
  %v676 = vld [vmem:[%s1 + $0x40] sm:$0xff]
  %v677 = vld [vmem:[%s1 + $0x48] sm:$0xff]
  %v678 = vld [vmem:[%s1 + $0x50] sm:$0xff]
  %v679 = vld [vmem:[%s1 + $0x58] sm:$0xff]
  %v680 = vld [vmem:[%s1 + $0x60] sm:$0xff]
  %v681 = vld [vmem:[%s1 + $0x68] sm:$0xff]
  %v682 = vld [vmem:[%s1 + $0x70] sm:$0xff]
  %v683 = vld [vmem:[%s1 + $0x78] sm:$0xff]
  %v684 = vld [vmem:[%s1 + $0x80] sm:$0xff]
  %v685 = vld [vmem:[%s1 + $0x88] sm:$0xff]
  %v686 = vld [vmem:[%s1 + $0x90] sm:$0xff]
  %v687 = vld [vmem:[%s1 + $0x98] sm:$0xff]
  %v688 = vld [vmem:[%s1 + $0xa0] sm:$0xff]
  %v689 = vld [vmem:[%s1 + $0xa8] sm:$0xff]
  %v690 = vld [vmem:[%s1 + $0xb0] sm:$0xff]
  %v691 = vld [vmem:[%s1 + $0xb8] sm:$0xff]
  %v692 = vld [vmem:[%s1 + $0xc0] sm:$0xff]
  %v693 = vld [vmem:[%s1 + $0xc8] sm:$0xff]
  %v694 = vld [vmem:[%s1 + $0xd0] sm:$0xff]
  %v695 = vld [vmem:[%s1 + $0xd8] sm:$0xff]
  %v696 = vld [vmem:[%s1 + $0xe0] sm:$0xff]
  %v697 = vld [vmem:[%s1 + $0xe8] sm:$0xff]
  %v698 = vld [vmem:[%s1 + $0xf0] sm:$0xff]
  %v699 = vld [vmem:[%s1 + $0xf8] sm:$0xff]
  %v700 = vld [vmem:[%s1 + $0x100] sm:$0xff]
  %v701 = vld [vmem:[%s1 + $0x108] sm:$0xff]
  %v702 = vld [vmem:[%s1 + $0x110] sm:$0xff]
  %v703 = vld [vmem:[%s1 + $0x118] sm:$0xff]
  %v704 = vld [vmem:[%s1 + $0x120] sm:$0xff]
  %v705 = vld [vmem:[%s1 + $0x128] sm:$0xff]
  %v706 = vld [vmem:[%s1 + $0x130] sm:$0xff]
  %v707 = vld [vmem:[%s1 + $0x138] sm:$0xff]
  %v708 = vld [vmem:[%s1 + $0x140] sm:$0xff]
  %v709 = vld [vmem:[%s1 + $0x148] sm:$0xff]
  %v710 = vld [vmem:[%s1 + $0x150] sm:$0xff]
  %v711 = vld [vmem:[%s1 + $0x158] sm:$0xff]
  %v712 = vld [vmem:[%s1 + $0x160] sm:$0xff]
  %v713 = vld [vmem:[%s1 + $0x168] sm:$0xff]
  %v714 = vld [vmem:[%s1 + $0x170] sm:$0xff]
  %v715 = vld [vmem:[%s1 + $0x178] sm:$0xff]
  %v716 = vld [vmem:[%s1 + $0x180] sm:$0xff]
  %v717 = vld [vmem:[%s1 + $0x188] sm:$0xff]
  %v718 = vld [vmem:[%s1 + $0x190] sm:$0xff]
  %v719 = vld [vmem:[%s1 + $0x198] sm:$0xff]
  %v720 = vld [vmem:[%s1 + $0x1a0] sm:$0xff]
  %v721 = vld [vmem:[%s1 + $0x1a8] sm:$0xff]
  %v722 = vld [vmem:[%s1 + $0x1b0] sm:$0xff]
  %v723 = vld [vmem:[%s1 + $0x1b8] sm:$0xff]
  %v724 = vld [vmem:[%s1 + $0x1c0] sm:$0xff]
  %v725 = vld [vmem:[%s1 + $0x1c8] sm:$0xff]
  %v726 = vld [vmem:[%s1 + $0x1d0] sm:$0xff]
  %v727 = vld [vmem:[%s1 + $0x1d8] sm:$0xff]
  %v728 = vld [vmem:[%s1 + $0x1e0] sm:$0xff]
  %v729 = vld [vmem:[%s1 + $0x1e8] sm:$0xff]
  %v730 = vld [vmem:[%s1 + $0x1f0] sm:$0xff]
  %v731 = vld [vmem:[%s1 + $0x1f8] sm:$0xff]
  %v732 = vadd.f32 %v350, %v668
  %v733 = vadd.f32 %v355, %v669
  %v734 = vadd.f32 %v360, %v670
  %v735 = vadd.f32 %v365, %v671
  %v736 = vadd.f32 %v370, %v672
  %v737 = vadd.f32 %v375, %v673
  %v738 = vadd.f32 %v380, %v674
  %v739 = vadd.f32 %v385, %v675
  %v740 = vadd.f32 %v390, %v676
  %v741 = vadd.f32 %v395, %v677
  %v742 = vadd.f32 %v400, %v678
  %v743 = vadd.f32 %v405, %v679
  %v744 = vadd.f32 %v410, %v680
  %v745 = vadd.f32 %v415, %v681
  %v746 = vadd.f32 %v420, %v682
  %v747 = vadd.f32 %v425, %v683
  %v748 = vadd.f32 %v430, %v684
  %v749 = vadd.f32 %v435, %v685
  %v750 = vadd.f32 %v440, %v686
  %v751 = vadd.f32 %v445, %v687
  %v752 = vadd.f32 %v450, %v688
  %v753 = vadd.f32 %v455, %v689
  %v754 = vadd.f32 %v460, %v690
  %v755 = vadd.f32 %v465, %v691
  %v756 = vadd.f32 %v470, %v692
  %v757 = vadd.f32 %v475, %v693
  %v758 = vadd.f32 %v480, %v694
  %v759 = vadd.f32 %v485, %v695
  %v760 = vadd.f32 %v490, %v696
  %v761 = vadd.f32 %v495, %v697
  %v762 = vadd.f32 %v500, %v698
  %v763 = vadd.f32 %v505, %v699
  %v764 = vadd.f32 %v510, %v700
  %v765 = vadd.f32 %v515, %v701
  %v766 = vadd.f32 %v520, %v702
  %v767 = vadd.f32 %v525, %v703
  %v768 = vadd.f32 %v530, %v704
  %v769 = vadd.f32 %v535, %v705
  %v770 = vadd.f32 %v540, %v706
  %v771 = vadd.f32 %v545, %v707
  %v772 = vadd.f32 %v550, %v708
  %v773 = vadd.f32 %v555, %v709
  %v774 = vadd.f32 %v560, %v710
  %v775 = vadd.f32 %v565, %v711
  %v776 = vadd.f32 %v570, %v712
  %v777 = vadd.f32 %v575, %v713
  %v778 = vadd.f32 %v580, %v714
  %v779 = vadd.f32 %v585, %v715
  %v780 = vadd.f32 %v590, %v716
  %v781 = vadd.f32 %v595, %v717
  %v782 = vadd.f32 %v600, %v718
  %v783 = vadd.f32 %v605, %v719
  %v784 = vadd.f32 %v610, %v720
  %v785 = vadd.f32 %v615, %v721
  %v786 = vadd.f32 %v620, %v722
  %v787 = vadd.f32 %v625, %v723
  %v788 = vadd.f32 %v630, %v724
  %v789 = vadd.f32 %v635, %v725
  %v790 = vadd.f32 %v640, %v726
  %v791 = vadd.f32 %v645, %v727
  %v792 = vadd.f32 %v650, %v728
  %v793 = vadd.f32 %v655, %v729
  %v794 = vadd.f32 %v660, %v730
  %v795 = vadd.f32 %v665, %v731
  %796 = vst.msk [vmem:[%s4] sm:$0xff] %vm90, %v732
  %797 = vst.msk [vmem:[%s4 + $0x8] sm:$0xff] %vm90, %v733
  %798 = vst.msk [vmem:[%s4 + $0x10] sm:$0xff] %vm90, %v734
  %799 = vst.msk [vmem:[%s4 + $0x18] sm:$0xff] %vm90, %v735
  %800 = vst.msk [vmem:[%s4 + $0x20] sm:$0xff] %vm90, %v736
  %801 = vst.msk [vmem:[%s4 + $0x28] sm:$0xff] %vm90, %v737
  %802 = vst.msk [vmem:[%s4 + $0x30] sm:$0xff] %vm90, %v738
  %803 = vst.msk [vmem:[%s4 + $0x38] sm:$0xff] %vm90, %v739
  %804 = vst.msk [vmem:[%s4 + $0x40] sm:$0xff] %vm90, %v740
  %805 = vst.msk [vmem:[%s4 + $0x48] sm:$0xff] %vm90, %v741
  %806 = vst.msk [vmem:[%s4 + $0x50] sm:$0xff] %vm90, %v742
  %807 = vst.msk [vmem:[%s4 + $0x58] sm:$0xff] %vm90, %v743
  %808 = vst.msk [vmem:[%s4 + $0x60] sm:$0xff] %vm90, %v744
  %809 = vst.msk [vmem:[%s4 + $0x68] sm:$0xff] %vm90, %v745
  %810 = vst.msk [vmem:[%s4 + $0x70] sm:$0xff] %vm90, %v746
  %811 = vst.msk [vmem:[%s4 + $0x78] sm:$0xff] %vm90, %v747
  %812 = vst.msk [vmem:[%s4 + $0x80] sm:$0xff] %vm90, %v748
  %813 = vst.msk [vmem:[%s4 + $0x88] sm:$0xff] %vm90, %v749
  %814 = vst.msk [vmem:[%s4 + $0x90] sm:$0xff] %vm90, %v750
  %815 = vst.msk [vmem:[%s4 + $0x98] sm:$0xff] %vm90, %v751
  %816 = vst.msk [vmem:[%s4 + $0xa0] sm:$0xff] %vm90, %v752
  %817 = vst.msk [vmem:[%s4 + $0xa8] sm:$0xff] %vm90, %v753
  %818 = vst.msk [vmem:[%s4 + $0xb0] sm:$0xff] %vm90, %v754
  %819 = vst.msk [vmem:[%s4 + $0xb8] sm:$0xff] %vm90, %v755
  %820 = vst.msk [vmem:[%s4 + $0xc0] sm:$0xff] %vm90, %v756
  %821 = vst.msk [vmem:[%s4 + $0xc8] sm:$0xff] %vm90, %v757
  %822 = vst.msk [vmem:[%s4 + $0xd0] sm:$0xff] %vm90, %v758
  %823 = vst.msk [vmem:[%s4 + $0xd8] sm:$0xff] %vm90, %v759
  %824 = vst.msk [vmem:[%s4 + $0xe0] sm:$0xff] %vm90, %v760
  %825 = vst.msk [vmem:[%s4 + $0xe8] sm:$0xff] %vm90, %v761
  %826 = vst.msk [vmem:[%s4 + $0xf0] sm:$0xff] %vm90, %v762
  %827 = vst.msk [vmem:[%s4 + $0xf8] sm:$0xff] %vm90, %v763
  %828 = vst.msk [vmem:[%s4 + $0x100] sm:$0xff] %vm90, %v764
  %829 = vst.msk [vmem:[%s4 + $0x108] sm:$0xff] %vm90, %v765
  %830 = vst.msk [vmem:[%s4 + $0x110] sm:$0xff] %vm90, %v766
  %831 = vst.msk [vmem:[%s4 + $0x118] sm:$0xff] %vm90, %v767
  %832 = vst.msk [vmem:[%s4 + $0x120] sm:$0xff] %vm90, %v768
  %833 = vst.msk [vmem:[%s4 + $0x128] sm:$0xff] %vm90, %v769
  %834 = vst.msk [vmem:[%s4 + $0x130] sm:$0xff] %vm90, %v770
  %835 = vst.msk [vmem:[%s4 + $0x138] sm:$0xff] %vm90, %v771
  %836 = vst.msk [vmem:[%s4 + $0x140] sm:$0xff] %vm90, %v772
  %837 = vst.msk [vmem:[%s4 + $0x148] sm:$0xff] %vm90, %v773
  %838 = vst.msk [vmem:[%s4 + $0x150] sm:$0xff] %vm90, %v774
  %839 = vst.msk [vmem:[%s4 + $0x158] sm:$0xff] %vm90, %v775
  %840 = vst.msk [vmem:[%s4 + $0x160] sm:$0xff] %vm90, %v776
  %841 = vst.msk [vmem:[%s4 + $0x168] sm:$0xff] %vm90, %v777
  %842 = vst.msk [vmem:[%s4 + $0x170] sm:$0xff] %vm90, %v778
  %843 = vst.msk [vmem:[%s4 + $0x178] sm:$0xff] %vm90, %v779
  %844 = vst.msk [vmem:[%s4 + $0x180] sm:$0xff] %vm90, %v780
  %845 = vst.msk [vmem:[%s4 + $0x188] sm:$0xff] %vm90, %v781
  %846 = vst.msk [vmem:[%s4 + $0x190] sm:$0xff] %vm90, %v782
  %847 = vst.msk [vmem:[%s4 + $0x198] sm:$0xff] %vm90, %v783
  %848 = vst.msk [vmem:[%s4 + $0x1a0] sm:$0xff] %vm90, %v784
  %849 = vst.msk [vmem:[%s4 + $0x1a8] sm:$0xff] %vm90, %v785
  %850 = vst.msk [vmem:[%s4 + $0x1b0] sm:$0xff] %vm90, %v786
  %851 = vst.msk [vmem:[%s4 + $0x1b8] sm:$0xff] %vm90, %v787
  %852 = vst.msk [vmem:[%s4 + $0x1c0] sm:$0xff] %vm90, %v788
  %853 = vst.msk [vmem:[%s4 + $0x1c8] sm:$0xff] %vm90, %v789
  %854 = vst.msk [vmem:[%s4 + $0x1d0] sm:$0xff] %vm90, %v790
  %855 = vst.msk [vmem:[%s4 + $0x1d8] sm:$0xff] %vm90, %v791
  %856 = vst.msk [vmem:[%s4 + $0x1e0] sm:$0xff] %vm90, %v792
  %857 = vst.msk [vmem:[%s4 + $0x1e8] sm:$0xff] %vm90, %v793
  %858 = vst.msk [vmem:[%s4 + $0x1f0] sm:$0xff] %vm90, %v794
  %859 = vst.msk [vmem:[%s4 + $0x1f8] sm:$0xff] %vm90, %v795
  // Predicated region
  $region18: #{fno2d_forward.14} parent=0 // pred_check
    _
  $region19: #{fno2d_forward.14} parent=0 // pred_check_branch
    %861 = sbr.rel (0) target = $region21
  $region20: #{fno2d_forward.14} parent=0 // pred_region
    _
  $region21: #{fno2d_forward.14} parent=0 // pred_fallthru
    _
  // Predicated region
  $region22: #{fno2d_forward.14} parent=0 // pred_check
    _
  $region23: #{fno2d_forward.14} parent=0 // pred_check_branch
    %863 = sbr.rel (0) target = $region25
  $region24: #{fno2d_forward.14} parent=0 // pred_region
    _
  $region25: #{fno2d_forward.14} parent=0 // pred_fallthru
    _

// kernel: fno2d_forward.15
$region0: #{fno2d_forward.15}
  #allocation0 [shape = 'u32[]', space=smem, size = 0x4, offset = 0x4, fixed_abs, tag = 'smem constant byte address 0x4 - core index']
  #allocation1 [shape = 'u32[144,128]{1,0:T(1,128)}', space=vmem, size = 0x12000, scoped, tag = 'internal scratch']
  #allocation2 [shape = 'f32[1,1]{1,0:T(1,128)S(1)}', space=vmem, size = 0x200, scoped, tag = 'scoped memory for fno2d_forward.15']
  %s0 = inlined_call_operand.vmem [shape: f32[512,16], index: 0, kind: input, shape index: {}]
  %s1 = inlined_call_operand.vmem [shape: f32[16,64], index: 1, kind: input, shape index: {}]
  %s2 = inlined_call_operand.vmem [shape: f32[1,64], index: 2, kind: input, shape index: {}]
  %s3 = inlined_call_operand.vmem [shape: f32[64,1], index: 3, kind: input, shape index: {}]
  %s4 = inlined_call_operand.<no memory space> [shape: f32[1,1], index: 4, kind: input, shape index: {}]
  %s5 = inlined_call_operand.vmem [shape: f32[512,1], index: 5, kind: output, shape index: {}]
  %s6 = sld [smem:[#allocation0]]
  $region30: #{fno2d_forward.15} parent=0
    _
  %s8 = ssub.s32 1, %s6
  %s9 = scalar_select 0, %s8, %s6
  %v10 = vstv %s4
  %11 = vst [vmem:[#allocation2] sm:$0x1] %v10
  // Predicated region
  $region2: #{fno2d_forward.15} parent=0 // pred_check
    _
  $region3: #{fno2d_forward.15} parent=0 // pred_check_branch
    %13 = sbr.rel (0) target = $region5
  $region4: #{fno2d_forward.15} parent=0 // pred_region
    _
  $region5: #{fno2d_forward.15} parent=0 // pred_fallthru
    _
  // Predicated region
  $region6: #{fno2d_forward.15} parent=0 // pred_check
    _
  $region7: #{fno2d_forward.15} parent=0 // pred_check_branch
    %15 = sbr.rel (0) target = $region9
  $region8: #{fno2d_forward.15} parent=0 // pred_region
    _
  $region9: #{fno2d_forward.15} parent=0 // pred_fallthru
    _
  // Predicated region
  $region10: #{fno2d_forward.15} parent=0 // pred_check
    _
  $region11: #{fno2d_forward.15} parent=0 // pred_check_branch
    %17 = sbr.rel (0) target = $region13
  $region12: #{fno2d_forward.15} parent=0 // pred_region
    _
  $region13: #{fno2d_forward.15} parent=0 // pred_fallthru
    _
  // Predicated region
  $region14: #{fno2d_forward.15} parent=0 // pred_check
    _
  $region15: #{fno2d_forward.15} parent=0 // pred_check_branch
    %19 = sbr.rel (0) target = $region17
  $region16: #{fno2d_forward.15} parent=0 // pred_region
    _
  $region17: #{fno2d_forward.15} parent=0 // pred_fallthru
    _
  // Predicated region
  $region18: #{fno2d_forward.15} parent=0 // pred_check
    _
  $region19: #{fno2d_forward.15} parent=0 // pred_check_branch
    %21 = sbr.rel (0) target = $region21
  $region20: #{fno2d_forward.15} parent=0 // pred_region
    _
  $region21: #{fno2d_forward.15} parent=0 // pred_fallthru
    _
  %v22 = vld [vmem:[%s0] sm:$0xff]
  %v23 = vld [vmem:[%s0 + $0x8] sm:$0xff]
  %v24 = vld [vmem:[%s0 + $0x10] sm:$0xff]
  %v25 = vld [vmem:[%s0 + $0x18] sm:$0xff]
  %v26 = vld [vmem:[%s0 + $0x20] sm:$0xff]
  %v27 = vld [vmem:[%s0 + $0x28] sm:$0xff]
  %v28 = vld [vmem:[%s0 + $0x30] sm:$0xff]
  %v29 = vld [vmem:[%s0 + $0x38] sm:$0xff]
  %v30 = vld [vmem:[%s0 + $0x40] sm:$0xff]
  %v31 = vld [vmem:[%s0 + $0x48] sm:$0xff]
  %v32 = vld [vmem:[%s0 + $0x50] sm:$0xff]
  %v33 = vld [vmem:[%s0 + $0x58] sm:$0xff]
  %v34 = vld [vmem:[%s0 + $0x60] sm:$0xff]
  %v35 = vld [vmem:[%s0 + $0x68] sm:$0xff]
  %v36 = vld [vmem:[%s0 + $0x70] sm:$0xff]
  %v37 = vld [vmem:[%s0 + $0x78] sm:$0xff]
  %v38 = vld [vmem:[%s0 + $0x80] sm:$0xff]
  %v39 = vld [vmem:[%s0 + $0x88] sm:$0xff]
  %v40 = vld [vmem:[%s0 + $0x90] sm:$0xff]
  %v41 = vld [vmem:[%s0 + $0x98] sm:$0xff]
  %v42 = vld [vmem:[%s0 + $0xa0] sm:$0xff]
  %v43 = vld [vmem:[%s0 + $0xa8] sm:$0xff]
  %v44 = vld [vmem:[%s0 + $0xb0] sm:$0xff]
  %v45 = vld [vmem:[%s0 + $0xb8] sm:$0xff]
  %v46 = vld [vmem:[%s0 + $0xc0] sm:$0xff]
  %v47 = vld [vmem:[%s0 + $0xc8] sm:$0xff]
  %v48 = vld [vmem:[%s0 + $0xd0] sm:$0xff]
  %v49 = vld [vmem:[%s0 + $0xd8] sm:$0xff]
  %v50 = vld [vmem:[%s0 + $0xe0] sm:$0xff]
  %v51 = vld [vmem:[%s0 + $0xe8] sm:$0xff]
  %v52 = vld [vmem:[%s0 + $0xf0] sm:$0xff]
  %v53 = vld [vmem:[%s0 + $0xf8] sm:$0xff]
  %v54 = vld [vmem:[%s0 + $0x100] sm:$0xff]
  %v55 = vld [vmem:[%s0 + $0x108] sm:$0xff]
  %v56 = vld [vmem:[%s0 + $0x110] sm:$0xff]
  %v57 = vld [vmem:[%s0 + $0x118] sm:$0xff]
  %v58 = vld [vmem:[%s0 + $0x120] sm:$0xff]
  %v59 = vld [vmem:[%s0 + $0x128] sm:$0xff]
  %v60 = vld [vmem:[%s0 + $0x130] sm:$0xff]
  %v61 = vld [vmem:[%s0 + $0x138] sm:$0xff]
  %v62 = vld [vmem:[%s0 + $0x140] sm:$0xff]
  %v63 = vld [vmem:[%s0 + $0x148] sm:$0xff]
  %v64 = vld [vmem:[%s0 + $0x150] sm:$0xff]
  %v65 = vld [vmem:[%s0 + $0x158] sm:$0xff]
  %v66 = vld [vmem:[%s0 + $0x160] sm:$0xff]
  %v67 = vld [vmem:[%s0 + $0x168] sm:$0xff]
  %v68 = vld [vmem:[%s0 + $0x170] sm:$0xff]
  %v69 = vld [vmem:[%s0 + $0x178] sm:$0xff]
  %v70 = vld [vmem:[%s0 + $0x180] sm:$0xff]
  %v71 = vld [vmem:[%s0 + $0x188] sm:$0xff]
  %v72 = vld [vmem:[%s0 + $0x190] sm:$0xff]
  %v73 = vld [vmem:[%s0 + $0x198] sm:$0xff]
  %v74 = vld [vmem:[%s0 + $0x1a0] sm:$0xff]
  %v75 = vld [vmem:[%s0 + $0x1a8] sm:$0xff]
  %v76 = vld [vmem:[%s0 + $0x1b0] sm:$0xff]
  %v77 = vld [vmem:[%s0 + $0x1b8] sm:$0xff]
  %v78 = vld [vmem:[%s0 + $0x1c0] sm:$0xff]
  %v79 = vld [vmem:[%s0 + $0x1c8] sm:$0xff]
  %v80 = vld [vmem:[%s0 + $0x1d0] sm:$0xff]
  %v81 = vld [vmem:[%s0 + $0x1d8] sm:$0xff]
  %v82 = vld [vmem:[%s0 + $0x1e0] sm:$0xff]
  %v83 = vld [vmem:[%s0 + $0x1e8] sm:$0xff]
  %v84 = vld [vmem:[%s0 + $0x1f0] sm:$0xff]
  %v85 = vld [vmem:[%s0 + $0x1f8] sm:$0xff]
  %v86 = vld [vmem:[%s1] sm:$0xff]
  %v87 = vld [vmem:[%s1 + $0x8] sm:$0xff]
  %v88 = vld [vmem:[%s2] sm:$0x1]
  %v90 = vlaneseq
  %v91 = vshrl.u32 %v90, 7
  %v92 = vsub.s32 0, %v91
  %v93 = vrot.slane %v88, %v92
  %vm95 = vcmask 130048
  %v97 = vsel %vm95, %v22, 0
  %v100 = vsel %vm95, %v23, 0
  %v103 = vsel %vm95, %v24, 0
  %v106 = vsel %vm95, %v25, 0
  %v109 = vsel %vm95, %v26, 0
  %v112 = vsel %vm95, %v27, 0
  %v115 = vsel %vm95, %v28, 0
  %v118 = vsel %vm95, %v29, 0
  %v121 = vsel %vm95, %v30, 0
  %v124 = vsel %vm95, %v31, 0
  %v127 = vsel %vm95, %v32, 0
  %v130 = vsel %vm95, %v33, 0
  %v133 = vsel %vm95, %v34, 0
  %v136 = vsel %vm95, %v35, 0
  %v139 = vsel %vm95, %v36, 0
  %v142 = vsel %vm95, %v37, 0
  %v145 = vsel %vm95, %v38, 0
  %v148 = vsel %vm95, %v39, 0
  %v151 = vsel %vm95, %v40, 0
  %v154 = vsel %vm95, %v41, 0
  %v157 = vsel %vm95, %v42, 0
  %v160 = vsel %vm95, %v43, 0
  %v163 = vsel %vm95, %v44, 0
  %v166 = vsel %vm95, %v45, 0
  %v169 = vsel %vm95, %v46, 0
  %v172 = vsel %vm95, %v47, 0
  %v175 = vsel %vm95, %v48, 0
  %v178 = vsel %vm95, %v49, 0
  %v181 = vsel %vm95, %v50, 0
  %v184 = vsel %vm95, %v51, 0
  %v187 = vsel %vm95, %v52, 0
  %v190 = vsel %vm95, %v53, 0
  %v193 = vsel %vm95, %v54, 0
  %v196 = vsel %vm95, %v55, 0
  %v199 = vsel %vm95, %v56, 0
  %v202 = vsel %vm95, %v57, 0
  %v205 = vsel %vm95, %v58, 0
  %v208 = vsel %vm95, %v59, 0
  %v211 = vsel %vm95, %v60, 0
  %v214 = vsel %vm95, %v61, 0
  %v217 = vsel %vm95, %v62, 0
  %v220 = vsel %vm95, %v63, 0
  %v223 = vsel %vm95, %v64, 0
  %v226 = vsel %vm95, %v65, 0
  %v229 = vsel %vm95, %v66, 0
  %v232 = vsel %vm95, %v67, 0
  %v235 = vsel %vm95, %v68, 0
  %v238 = vsel %vm95, %v69, 0
  %v241 = vsel %vm95, %v70, 0
  %v244 = vsel %vm95, %v71, 0
  %v247 = vsel %vm95, %v72, 0
  %v250 = vsel %vm95, %v73, 0
  %v253 = vsel %vm95, %v74, 0
  %v256 = vsel %vm95, %v75, 0
  %v259 = vsel %vm95, %v76, 0
  %v262 = vsel %vm95, %v77, 0
  %v265 = vsel %vm95, %v78, 0
  %v268 = vsel %vm95, %v79, 0
  %v271 = vsel %vm95, %v80, 0
  %v274 = vsel %vm95, %v81, 0
  %v277 = vsel %vm95, %v82, 0
  %v280 = vsel %vm95, %v83, 0
  %v283 = vsel %vm95, %v84, 0
  %v286 = vsel %vm95, %v85, 0
  %288 = vmatprep.subr.mxu0 0.0
  %289 = vmatpush1.msra.mxu0 %v86
  %290 = vmatprep.subr.mxu0 0.0
  %291 = vmatpush1.msra.mxu0 %v87
  %292 = vmatprep.subr.mxu0 0.0
  %293 = vmatpush1.msra.mxu0 0.0
  %294 = vmatprep.subr.mxu0 0.0
  %295 = vmatpush1.msra.mxu0 0.0
  %296 = vmatprep.subr.mxu0 0.0
  %297 = vmatpush1.msra.mxu0 0.0
  %298 = vmatprep.subr.mxu0 0.0
  %299 = vmatpush1.msra.mxu0 0.0
  %300 = vmatprep.subr.mxu0 0.0
  %301 = vmatpush1.msra.mxu0 0.0
  %302 = vmatprep.subr.mxu0 0.0
  %303 = vmatpush1.msra.mxu0 0.0
  %304 = vmatprep.subr.mxu0 0.0
  %305 = vmatpush1.msra.mxu0 0.0
  %306 = vmatprep.subr.mxu0 0.0
  %307 = vmatpush1.msra.mxu0 0.0
  %308 = vmatprep.subr.mxu0 0.0
  %309 = vmatpush1.msra.mxu0 0.0
  %310 = vmatprep.subr.mxu0 0.0
  %311 = vmatpush1.msra.mxu0 0.0
  %312 = vmatprep.subr.mxu0 0.0
  %313 = vmatpush1.msra.mxu0 0.0
  %314 = vmatprep.subr.mxu0 0.0
  %315 = vmatpush1.msra.mxu0 0.0
  %316 = vmatprep.subr.mxu0 0.0
  %317 = vmatpush1.msra.mxu0 0.0
  %318 = vmatprep.subr.mxu0 0.0
  %319 = vmatpush1.msra.mxu0 0.0
  %320 = vmatprep.subr.mxu0 0.0
  %321 = vmatpush1.msra.mxu0 0.0
  %322 = vmatprep.subr.mxu0 0.0
  %323 = vmatpush1.msra.mxu0 0.0
  %324 = vmatprep.subr.mxu0 0.0
  %325 = vmatpush1.msra.mxu0 0.0
  %326 = vmatprep.subr.mxu0 0.0
  %327 = vmatpush1.msra.mxu0 0.0
  %328 = vmatprep.subr.mxu0 0.0
  %329 = vmatpush1.msra.mxu0 0.0
  %330 = vmatprep.subr.mxu0 0.0
  %331 = vmatpush1.msra.mxu0 0.0
  %332 = vmatprep.subr.mxu0 0.0
  %333 = vmatpush1.msra.mxu0 0.0
  %334 = vmatprep.subr.mxu0 0.0
  %335 = vmatpush1.msra.mxu0 0.0
  %336 = vmatprep.subr.mxu0 0.0
  %337 = vmatpush1.msra.mxu0 0.0
  %338 = vmatprep.subr.mxu0 0.0
  %339 = vmatpush1.msra.mxu0 0.0
  %340 = vmatprep.subr.mxu0 0.0
  %341 = vmatpush1.msra.mxu0 0.0
  %342 = vmatprep.subr.mxu0 0.0
  %343 = vmatpush1.msra.mxu0 0.0
  %344 = vmatprep.subr.mxu0 0.0
  %345 = vmatpush1.msra.mxu0 0.0
  %346 = vmatprep.subr.mxu0 0.0
  %347 = vmatpush1.msra.mxu0 0.0
  %348 = vmatprep.subr.mxu0 0.0
  %349 = vmatpush1.msra.mxu0 0.0
  %350 = vmatprep.subr.mxu0 0.0
  %351 = vmatpush1.msra.mxu0 0.0
  %352 = vmatprep.mubr.f32.mxu0 0.0
  %353 = vmatmul.mubr.f32.gmra.mrb[0].mxu0 %v97
  %v354 = vpop.f32.mrb[0].mxu0
  %v355 = vadd.f32 %v93, %v354
  %v356 = vpop.f32.mrb[0].mxu0
  %357 = vmatprep.mubr.f32.mxu0 0.0
  %358 = vmatmul.mubr.f32.gmra.mrb[0].mxu0 %v100
  %v359 = vpop.f32.mrb[0].mxu0
  %v360 = vadd.f32 %v93, %v359
  %v361 = vpop.f32.mrb[0].mxu0
  %362 = vmatprep.mubr.f32.mxu0 0.0
  %363 = vmatmul.mubr.f32.gmra.mrb[0].mxu0 %v103
  %v364 = vpop.f32.mrb[0].mxu0
  %v365 = vadd.f32 %v93, %v364
  %v366 = vpop.f32.mrb[0].mxu0
  %367 = vmatprep.mubr.f32.mxu0 0.0
  %368 = vmatmul.mubr.f32.gmra.mrb[0].mxu0 %v106
  %v369 = vpop.f32.mrb[0].mxu0
  %v370 = vadd.f32 %v93, %v369
  %v371 = vpop.f32.mrb[0].mxu0
  %372 = vmatprep.mubr.f32.mxu0 0.0
  %373 = vmatmul.mubr.f32.gmra.mrb[0].mxu0 %v109
  %v374 = vpop.f32.mrb[0].mxu0
  %v375 = vadd.f32 %v93, %v374
  %v376 = vpop.f32.mrb[0].mxu0
  %377 = vmatprep.mubr.f32.mxu0 0.0
  %378 = vmatmul.mubr.f32.gmra.mrb[0].mxu0 %v112
  %v379 = vpop.f32.mrb[0].mxu0
  %v380 = vadd.f32 %v93, %v379
  %v381 = vpop.f32.mrb[0].mxu0
  %382 = vmatprep.mubr.f32.mxu0 0.0
  %383 = vmatmul.mubr.f32.gmra.mrb[0].mxu0 %v115
  %v384 = vpop.f32.mrb[0].mxu0
  %v385 = vadd.f32 %v93, %v384
  %v386 = vpop.f32.mrb[0].mxu0
  %387 = vmatprep.mubr.f32.mxu0 0.0
  %388 = vmatmul.mubr.f32.gmra.mrb[0].mxu0 %v118
  %v389 = vpop.f32.mrb[0].mxu0
  %v390 = vadd.f32 %v93, %v389
  %v391 = vpop.f32.mrb[0].mxu0
  %392 = vmatprep.mubr.f32.mxu0 0.0
  %393 = vmatmul.mubr.f32.gmra.mrb[0].mxu0 %v121
  %v394 = vpop.f32.mrb[0].mxu0
  %v395 = vadd.f32 %v93, %v394
  %v396 = vpop.f32.mrb[0].mxu0
  %397 = vmatprep.mubr.f32.mxu0 0.0
  %398 = vmatmul.mubr.f32.gmra.mrb[0].mxu0 %v124
  %v399 = vpop.f32.mrb[0].mxu0
  %v400 = vadd.f32 %v93, %v399
  %v401 = vpop.f32.mrb[0].mxu0
  %402 = vmatprep.mubr.f32.mxu0 0.0
  %403 = vmatmul.mubr.f32.gmra.mrb[0].mxu0 %v127
  %v404 = vpop.f32.mrb[0].mxu0
  %v405 = vadd.f32 %v93, %v404
  %v406 = vpop.f32.mrb[0].mxu0
  %407 = vmatprep.mubr.f32.mxu0 0.0
  %408 = vmatmul.mubr.f32.gmra.mrb[0].mxu0 %v130
  %v409 = vpop.f32.mrb[0].mxu0
  %v410 = vadd.f32 %v93, %v409
  %v411 = vpop.f32.mrb[0].mxu0
  %412 = vmatprep.mubr.f32.mxu0 0.0
  %413 = vmatmul.mubr.f32.gmra.mrb[0].mxu0 %v133
  %v414 = vpop.f32.mrb[0].mxu0
  %v415 = vadd.f32 %v93, %v414
  %v416 = vpop.f32.mrb[0].mxu0
  %417 = vmatprep.mubr.f32.mxu0 0.0
  %418 = vmatmul.mubr.f32.gmra.mrb[0].mxu0 %v136
  %v419 = vpop.f32.mrb[0].mxu0
  %v420 = vadd.f32 %v93, %v419
  %v421 = vpop.f32.mrb[0].mxu0
  %422 = vmatprep.mubr.f32.mxu0 0.0
  %423 = vmatmul.mubr.f32.gmra.mrb[0].mxu0 %v139
  %v424 = vpop.f32.mrb[0].mxu0
  %v425 = vadd.f32 %v93, %v424
  %v426 = vpop.f32.mrb[0].mxu0
  %427 = vmatprep.mubr.f32.mxu0 0.0
  %428 = vmatmul.mubr.f32.gmra.mrb[0].mxu0 %v142
  %v429 = vpop.f32.mrb[0].mxu0
  %v430 = vadd.f32 %v93, %v429
  %v431 = vpop.f32.mrb[0].mxu0
  %432 = vmatprep.mubr.f32.mxu0 0.0
  %433 = vmatmul.mubr.f32.gmra.mrb[0].mxu0 %v145
  %v434 = vpop.f32.mrb[0].mxu0
  %v435 = vadd.f32 %v93, %v434
  %v436 = vpop.f32.mrb[0].mxu0
  %437 = vmatprep.mubr.f32.mxu0 0.0
  %438 = vmatmul.mubr.f32.gmra.mrb[0].mxu0 %v148
  %v439 = vpop.f32.mrb[0].mxu0
  %v440 = vadd.f32 %v93, %v439
  %v441 = vpop.f32.mrb[0].mxu0
  %442 = vmatprep.mubr.f32.mxu0 0.0
  %443 = vmatmul.mubr.f32.gmra.mrb[0].mxu0 %v151
  %v444 = vpop.f32.mrb[0].mxu0
  %v445 = vadd.f32 %v93, %v444
  %v446 = vpop.f32.mrb[0].mxu0
  %447 = vmatprep.mubr.f32.mxu0 0.0
  %448 = vmatmul.mubr.f32.gmra.mrb[0].mxu0 %v154
  %v449 = vpop.f32.mrb[0].mxu0
  %v450 = vadd.f32 %v93, %v449
  %v451 = vpop.f32.mrb[0].mxu0
  %452 = vmatprep.mubr.f32.mxu0 0.0
  %453 = vmatmul.mubr.f32.gmra.mrb[0].mxu0 %v157
  %v454 = vpop.f32.mrb[0].mxu0
  %v455 = vadd.f32 %v93, %v454
  %v456 = vpop.f32.mrb[0].mxu0
  %457 = vmatprep.mubr.f32.mxu0 0.0
  %458 = vmatmul.mubr.f32.gmra.mrb[0].mxu0 %v160
  %v459 = vpop.f32.mrb[0].mxu0
  %v460 = vadd.f32 %v93, %v459
  %v461 = vpop.f32.mrb[0].mxu0
  %462 = vmatprep.mubr.f32.mxu0 0.0
  %463 = vmatmul.mubr.f32.gmra.mrb[0].mxu0 %v163
  %v464 = vpop.f32.mrb[0].mxu0
  %v465 = vadd.f32 %v93, %v464
  %v466 = vpop.f32.mrb[0].mxu0
  %467 = vmatprep.mubr.f32.mxu0 0.0
  %468 = vmatmul.mubr.f32.gmra.mrb[0].mxu0 %v166
  %v469 = vpop.f32.mrb[0].mxu0
  %v470 = vadd.f32 %v93, %v469
  %v471 = vpop.f32.mrb[0].mxu0
  %472 = vmatprep.mubr.f32.mxu0 0.0
  %473 = vmatmul.mubr.f32.gmra.mrb[0].mxu0 %v169
  %v474 = vpop.f32.mrb[0].mxu0
  %v475 = vadd.f32 %v93, %v474
  %v476 = vpop.f32.mrb[0].mxu0
  %477 = vmatprep.mubr.f32.mxu0 0.0
  %478 = vmatmul.mubr.f32.gmra.mrb[0].mxu0 %v172
  %v479 = vpop.f32.mrb[0].mxu0
  %v480 = vadd.f32 %v93, %v479
  %v481 = vpop.f32.mrb[0].mxu0
  %482 = vmatprep.mubr.f32.mxu0 0.0
  %483 = vmatmul.mubr.f32.gmra.mrb[0].mxu0 %v175
  %v484 = vpop.f32.mrb[0].mxu0
  %v485 = vadd.f32 %v93, %v484
  %v486 = vpop.f32.mrb[0].mxu0
  %487 = vmatprep.mubr.f32.mxu0 0.0
  %488 = vmatmul.mubr.f32.gmra.mrb[0].mxu0 %v178
  %v489 = vpop.f32.mrb[0].mxu0
  %v490 = vadd.f32 %v93, %v489
  %v491 = vpop.f32.mrb[0].mxu0
  %492 = vmatprep.mubr.f32.mxu0 0.0
  %493 = vmatmul.mubr.f32.gmra.mrb[0].mxu0 %v181
  %v494 = vpop.f32.mrb[0].mxu0
  %v495 = vadd.f32 %v93, %v494
  %v496 = vpop.f32.mrb[0].mxu0
  %497 = vmatprep.mubr.f32.mxu0 0.0
  %498 = vmatmul.mubr.f32.gmra.mrb[0].mxu0 %v184
  %v499 = vpop.f32.mrb[0].mxu0
  %v500 = vadd.f32 %v93, %v499
  %v501 = vpop.f32.mrb[0].mxu0
  %502 = vmatprep.mubr.f32.mxu0 0.0
  %503 = vmatmul.mubr.f32.gmra.mrb[0].mxu0 %v187
  %v504 = vpop.f32.mrb[0].mxu0
  %v505 = vadd.f32 %v93, %v504
  %v506 = vpop.f32.mrb[0].mxu0
  %507 = vmatprep.mubr.f32.mxu0 0.0
  %508 = vmatmul.mubr.f32.gmra.mrb[0].mxu0 %v190
  %v509 = vpop.f32.mrb[0].mxu0
  %v510 = vadd.f32 %v93, %v509
  %v511 = vpop.f32.mrb[0].mxu0
  %512 = vmatprep.mubr.f32.mxu0 0.0
  %513 = vmatmul.mubr.f32.gmra.mrb[0].mxu0 %v193
  %v514 = vpop.f32.mrb[0].mxu0
  %v515 = vadd.f32 %v93, %v514
  %v516 = vpop.f32.mrb[0].mxu0
  %517 = vmatprep.mubr.f32.mxu0 0.0
  %518 = vmatmul.mubr.f32.gmra.mrb[0].mxu0 %v196
  %v519 = vpop.f32.mrb[0].mxu0
  %v520 = vadd.f32 %v93, %v519
  %v521 = vpop.f32.mrb[0].mxu0
  %522 = vmatprep.mubr.f32.mxu0 0.0
  %523 = vmatmul.mubr.f32.gmra.mrb[0].mxu0 %v199
  %v524 = vpop.f32.mrb[0].mxu0
  %v525 = vadd.f32 %v93, %v524
  %v526 = vpop.f32.mrb[0].mxu0
  %527 = vmatprep.mubr.f32.mxu0 0.0
  %528 = vmatmul.mubr.f32.gmra.mrb[0].mxu0 %v202
  %v529 = vpop.f32.mrb[0].mxu0
  %v530 = vadd.f32 %v93, %v529
  %v531 = vpop.f32.mrb[0].mxu0
  %532 = vmatprep.mubr.f32.mxu0 0.0
  %533 = vmatmul.mubr.f32.gmra.mrb[0].mxu0 %v205
  %v534 = vpop.f32.mrb[0].mxu0
  %v535 = vadd.f32 %v93, %v534
  %v536 = vpop.f32.mrb[0].mxu0
  %537 = vmatprep.mubr.f32.mxu0 0.0
  %538 = vmatmul.mubr.f32.gmra.mrb[0].mxu0 %v208
  %v539 = vpop.f32.mrb[0].mxu0
  %v540 = vadd.f32 %v93, %v539
  %v541 = vpop.f32.mrb[0].mxu0
  %542 = vmatprep.mubr.f32.mxu0 0.0
  %543 = vmatmul.mubr.f32.gmra.mrb[0].mxu0 %v211
  %v544 = vpop.f32.mrb[0].mxu0
  %v545 = vadd.f32 %v93, %v544
  %v546 = vpop.f32.mrb[0].mxu0
  %547 = vmatprep.mubr.f32.mxu0 0.0
  %548 = vmatmul.mubr.f32.gmra.mrb[0].mxu0 %v214
  %v549 = vpop.f32.mrb[0].mxu0
  %v550 = vadd.f32 %v93, %v549
  %v551 = vpop.f32.mrb[0].mxu0
  %552 = vmatprep.mubr.f32.mxu0 0.0
  %553 = vmatmul.mubr.f32.gmra.mrb[0].mxu0 %v217
  %v554 = vpop.f32.mrb[0].mxu0
  %v555 = vadd.f32 %v93, %v554
  %v556 = vpop.f32.mrb[0].mxu0
  %557 = vmatprep.mubr.f32.mxu0 0.0
  %558 = vmatmul.mubr.f32.gmra.mrb[0].mxu0 %v220
  %v559 = vpop.f32.mrb[0].mxu0
  %v560 = vadd.f32 %v93, %v559
  %v561 = vpop.f32.mrb[0].mxu0
  %562 = vmatprep.mubr.f32.mxu0 0.0
  %563 = vmatmul.mubr.f32.gmra.mrb[0].mxu0 %v223
  %v564 = vpop.f32.mrb[0].mxu0
  %v565 = vadd.f32 %v93, %v564
  %v566 = vpop.f32.mrb[0].mxu0
  %567 = vmatprep.mubr.f32.mxu0 0.0
  %568 = vmatmul.mubr.f32.gmra.mrb[0].mxu0 %v226
  %v569 = vpop.f32.mrb[0].mxu0
  %v570 = vadd.f32 %v93, %v569
  %v571 = vpop.f32.mrb[0].mxu0
  %572 = vmatprep.mubr.f32.mxu0 0.0
  %573 = vmatmul.mubr.f32.gmra.mrb[0].mxu0 %v229
  %v574 = vpop.f32.mrb[0].mxu0
  %v575 = vadd.f32 %v93, %v574
  %v576 = vpop.f32.mrb[0].mxu0
  %577 = vmatprep.mubr.f32.mxu0 0.0
  %578 = vmatmul.mubr.f32.gmra.mrb[0].mxu0 %v232
  %v579 = vpop.f32.mrb[0].mxu0
  %v580 = vadd.f32 %v93, %v579
  %v581 = vpop.f32.mrb[0].mxu0
  %582 = vmatprep.mubr.f32.mxu0 0.0
  %583 = vmatmul.mubr.f32.gmra.mrb[0].mxu0 %v235
  %v584 = vpop.f32.mrb[0].mxu0
  %v585 = vadd.f32 %v93, %v584
  %v586 = vpop.f32.mrb[0].mxu0
  %587 = vmatprep.mubr.f32.mxu0 0.0
  %588 = vmatmul.mubr.f32.gmra.mrb[0].mxu0 %v238
  %v589 = vpop.f32.mrb[0].mxu0
  %v590 = vadd.f32 %v93, %v589
  %v591 = vpop.f32.mrb[0].mxu0
  %592 = vmatprep.mubr.f32.mxu0 0.0
  %593 = vmatmul.mubr.f32.gmra.mrb[0].mxu0 %v241
  %v594 = vpop.f32.mrb[0].mxu0
  %v595 = vadd.f32 %v93, %v594
  %v596 = vpop.f32.mrb[0].mxu0
  %597 = vmatprep.mubr.f32.mxu0 0.0
  %598 = vmatmul.mubr.f32.gmra.mrb[0].mxu0 %v244
  %v599 = vpop.f32.mrb[0].mxu0
  %v600 = vadd.f32 %v93, %v599
  %v601 = vpop.f32.mrb[0].mxu0
  %602 = vmatprep.mubr.f32.mxu0 0.0
  %603 = vmatmul.mubr.f32.gmra.mrb[0].mxu0 %v247
  %v604 = vpop.f32.mrb[0].mxu0
  %v605 = vadd.f32 %v93, %v604
  %v606 = vpop.f32.mrb[0].mxu0
  %607 = vmatprep.mubr.f32.mxu0 0.0
  %608 = vmatmul.mubr.f32.gmra.mrb[0].mxu0 %v250
  %v609 = vpop.f32.mrb[0].mxu0
  %v610 = vadd.f32 %v93, %v609
  %v611 = vpop.f32.mrb[0].mxu0
  %612 = vmatprep.mubr.f32.mxu0 0.0
  %613 = vmatmul.mubr.f32.gmra.mrb[0].mxu0 %v253
  %v614 = vpop.f32.mrb[0].mxu0
  %v615 = vadd.f32 %v93, %v614
  %v616 = vpop.f32.mrb[0].mxu0
  %617 = vmatprep.mubr.f32.mxu0 0.0
  %618 = vmatmul.mubr.f32.gmra.mrb[0].mxu0 %v256
  %v619 = vpop.f32.mrb[0].mxu0
  %v620 = vadd.f32 %v93, %v619
  %v621 = vpop.f32.mrb[0].mxu0
  %622 = vmatprep.mubr.f32.mxu0 0.0
  %623 = vmatmul.mubr.f32.gmra.mrb[0].mxu0 %v259
  %v624 = vpop.f32.mrb[0].mxu0
  %v625 = vadd.f32 %v93, %v624
  %v626 = vpop.f32.mrb[0].mxu0
  %627 = vmatprep.mubr.f32.mxu0 0.0
  %628 = vmatmul.mubr.f32.gmra.mrb[0].mxu0 %v262
  %v629 = vpop.f32.mrb[0].mxu0
  %v630 = vadd.f32 %v93, %v629
  %v631 = vpop.f32.mrb[0].mxu0
  %632 = vmatprep.mubr.f32.mxu0 0.0
  %633 = vmatmul.mubr.f32.gmra.mrb[0].mxu0 %v265
  %v634 = vpop.f32.mrb[0].mxu0
  %v635 = vadd.f32 %v93, %v634
  %v636 = vpop.f32.mrb[0].mxu0
  %637 = vmatprep.mubr.f32.mxu0 0.0
  %638 = vmatmul.mubr.f32.gmra.mrb[0].mxu0 %v268
  %v639 = vpop.f32.mrb[0].mxu0
  %v640 = vadd.f32 %v93, %v639
  %v641 = vpop.f32.mrb[0].mxu0
  %642 = vmatprep.mubr.f32.mxu0 0.0
  %643 = vmatmul.mubr.f32.gmra.mrb[0].mxu0 %v271
  %v644 = vpop.f32.mrb[0].mxu0
  %v645 = vadd.f32 %v93, %v644
  %v646 = vpop.f32.mrb[0].mxu0
  %647 = vmatprep.mubr.f32.mxu0 0.0
  %648 = vmatmul.mubr.f32.gmra.mrb[0].mxu0 %v274
  %v649 = vpop.f32.mrb[0].mxu0
  %v650 = vadd.f32 %v93, %v649
  %v651 = vpop.f32.mrb[0].mxu0
  %652 = vmatprep.mubr.f32.mxu0 0.0
  %653 = vmatmul.mubr.f32.gmra.mrb[0].mxu0 %v277
  %v654 = vpop.f32.mrb[0].mxu0
  %v655 = vadd.f32 %v93, %v654
  %v656 = vpop.f32.mrb[0].mxu0
  %657 = vmatprep.mubr.f32.mxu0 0.0
  %658 = vmatmul.mubr.f32.gmra.mrb[0].mxu0 %v280
  %v659 = vpop.f32.mrb[0].mxu0
  %v660 = vadd.f32 %v93, %v659
  %v661 = vpop.f32.mrb[0].mxu0
  %662 = vmatprep.mubr.f32.mxu0 0.0
  %663 = vmatmul.mubr.f32.gmra.mrb[0].mxu0 %v283
  %v664 = vpop.f32.mrb[0].mxu0
  %v665 = vadd.f32 %v93, %v664
  %v666 = vpop.f32.mrb[0].mxu0
  %667 = vmatprep.mubr.f32.mxu0 0.0
  %668 = vmatmul.mubr.f32.gmra.mrb[0].mxu0 %v286
  %v669 = vpop.f32.mrb[0].mxu0
  %v670 = vadd.f32 %v93, %v669
  %v671 = vpop.f32.mrb[0].mxu0
  %672 = vdwg.mxu0
  %v673 = vmul.f32 %v355, 0.5
  %v674 = vmul.f32 %v360, 0.5
  %v675 = vmul.f32 %v365, 0.5
  %v676 = vmul.f32 %v370, 0.5
  %v677 = vmul.f32 %v375, 0.5
  %v678 = vmul.f32 %v380, 0.5
  %v679 = vmul.f32 %v385, 0.5
  %v680 = vmul.f32 %v390, 0.5
  %v681 = vmul.f32 %v395, 0.5
  %v682 = vmul.f32 %v400, 0.5
  %v683 = vmul.f32 %v405, 0.5
  %v684 = vmul.f32 %v410, 0.5
  %v685 = vmul.f32 %v415, 0.5
  %v686 = vmul.f32 %v420, 0.5
  %v687 = vmul.f32 %v425, 0.5
  %v688 = vmul.f32 %v430, 0.5
  %v689 = vmul.f32 %v435, 0.5
  %v690 = vmul.f32 %v440, 0.5
  %v691 = vmul.f32 %v445, 0.5
  %v692 = vmul.f32 %v450, 0.5
  %v693 = vmul.f32 %v455, 0.5
  %v694 = vmul.f32 %v460, 0.5
  %v695 = vmul.f32 %v465, 0.5
  %v696 = vmul.f32 %v470, 0.5
  %v697 = vmul.f32 %v475, 0.5
  %v698 = vmul.f32 %v480, 0.5
  %v699 = vmul.f32 %v485, 0.5
  %v700 = vmul.f32 %v490, 0.5
  %v701 = vmul.f32 %v495, 0.5
  %v702 = vmul.f32 %v500, 0.5
  %v703 = vmul.f32 %v505, 0.5
  %v704 = vmul.f32 %v510, 0.5
  %v705 = vmul.f32 %v515, 0.5
  %v706 = vmul.f32 %v520, 0.5
  %v707 = vmul.f32 %v525, 0.5
  %v708 = vmul.f32 %v530, 0.5
  %v709 = vmul.f32 %v535, 0.5
  %v710 = vmul.f32 %v540, 0.5
  %v711 = vmul.f32 %v545, 0.5
  %v712 = vmul.f32 %v550, 0.5
  %v713 = vmul.f32 %v555, 0.5
  %v714 = vmul.f32 %v560, 0.5
  %v715 = vmul.f32 %v565, 0.5
  %v716 = vmul.f32 %v570, 0.5
  %v717 = vmul.f32 %v575, 0.5
  %v718 = vmul.f32 %v580, 0.5
  %v719 = vmul.f32 %v585, 0.5
  %v720 = vmul.f32 %v590, 0.5
  %v721 = vmul.f32 %v595, 0.5
  %v722 = vmul.f32 %v600, 0.5
  %v723 = vmul.f32 %v605, 0.5
  %v724 = vmul.f32 %v610, 0.5
  %v725 = vmul.f32 %v615, 0.5
  %v726 = vmul.f32 %v620, 0.5
  %v727 = vmul.f32 %v625, 0.5
  %v728 = vmul.f32 %v630, 0.5
  %v729 = vmul.f32 %v635, 0.5
  %v730 = vmul.f32 %v640, 0.5
  %v731 = vmul.f32 %v645, 0.5
  %v732 = vmul.f32 %v650, 0.5
  %v733 = vmul.f32 %v655, 0.5
  %v734 = vmul.f32 %v660, 0.5
  %v735 = vmul.f32 %v665, 0.5
  %v736 = vmul.f32 %v670, 0.5
  %v737 = vrcp.pop 1.4142135
  %v738 = vmul.f32 %v355, %v737
  %v739 = vmul.f32 %v360, %v737
  %v740 = vmul.f32 %v365, %v737
  %v741 = vmul.f32 %v370, %v737
  %v742 = vmul.f32 %v375, %v737
  %v743 = vmul.f32 %v380, %v737
  %v744 = vmul.f32 %v385, %v737
  %v745 = vmul.f32 %v390, %v737
  %v746 = vmul.f32 %v395, %v737
  %v747 = vmul.f32 %v400, %v737
  %v748 = vmul.f32 %v405, %v737
  %v749 = vmul.f32 %v410, %v737
  %v750 = vmul.f32 %v415, %v737
  %v751 = vmul.f32 %v420, %v737
  %v752 = vmul.f32 %v425, %v737
  %v753 = vmul.f32 %v430, %v737
  %v754 = vmul.f32 %v435, %v737
  %v755 = vmul.f32 %v440, %v737
  %v756 = vmul.f32 %v445, %v737
  %v757 = vmul.f32 %v450, %v737
  %v758 = vmul.f32 %v455, %v737
  %v759 = vmul.f32 %v460, %v737
  %v760 = vmul.f32 %v465, %v737
  %v761 = vmul.f32 %v470, %v737
  %v762 = vmul.f32 %v475, %v737
  %v763 = vmul.f32 %v480, %v737
  %v764 = vmul.f32 %v485, %v737
  %v765 = vmul.f32 %v490, %v737
  %v766 = vmul.f32 %v495, %v737
  %v767 = vmul.f32 %v500, %v737
  %v768 = vmul.f32 %v505, %v737
  %v769 = vmul.f32 %v510, %v737
  %v770 = vmul.f32 %v515, %v737
  %v771 = vmul.f32 %v520, %v737
  %v772 = vmul.f32 %v525, %v737
  %v773 = vmul.f32 %v530, %v737
  %v774 = vmul.f32 %v535, %v737
  %v775 = vmul.f32 %v540, %v737
  %v776 = vmul.f32 %v545, %v737
  %v777 = vmul.f32 %v550, %v737
  %v778 = vmul.f32 %v555, %v737
  %v779 = vmul.f32 %v560, %v737
  %v780 = vmul.f32 %v565, %v737
  %v781 = vmul.f32 %v570, %v737
  %v782 = vmul.f32 %v575, %v737
  %v783 = vmul.f32 %v580, %v737
  %v784 = vmul.f32 %v585, %v737
  %v785 = vmul.f32 %v590, %v737
  %v786 = vmul.f32 %v595, %v737
  %v787 = vmul.f32 %v600, %v737
  %v788 = vmul.f32 %v605, %v737
  %v789 = vmul.f32 %v610, %v737
  %v790 = vmul.f32 %v615, %v737
  %v791 = vmul.f32 %v620, %v737
  %v792 = vmul.f32 %v625, %v737
  %v793 = vmul.f32 %v630, %v737
  %v794 = vmul.f32 %v635, %v737
  %v795 = vmul.f32 %v640, %v737
  %v796 = vmul.f32 %v645, %v737
  %v797 = vmul.f32 %v650, %v737
  %v798 = vmul.f32 %v655, %v737
  %v799 = vmul.f32 %v660, %v737
  %v800 = vmul.f32 %v665, %v737
  %v801 = vmul.f32 %v670, %v737
  %v802 = verf.f32.pop %v738
  %v803 = verf.f32.pop %v739
  %v804 = verf.f32.pop %v740
  %v805 = verf.f32.pop %v741
  %v806 = verf.f32.pop %v742
  %v807 = verf.f32.pop %v743
  %v808 = verf.f32.pop %v744
  %v809 = verf.f32.pop %v745
  %v810 = verf.f32.pop %v746
  %v811 = verf.f32.pop %v747
  %v812 = verf.f32.pop %v748
  %v813 = verf.f32.pop %v749
  %v814 = verf.f32.pop %v750
  %v815 = verf.f32.pop %v751
  %v816 = verf.f32.pop %v752
  %v817 = verf.f32.pop %v753
  %v818 = verf.f32.pop %v754
  %v819 = verf.f32.pop %v755
  %v820 = verf.f32.pop %v756
  %v821 = verf.f32.pop %v757
  %v822 = verf.f32.pop %v758
  %v823 = verf.f32.pop %v759
  %v824 = verf.f32.pop %v760
  %v825 = verf.f32.pop %v761
  %v826 = verf.f32.pop %v762
  %v827 = verf.f32.pop %v763
  %v828 = verf.f32.pop %v764
  %v829 = verf.f32.pop %v765
  %v830 = verf.f32.pop %v766
  %v831 = verf.f32.pop %v767
  %v832 = verf.f32.pop %v768
  %v833 = verf.f32.pop %v769
  %v834 = verf.f32.pop %v770
  %v835 = verf.f32.pop %v771
  %v836 = verf.f32.pop %v772
  %v837 = verf.f32.pop %v773
  %v838 = verf.f32.pop %v774
  %v839 = verf.f32.pop %v775
  %v840 = verf.f32.pop %v776
  %v841 = verf.f32.pop %v777
  %v842 = verf.f32.pop %v778
  %v843 = verf.f32.pop %v779
  %v844 = verf.f32.pop %v780
  %v845 = verf.f32.pop %v781
  %v846 = verf.f32.pop %v782
  %v847 = verf.f32.pop %v783
  %v848 = verf.f32.pop %v784
  %v849 = verf.f32.pop %v785
  %v850 = verf.f32.pop %v786
  %v851 = verf.f32.pop %v787
  %v852 = verf.f32.pop %v788
  %v853 = verf.f32.pop %v789
  %v854 = verf.f32.pop %v790
  %v855 = verf.f32.pop %v791
  %v856 = verf.f32.pop %v792
  %v857 = verf.f32.pop %v793
  %v858 = verf.f32.pop %v794
  %v859 = verf.f32.pop %v795
  %v860 = verf.f32.pop %v796
  %v861 = verf.f32.pop %v797
  %v862 = verf.f32.pop %v798
  %v863 = verf.f32.pop %v799
  %v864 = verf.f32.pop %v800
  %v865 = verf.f32.pop %v801
  %v866 = vadd.f32 %v802, 1.0
  %v867 = vadd.f32 %v803, 1.0
  %v868 = vadd.f32 %v804, 1.0
  %v869 = vadd.f32 %v805, 1.0
  %v870 = vadd.f32 %v806, 1.0
  %v871 = vadd.f32 %v807, 1.0
  %v872 = vadd.f32 %v808, 1.0
  %v873 = vadd.f32 %v809, 1.0
  %v874 = vadd.f32 %v810, 1.0
  %v875 = vadd.f32 %v811, 1.0
  %v876 = vadd.f32 %v812, 1.0
  %v877 = vadd.f32 %v813, 1.0
  %v878 = vadd.f32 %v814, 1.0
  %v879 = vadd.f32 %v815, 1.0
  %v880 = vadd.f32 %v816, 1.0
  %v881 = vadd.f32 %v817, 1.0
  %v882 = vadd.f32 %v818, 1.0
  %v883 = vadd.f32 %v819, 1.0
  %v884 = vadd.f32 %v820, 1.0
  %v885 = vadd.f32 %v821, 1.0
  %v886 = vadd.f32 %v822, 1.0
  %v887 = vadd.f32 %v823, 1.0
  %v888 = vadd.f32 %v824, 1.0
  %v889 = vadd.f32 %v825, 1.0
  %v890 = vadd.f32 %v826, 1.0
  %v891 = vadd.f32 %v827, 1.0
  %v892 = vadd.f32 %v828, 1.0
  %v893 = vadd.f32 %v829, 1.0
  %v894 = vadd.f32 %v830, 1.0
  %v895 = vadd.f32 %v831, 1.0
  %v896 = vadd.f32 %v832, 1.0
  %v897 = vadd.f32 %v833, 1.0
  %v898 = vadd.f32 %v834, 1.0
  %v899 = vadd.f32 %v835, 1.0
  %v900 = vadd.f32 %v836, 1.0
  %v901 = vadd.f32 %v837, 1.0
  %v902 = vadd.f32 %v838, 1.0
  %v903 = vadd.f32 %v839, 1.0
  %v904 = vadd.f32 %v840, 1.0
  %v905 = vadd.f32 %v841, 1.0
  %v906 = vadd.f32 %v842, 1.0
  %v907 = vadd.f32 %v843, 1.0
  %v908 = vadd.f32 %v844, 1.0
  %v909 = vadd.f32 %v845, 1.0
  %v910 = vadd.f32 %v846, 1.0
  %v911 = vadd.f32 %v847, 1.0
  %v912 = vadd.f32 %v848, 1.0
  %v913 = vadd.f32 %v849, 1.0
  %v914 = vadd.f32 %v850, 1.0
  %v915 = vadd.f32 %v851, 1.0
  %v916 = vadd.f32 %v852, 1.0
  %v917 = vadd.f32 %v853, 1.0
  %v918 = vadd.f32 %v854, 1.0
  %v919 = vadd.f32 %v855, 1.0
  %v920 = vadd.f32 %v856, 1.0
  %v921 = vadd.f32 %v857, 1.0
  %v922 = vadd.f32 %v858, 1.0
  %v923 = vadd.f32 %v859, 1.0
  %v924 = vadd.f32 %v860, 1.0
  %v925 = vadd.f32 %v861, 1.0
  %v926 = vadd.f32 %v862, 1.0
  %v927 = vadd.f32 %v863, 1.0
  %v928 = vadd.f32 %v864, 1.0
  %v929 = vadd.f32 %v865, 1.0
  %v930 = vmul.f32 %v673, %v866
  %v931 = vmul.f32 %v674, %v867
  %v932 = vmul.f32 %v675, %v868
  %v933 = vmul.f32 %v676, %v869
  %v934 = vmul.f32 %v677, %v870
  %v935 = vmul.f32 %v678, %v871
  %v936 = vmul.f32 %v679, %v872
  %v937 = vmul.f32 %v680, %v873
  %v938 = vmul.f32 %v681, %v874
  %v939 = vmul.f32 %v682, %v875
  %v940 = vmul.f32 %v683, %v876
  %v941 = vmul.f32 %v684, %v877
  %v942 = vmul.f32 %v685, %v878
  %v943 = vmul.f32 %v686, %v879
  %v944 = vmul.f32 %v687, %v880
  %v945 = vmul.f32 %v688, %v881
  %v946 = vmul.f32 %v689, %v882
  %v947 = vmul.f32 %v690, %v883
  %v948 = vmul.f32 %v691, %v884
  %v949 = vmul.f32 %v692, %v885
  %v950 = vmul.f32 %v693, %v886
  %v951 = vmul.f32 %v694, %v887
  %v952 = vmul.f32 %v695, %v888
  %v953 = vmul.f32 %v696, %v889
  %v954 = vmul.f32 %v697, %v890
  %v955 = vmul.f32 %v698, %v891
  %v956 = vmul.f32 %v699, %v892
  %v957 = vmul.f32 %v700, %v893
  %v958 = vmul.f32 %v701, %v894
  %v959 = vmul.f32 %v702, %v895
  %v960 = vmul.f32 %v703, %v896
  %v961 = vmul.f32 %v704, %v897
  %v962 = vmul.f32 %v705, %v898
  %v963 = vmul.f32 %v706, %v899
  %v964 = vmul.f32 %v707, %v900
  %v965 = vmul.f32 %v708, %v901
  %v966 = vmul.f32 %v709, %v902
  %v967 = vmul.f32 %v710, %v903
  %v968 = vmul.f32 %v711, %v904
  %v969 = vmul.f32 %v712, %v905
  %v970 = vmul.f32 %v713, %v906
  %v971 = vmul.f32 %v714, %v907
  %v972 = vmul.f32 %v715, %v908
  %v973 = vmul.f32 %v716, %v909
  %v974 = vmul.f32 %v717, %v910
  %v975 = vmul.f32 %v718, %v911
  %v976 = vmul.f32 %v719, %v912
  %v977 = vmul.f32 %v720, %v913
  %v978 = vmul.f32 %v721, %v914
  %v979 = vmul.f32 %v722, %v915
  %v980 = vmul.f32 %v723, %v916
  %v981 = vmul.f32 %v724, %v917
  %v982 = vmul.f32 %v725, %v918
  %v983 = vmul.f32 %v726, %v919
  %v984 = vmul.f32 %v727, %v920
  %v985 = vmul.f32 %v728, %v921
  %v986 = vmul.f32 %v729, %v922
  %v987 = vmul.f32 %v730, %v923
  %v988 = vmul.f32 %v731, %v924
  %v989 = vmul.f32 %v732, %v925
  %v990 = vmul.f32 %v733, %v926
  %v991 = vmul.f32 %v734, %v927
  %v992 = vmul.f32 %v735, %v928
  %v993 = vmul.f32 %v736, %v929
  %v994 = vld [vmem:[%s3] sm:$0xff]
  %v995 = vld [vmem:[%s3 + $0x8] sm:$0xff]
  %v996 = vld [vmem:[%s3 + $0x10] sm:$0xff]
  %v997 = vld [vmem:[%s3 + $0x18] sm:$0xff]
  %v998 = vld [vmem:[%s3 + $0x20] sm:$0xff]
  %v999 = vld [vmem:[%s3 + $0x28] sm:$0xff]
  %v1000 = vld [vmem:[%s3 + $0x30] sm:$0xff]
  %v1001 = vld [vmem:[%s3 + $0x38] sm:$0xff]
  %v1002 = vld [vmem:[#allocation2] sm:$0x1]
  %v1004 = vlaneseq
  %v1005 = vshrl.u32 %v1004, 7
  %v1006 = vsub.s32 0, %v1005
  %v1007 = vrot.slane %v1002, %v1006
  %vm1009 = vcmask 523264
  %v1011 = vsel %vm1009, %v930, 0
  %v1014 = vsel %vm1009, %v931, 0
  %v1017 = vsel %vm1009, %v932, 0
  %v1020 = vsel %vm1009, %v933, 0
  %v1023 = vsel %vm1009, %v934, 0
  %v1026 = vsel %vm1009, %v935, 0
  %v1029 = vsel %vm1009, %v936, 0
  %v1032 = vsel %vm1009, %v937, 0
  %v1035 = vsel %vm1009, %v938, 0
  %v1038 = vsel %vm1009, %v939, 0
  %v1041 = vsel %vm1009, %v940, 0
  %v1044 = vsel %vm1009, %v941, 0
  %v1047 = vsel %vm1009, %v942, 0
  %v1050 = vsel %vm1009, %v943, 0
  %v1053 = vsel %vm1009, %v944, 0
  %v1056 = vsel %vm1009, %v945, 0
  %v1059 = vsel %vm1009, %v946, 0
  %v1062 = vsel %vm1009, %v947, 0
  %v1065 = vsel %vm1009, %v948, 0
  %v1068 = vsel %vm1009, %v949, 0
  %v1071 = vsel %vm1009, %v950, 0
  %v1074 = vsel %vm1009, %v951, 0
  %v1077 = vsel %vm1009, %v952, 0
  %v1080 = vsel %vm1009, %v953, 0
  %v1083 = vsel %vm1009, %v954, 0
  %v1086 = vsel %vm1009, %v955, 0
  %v1089 = vsel %vm1009, %v956, 0
  %v1092 = vsel %vm1009, %v957, 0
  %v1095 = vsel %vm1009, %v958, 0
  %v1098 = vsel %vm1009, %v959, 0
  %v1101 = vsel %vm1009, %v960, 0
  %v1104 = vsel %vm1009, %v961, 0
  %v1107 = vsel %vm1009, %v962, 0
  %v1110 = vsel %vm1009, %v963, 0
  %v1113 = vsel %vm1009, %v964, 0
  %v1116 = vsel %vm1009, %v965, 0
  %v1119 = vsel %vm1009, %v966, 0
  %v1122 = vsel %vm1009, %v967, 0
  %v1125 = vsel %vm1009, %v968, 0
  %v1128 = vsel %vm1009, %v969, 0
  %v1131 = vsel %vm1009, %v970, 0
  %v1134 = vsel %vm1009, %v971, 0
  %v1137 = vsel %vm1009, %v972, 0
  %v1140 = vsel %vm1009, %v973, 0
  %v1143 = vsel %vm1009, %v974, 0
  %v1146 = vsel %vm1009, %v975, 0
  %v1149 = vsel %vm1009, %v976, 0
  %v1152 = vsel %vm1009, %v977, 0
  %v1155 = vsel %vm1009, %v978, 0
  %v1158 = vsel %vm1009, %v979, 0
  %v1161 = vsel %vm1009, %v980, 0
  %v1164 = vsel %vm1009, %v981, 0
  %v1167 = vsel %vm1009, %v982, 0
  %v1170 = vsel %vm1009, %v983, 0
  %v1173 = vsel %vm1009, %v984, 0
  %v1176 = vsel %vm1009, %v985, 0
  %v1179 = vsel %vm1009, %v986, 0
  %v1182 = vsel %vm1009, %v987, 0
  %v1185 = vsel %vm1009, %v988, 0
  %v1188 = vsel %vm1009, %v989, 0
  %v1191 = vsel %vm1009, %v990, 0
  %v1194 = vsel %vm1009, %v991, 0
  %v1197 = vsel %vm1009, %v992, 0
  %v1200 = vsel %vm1009, %v993, 0
  %1202 = vmatprep.subr.mxu0 0.0
  %1203 = vmatpush1.msra.mxu0 %v994
  %1204 = vmatprep.subr.mxu0 0.0
  %1205 = vmatpush1.msra.mxu0 %v995
  %1206 = vmatprep.subr.mxu0 0.0
  %1207 = vmatpush1.msra.mxu0 %v996
  %1208 = vmatprep.subr.mxu0 0.0
  %1209 = vmatpush1.msra.mxu0 %v997
  %1210 = vmatprep.subr.mxu0 0.0
  %1211 = vmatpush1.msra.mxu0 %v998
  %1212 = vmatprep.subr.mxu0 0.0
  %1213 = vmatpush1.msra.mxu0 %v999
  %1214 = vmatprep.subr.mxu0 0.0
  %1215 = vmatpush1.msra.mxu0 %v1000
  %1216 = vmatprep.subr.mxu0 0.0
  %1217 = vmatpush1.msra.mxu0 %v1001
  %1218 = vmatprep.subr.mxu0 0.0
  %1219 = vmatpush1.msra.mxu0 0.0
  %1220 = vmatprep.subr.mxu0 0.0
  %1221 = vmatpush1.msra.mxu0 0.0
  %1222 = vmatprep.subr.mxu0 0.0
  %1223 = vmatpush1.msra.mxu0 0.0
  %1224 = vmatprep.subr.mxu0 0.0
  %1225 = vmatpush1.msra.mxu0 0.0
  %1226 = vmatprep.subr.mxu0 0.0
  %1227 = vmatpush1.msra.mxu0 0.0
  %1228 = vmatprep.subr.mxu0 0.0
  %1229 = vmatpush1.msra.mxu0 0.0
  %1230 = vmatprep.subr.mxu0 0.0
  %1231 = vmatpush1.msra.mxu0 0.0
  %1232 = vmatprep.subr.mxu0 0.0
  %1233 = vmatpush1.msra.mxu0 0.0
  %1234 = vmatprep.subr.mxu0 0.0
  %1235 = vmatpush1.msra.mxu0 0.0
  %1236 = vmatprep.subr.mxu0 0.0
  %1237 = vmatpush1.msra.mxu0 0.0
  %1238 = vmatprep.subr.mxu0 0.0
  %1239 = vmatpush1.msra.mxu0 0.0
  %1240 = vmatprep.subr.mxu0 0.0
  %1241 = vmatpush1.msra.mxu0 0.0
  %1242 = vmatprep.subr.mxu0 0.0
  %1243 = vmatpush1.msra.mxu0 0.0
  %1244 = vmatprep.subr.mxu0 0.0
  %1245 = vmatpush1.msra.mxu0 0.0
  %1246 = vmatprep.subr.mxu0 0.0
  %1247 = vmatpush1.msra.mxu0 0.0
  %1248 = vmatprep.subr.mxu0 0.0
  %1249 = vmatpush1.msra.mxu0 0.0
  %1250 = vmatprep.subr.mxu0 0.0
  %1251 = vmatpush1.msra.mxu0 0.0
  %1252 = vmatprep.subr.mxu0 0.0
  %1253 = vmatpush1.msra.mxu0 0.0
  %1254 = vmatprep.subr.mxu0 0.0
  %1255 = vmatpush1.msra.mxu0 0.0
  %1256 = vmatprep.subr.mxu0 0.0
  %1257 = vmatpush1.msra.mxu0 0.0
  %1258 = vmatprep.subr.mxu0 0.0
  %1259 = vmatpush1.msra.mxu0 0.0
  %1260 = vmatprep.subr.mxu0 0.0
  %1261 = vmatpush1.msra.mxu0 0.0
  %1262 = vmatprep.subr.mxu0 0.0
  %1263 = vmatpush1.msra.mxu0 0.0
  %1264 = vmatprep.subr.mxu0 0.0
  %1265 = vmatpush1.msra.mxu0 0.0
  %1266 = vmatprep.mubr.f32.mxu0 0.0
  %1267 = vmatmul.mubr.f32.gmra.mrb[0].mxu0 %v1011
  %v1268 = vpop.f32.mrb[0].mxu0
  %v1269 = vadd.f32 %v1007, %v1268
  %v1270 = vpop.f32.mrb[0].mxu0
  %1271 = vmatprep.mubr.f32.mxu0 0.0
  %1272 = vmatmul.mubr.f32.gmra.mrb[0].mxu0 %v1014
  %v1273 = vpop.f32.mrb[0].mxu0
  %v1274 = vadd.f32 %v1007, %v1273
  %v1275 = vpop.f32.mrb[0].mxu0
  %1276 = vmatprep.mubr.f32.mxu0 0.0
  %1277 = vmatmul.mubr.f32.gmra.mrb[0].mxu0 %v1017
  %v1278 = vpop.f32.mrb[0].mxu0
  %v1279 = vadd.f32 %v1007, %v1278
  %v1280 = vpop.f32.mrb[0].mxu0
  %1281 = vmatprep.mubr.f32.mxu0 0.0
  %1282 = vmatmul.mubr.f32.gmra.mrb[0].mxu0 %v1020
  %v1283 = vpop.f32.mrb[0].mxu0
  %v1284 = vadd.f32 %v1007, %v1283
  %v1285 = vpop.f32.mrb[0].mxu0
  %1286 = vmatprep.mubr.f32.mxu0 0.0
  %1287 = vmatmul.mubr.f32.gmra.mrb[0].mxu0 %v1023
  %v1288 = vpop.f32.mrb[0].mxu0
  %v1289 = vadd.f32 %v1007, %v1288
  %v1290 = vpop.f32.mrb[0].mxu0
  %1291 = vmatprep.mubr.f32.mxu0 0.0
  %1292 = vmatmul.mubr.f32.gmra.mrb[0].mxu0 %v1026
  %v1293 = vpop.f32.mrb[0].mxu0
  %v1294 = vadd.f32 %v1007, %v1293
  %v1295 = vpop.f32.mrb[0].mxu0
  %1296 = vmatprep.mubr.f32.mxu0 0.0
  %1297 = vmatmul.mubr.f32.gmra.mrb[0].mxu0 %v1029
  %v1298 = vpop.f32.mrb[0].mxu0
  %v1299 = vadd.f32 %v1007, %v1298
  %v1300 = vpop.f32.mrb[0].mxu0
  %1301 = vmatprep.mubr.f32.mxu0 0.0
  %1302 = vmatmul.mubr.f32.gmra.mrb[0].mxu0 %v1032
  %v1303 = vpop.f32.mrb[0].mxu0
  %v1304 = vadd.f32 %v1007, %v1303
  %v1305 = vpop.f32.mrb[0].mxu0
  %1306 = vmatprep.mubr.f32.mxu0 0.0
  %1307 = vmatmul.mubr.f32.gmra.mrb[0].mxu0 %v1035
  %v1308 = vpop.f32.mrb[0].mxu0
  %v1309 = vadd.f32 %v1007, %v1308
  %v1310 = vpop.f32.mrb[0].mxu0
  %1311 = vmatprep.mubr.f32.mxu0 0.0
  %1312 = vmatmul.mubr.f32.gmra.mrb[0].mxu0 %v1038
  %v1313 = vpop.f32.mrb[0].mxu0
  %v1314 = vadd.f32 %v1007, %v1313
  %v1315 = vpop.f32.mrb[0].mxu0
  %1316 = vmatprep.mubr.f32.mxu0 0.0
  %1317 = vmatmul.mubr.f32.gmra.mrb[0].mxu0 %v1041
  %v1318 = vpop.f32.mrb[0].mxu0
  %v1319 = vadd.f32 %v1007, %v1318
  %v1320 = vpop.f32.mrb[0].mxu0
  %1321 = vmatprep.mubr.f32.mxu0 0.0
  %1322 = vmatmul.mubr.f32.gmra.mrb[0].mxu0 %v1044
  %v1323 = vpop.f32.mrb[0].mxu0
  %v1324 = vadd.f32 %v1007, %v1323
  %v1325 = vpop.f32.mrb[0].mxu0
  %1326 = vmatprep.mubr.f32.mxu0 0.0
  %1327 = vmatmul.mubr.f32.gmra.mrb[0].mxu0 %v1047
  %v1328 = vpop.f32.mrb[0].mxu0
  %v1329 = vadd.f32 %v1007, %v1328
  %v1330 = vpop.f32.mrb[0].mxu0
  %1331 = vmatprep.mubr.f32.mxu0 0.0
  %1332 = vmatmul.mubr.f32.gmra.mrb[0].mxu0 %v1050
  %v1333 = vpop.f32.mrb[0].mxu0
  %v1334 = vadd.f32 %v1007, %v1333
  %v1335 = vpop.f32.mrb[0].mxu0
  %1336 = vmatprep.mubr.f32.mxu0 0.0
  %1337 = vmatmul.mubr.f32.gmra.mrb[0].mxu0 %v1053
  %v1338 = vpop.f32.mrb[0].mxu0
  %v1339 = vadd.f32 %v1007, %v1338
  %v1340 = vpop.f32.mrb[0].mxu0
  %1341 = vmatprep.mubr.f32.mxu0 0.0
  %1342 = vmatmul.mubr.f32.gmra.mrb[0].mxu0 %v1056
  %v1343 = vpop.f32.mrb[0].mxu0
  %v1344 = vadd.f32 %v1007, %v1343
  %v1345 = vpop.f32.mrb[0].mxu0
  %1346 = vmatprep.mubr.f32.mxu0 0.0
  %1347 = vmatmul.mubr.f32.gmra.mrb[0].mxu0 %v1059
  %v1348 = vpop.f32.mrb[0].mxu0
  %v1349 = vadd.f32 %v1007, %v1348
  %v1350 = vpop.f32.mrb[0].mxu0
  %1351 = vmatprep.mubr.f32.mxu0 0.0
  %1352 = vmatmul.mubr.f32.gmra.mrb[0].mxu0 %v1062
  %v1353 = vpop.f32.mrb[0].mxu0
  %v1354 = vadd.f32 %v1007, %v1353
  %v1355 = vpop.f32.mrb[0].mxu0
  %1356 = vmatprep.mubr.f32.mxu0 0.0
  %1357 = vmatmul.mubr.f32.gmra.mrb[0].mxu0 %v1065
  %v1358 = vpop.f32.mrb[0].mxu0
  %v1359 = vadd.f32 %v1007, %v1358
  %v1360 = vpop.f32.mrb[0].mxu0
  %1361 = vmatprep.mubr.f32.mxu0 0.0
  %1362 = vmatmul.mubr.f32.gmra.mrb[0].mxu0 %v1068
  %v1363 = vpop.f32.mrb[0].mxu0
  %v1364 = vadd.f32 %v1007, %v1363
  %v1365 = vpop.f32.mrb[0].mxu0
  %1366 = vmatprep.mubr.f32.mxu0 0.0
  %1367 = vmatmul.mubr.f32.gmra.mrb[0].mxu0 %v1071
  %v1368 = vpop.f32.mrb[0].mxu0
  %v1369 = vadd.f32 %v1007, %v1368
  %v1370 = vpop.f32.mrb[0].mxu0
  %1371 = vmatprep.mubr.f32.mxu0 0.0
  %1372 = vmatmul.mubr.f32.gmra.mrb[0].mxu0 %v1074
  %v1373 = vpop.f32.mrb[0].mxu0
  %v1374 = vadd.f32 %v1007, %v1373
  %v1375 = vpop.f32.mrb[0].mxu0
  %1376 = vmatprep.mubr.f32.mxu0 0.0
  %1377 = vmatmul.mubr.f32.gmra.mrb[0].mxu0 %v1077
  %v1378 = vpop.f32.mrb[0].mxu0
  %v1379 = vadd.f32 %v1007, %v1378
  %v1380 = vpop.f32.mrb[0].mxu0
  %1381 = vmatprep.mubr.f32.mxu0 0.0
  %1382 = vmatmul.mubr.f32.gmra.mrb[0].mxu0 %v1080
  %v1383 = vpop.f32.mrb[0].mxu0
  %v1384 = vadd.f32 %v1007, %v1383
  %v1385 = vpop.f32.mrb[0].mxu0
  %1386 = vmatprep.mubr.f32.mxu0 0.0
  %1387 = vmatmul.mubr.f32.gmra.mrb[0].mxu0 %v1083
  %v1388 = vpop.f32.mrb[0].mxu0
  %v1389 = vadd.f32 %v1007, %v1388
  %v1390 = vpop.f32.mrb[0].mxu0
  %1391 = vmatprep.mubr.f32.mxu0 0.0
  %1392 = vmatmul.mubr.f32.gmra.mrb[0].mxu0 %v1086
  %v1393 = vpop.f32.mrb[0].mxu0
  %v1394 = vadd.f32 %v1007, %v1393
  %v1395 = vpop.f32.mrb[0].mxu0
  %1396 = vmatprep.mubr.f32.mxu0 0.0
  %1397 = vmatmul.mubr.f32.gmra.mrb[0].mxu0 %v1089
  %v1398 = vpop.f32.mrb[0].mxu0
  %v1399 = vadd.f32 %v1007, %v1398
  %v1400 = vpop.f32.mrb[0].mxu0
  %1401 = vmatprep.mubr.f32.mxu0 0.0
  %1402 = vmatmul.mubr.f32.gmra.mrb[0].mxu0 %v1092
  %v1403 = vpop.f32.mrb[0].mxu0
  %v1404 = vadd.f32 %v1007, %v1403
  %v1405 = vpop.f32.mrb[0].mxu0
  %1406 = vmatprep.mubr.f32.mxu0 0.0
  %1407 = vmatmul.mubr.f32.gmra.mrb[0].mxu0 %v1095
  %v1408 = vpop.f32.mrb[0].mxu0
  %v1409 = vadd.f32 %v1007, %v1408
  %v1410 = vpop.f32.mrb[0].mxu0
  %1411 = vmatprep.mubr.f32.mxu0 0.0
  %1412 = vmatmul.mubr.f32.gmra.mrb[0].mxu0 %v1098
  %v1413 = vpop.f32.mrb[0].mxu0
  %v1414 = vadd.f32 %v1007, %v1413
  %v1415 = vpop.f32.mrb[0].mxu0
  %1416 = vmatprep.mubr.f32.mxu0 0.0
  %1417 = vmatmul.mubr.f32.gmra.mrb[0].mxu0 %v1101
  %v1418 = vpop.f32.mrb[0].mxu0
  %v1419 = vadd.f32 %v1007, %v1418
  %v1420 = vpop.f32.mrb[0].mxu0
  %1421 = vmatprep.mubr.f32.mxu0 0.0
  %1422 = vmatmul.mubr.f32.gmra.mrb[0].mxu0 %v1104
  %v1423 = vpop.f32.mrb[0].mxu0
  %v1424 = vadd.f32 %v1007, %v1423
  %v1425 = vpop.f32.mrb[0].mxu0
  %1426 = vmatprep.mubr.f32.mxu0 0.0
  %1427 = vmatmul.mubr.f32.gmra.mrb[0].mxu0 %v1107
  %v1428 = vpop.f32.mrb[0].mxu0
  %v1429 = vadd.f32 %v1007, %v1428
  %v1430 = vpop.f32.mrb[0].mxu0
  %1431 = vmatprep.mubr.f32.mxu0 0.0
  %1432 = vmatmul.mubr.f32.gmra.mrb[0].mxu0 %v1110
  %v1433 = vpop.f32.mrb[0].mxu0
  %v1434 = vadd.f32 %v1007, %v1433
  %v1435 = vpop.f32.mrb[0].mxu0
  %1436 = vmatprep.mubr.f32.mxu0 0.0
  %1437 = vmatmul.mubr.f32.gmra.mrb[0].mxu0 %v1113
  %v1438 = vpop.f32.mrb[0].mxu0
  %v1439 = vadd.f32 %v1007, %v1438
  %v1440 = vpop.f32.mrb[0].mxu0
  %1441 = vmatprep.mubr.f32.mxu0 0.0
  %1442 = vmatmul.mubr.f32.gmra.mrb[0].mxu0 %v1116
  %v1443 = vpop.f32.mrb[0].mxu0
  %v1444 = vadd.f32 %v1007, %v1443
  %v1445 = vpop.f32.mrb[0].mxu0
  %1446 = vmatprep.mubr.f32.mxu0 0.0
  %1447 = vmatmul.mubr.f32.gmra.mrb[0].mxu0 %v1119
  %v1448 = vpop.f32.mrb[0].mxu0
  %v1449 = vadd.f32 %v1007, %v1448
  %v1450 = vpop.f32.mrb[0].mxu0
  %1451 = vmatprep.mubr.f32.mxu0 0.0
  %1452 = vmatmul.mubr.f32.gmra.mrb[0].mxu0 %v1122
  %v1453 = vpop.f32.mrb[0].mxu0
  %v1454 = vadd.f32 %v1007, %v1453
  %v1455 = vpop.f32.mrb[0].mxu0
  %1456 = vmatprep.mubr.f32.mxu0 0.0
  %1457 = vmatmul.mubr.f32.gmra.mrb[0].mxu0 %v1125
  %v1458 = vpop.f32.mrb[0].mxu0
  %v1459 = vadd.f32 %v1007, %v1458
  %v1460 = vpop.f32.mrb[0].mxu0
  %1461 = vmatprep.mubr.f32.mxu0 0.0
  %1462 = vmatmul.mubr.f32.gmra.mrb[0].mxu0 %v1128
  %v1463 = vpop.f32.mrb[0].mxu0
  %v1464 = vadd.f32 %v1007, %v1463
  %v1465 = vpop.f32.mrb[0].mxu0
  %1466 = vmatprep.mubr.f32.mxu0 0.0
  %1467 = vmatmul.mubr.f32.gmra.mrb[0].mxu0 %v1131
  %v1468 = vpop.f32.mrb[0].mxu0
  %v1469 = vadd.f32 %v1007, %v1468
  %v1470 = vpop.f32.mrb[0].mxu0
  %1471 = vmatprep.mubr.f32.mxu0 0.0
  %1472 = vmatmul.mubr.f32.gmra.mrb[0].mxu0 %v1134
  %v1473 = vpop.f32.mrb[0].mxu0
  %v1474 = vadd.f32 %v1007, %v1473
  %v1475 = vpop.f32.mrb[0].mxu0
  %1476 = vmatprep.mubr.f32.mxu0 0.0
  %1477 = vmatmul.mubr.f32.gmra.mrb[0].mxu0 %v1137
  %v1478 = vpop.f32.mrb[0].mxu0
  %v1479 = vadd.f32 %v1007, %v1478
  %v1480 = vpop.f32.mrb[0].mxu0
  %1481 = vmatprep.mubr.f32.mxu0 0.0
  %1482 = vmatmul.mubr.f32.gmra.mrb[0].mxu0 %v1140
  %v1483 = vpop.f32.mrb[0].mxu0
  %v1484 = vadd.f32 %v1007, %v1483
  %v1485 = vpop.f32.mrb[0].mxu0
  %1486 = vmatprep.mubr.f32.mxu0 0.0
  %1487 = vmatmul.mubr.f32.gmra.mrb[0].mxu0 %v1143
  %v1488 = vpop.f32.mrb[0].mxu0
  %v1489 = vadd.f32 %v1007, %v1488
  %v1490 = vpop.f32.mrb[0].mxu0
  %1491 = vmatprep.mubr.f32.mxu0 0.0
  %1492 = vmatmul.mubr.f32.gmra.mrb[0].mxu0 %v1146
  %v1493 = vpop.f32.mrb[0].mxu0
  %v1494 = vadd.f32 %v1007, %v1493
  %v1495 = vpop.f32.mrb[0].mxu0
  %1496 = vmatprep.mubr.f32.mxu0 0.0
  %1497 = vmatmul.mubr.f32.gmra.mrb[0].mxu0 %v1149
  %v1498 = vpop.f32.mrb[0].mxu0
  %v1499 = vadd.f32 %v1007, %v1498
  %v1500 = vpop.f32.mrb[0].mxu0
  %1501 = vmatprep.mubr.f32.mxu0 0.0
  %1502 = vmatmul.mubr.f32.gmra.mrb[0].mxu0 %v1152
  %v1503 = vpop.f32.mrb[0].mxu0
  %v1504 = vadd.f32 %v1007, %v1503
  %v1505 = vpop.f32.mrb[0].mxu0
  %1506 = vmatprep.mubr.f32.mxu0 0.0
  %1507 = vmatmul.mubr.f32.gmra.mrb[0].mxu0 %v1155
  %v1508 = vpop.f32.mrb[0].mxu0
  %v1509 = vadd.f32 %v1007, %v1508
  %v1510 = vpop.f32.mrb[0].mxu0
  %1511 = vmatprep.mubr.f32.mxu0 0.0
  %1512 = vmatmul.mubr.f32.gmra.mrb[0].mxu0 %v1158
  %v1513 = vpop.f32.mrb[0].mxu0
  %v1514 = vadd.f32 %v1007, %v1513
  %v1515 = vpop.f32.mrb[0].mxu0
  %1516 = vmatprep.mubr.f32.mxu0 0.0
  %1517 = vmatmul.mubr.f32.gmra.mrb[0].mxu0 %v1161
  %v1518 = vpop.f32.mrb[0].mxu0
  %v1519 = vadd.f32 %v1007, %v1518
  %v1520 = vpop.f32.mrb[0].mxu0
  %1521 = vmatprep.mubr.f32.mxu0 0.0
  %1522 = vmatmul.mubr.f32.gmra.mrb[0].mxu0 %v1164
  %v1523 = vpop.f32.mrb[0].mxu0
  %v1524 = vadd.f32 %v1007, %v1523
  %v1525 = vpop.f32.mrb[0].mxu0
  %1526 = vmatprep.mubr.f32.mxu0 0.0
  %1527 = vmatmul.mubr.f32.gmra.mrb[0].mxu0 %v1167
  %v1528 = vpop.f32.mrb[0].mxu0
  %v1529 = vadd.f32 %v1007, %v1528
  %v1530 = vpop.f32.mrb[0].mxu0
  %1531 = vmatprep.mubr.f32.mxu0 0.0
  %1532 = vmatmul.mubr.f32.gmra.mrb[0].mxu0 %v1170
  %v1533 = vpop.f32.mrb[0].mxu0
  %v1534 = vadd.f32 %v1007, %v1533
  %v1535 = vpop.f32.mrb[0].mxu0
  %1536 = vmatprep.mubr.f32.mxu0 0.0
  %1537 = vmatmul.mubr.f32.gmra.mrb[0].mxu0 %v1173
  %v1538 = vpop.f32.mrb[0].mxu0
  %v1539 = vadd.f32 %v1007, %v1538
  %v1540 = vpop.f32.mrb[0].mxu0
  %1541 = vmatprep.mubr.f32.mxu0 0.0
  %1542 = vmatmul.mubr.f32.gmra.mrb[0].mxu0 %v1176
  %v1543 = vpop.f32.mrb[0].mxu0
  %v1544 = vadd.f32 %v1007, %v1543
  %v1545 = vpop.f32.mrb[0].mxu0
  %1546 = vmatprep.mubr.f32.mxu0 0.0
  %1547 = vmatmul.mubr.f32.gmra.mrb[0].mxu0 %v1179
  %v1548 = vpop.f32.mrb[0].mxu0
  %v1549 = vadd.f32 %v1007, %v1548
  %v1550 = vpop.f32.mrb[0].mxu0
  %1551 = vmatprep.mubr.f32.mxu0 0.0
  %1552 = vmatmul.mubr.f32.gmra.mrb[0].mxu0 %v1182
  %v1553 = vpop.f32.mrb[0].mxu0
  %v1554 = vadd.f32 %v1007, %v1553
  %v1555 = vpop.f32.mrb[0].mxu0
  %1556 = vmatprep.mubr.f32.mxu0 0.0
  %1557 = vmatmul.mubr.f32.gmra.mrb[0].mxu0 %v1185
  %v1558 = vpop.f32.mrb[0].mxu0
  %v1559 = vadd.f32 %v1007, %v1558
  %v1560 = vpop.f32.mrb[0].mxu0
  %1561 = vmatprep.mubr.f32.mxu0 0.0
  %1562 = vmatmul.mubr.f32.gmra.mrb[0].mxu0 %v1188
  %v1563 = vpop.f32.mrb[0].mxu0
  %v1564 = vadd.f32 %v1007, %v1563
  %v1565 = vpop.f32.mrb[0].mxu0
  %1566 = vmatprep.mubr.f32.mxu0 0.0
  %1567 = vmatmul.mubr.f32.gmra.mrb[0].mxu0 %v1191
  %v1568 = vpop.f32.mrb[0].mxu0
  %v1569 = vadd.f32 %v1007, %v1568
  %v1570 = vpop.f32.mrb[0].mxu0
  %1571 = vmatprep.mubr.f32.mxu0 0.0
  %1572 = vmatmul.mubr.f32.gmra.mrb[0].mxu0 %v1194
  %v1573 = vpop.f32.mrb[0].mxu0
  %v1574 = vadd.f32 %v1007, %v1573
  %v1575 = vpop.f32.mrb[0].mxu0
  %1576 = vmatprep.mubr.f32.mxu0 0.0
  %1577 = vmatmul.mubr.f32.gmra.mrb[0].mxu0 %v1197
  %v1578 = vpop.f32.mrb[0].mxu0
  %v1579 = vadd.f32 %v1007, %v1578
  %v1580 = vpop.f32.mrb[0].mxu0
  %1581 = vmatprep.mubr.f32.mxu0 0.0
  %1582 = vmatmul.mubr.f32.gmra.mrb[0].mxu0 %v1200
  %v1583 = vpop.f32.mrb[0].mxu0
  %v1584 = vadd.f32 %v1007, %v1583
  %v1585 = vpop.f32.mrb[0].mxu0
  %1586 = vdwg.mxu0
  %vm1587 = vcmask 7168
  %1588 = vst.msk [vmem:[%s5] sm:$0xff] %vm1587, %v1269
  %1589 = vst.msk [vmem:[%s5 + $0x8] sm:$0xff] %vm1587, %v1274
  %1590 = vst.msk [vmem:[%s5 + $0x10] sm:$0xff] %vm1587, %v1279
  %1591 = vst.msk [vmem:[%s5 + $0x18] sm:$0xff] %vm1587, %v1284
  %1592 = vst.msk [vmem:[%s5 + $0x20] sm:$0xff] %vm1587, %v1289
  %1593 = vst.msk [vmem:[%s5 + $0x28] sm:$0xff] %vm1587, %v1294
  %1594 = vst.msk [vmem:[%s5 + $0x30] sm:$0xff] %vm1587, %v1299
  %1595 = vst.msk [vmem:[%s5 + $0x38] sm:$0xff] %vm1587, %v1304
  %1596 = vst.msk [vmem:[%s5 + $0x40] sm:$0xff] %vm1587, %v1309
  %1597 = vst.msk [vmem:[%s5 + $0x48] sm:$0xff] %vm1587, %v1314
  %1598 = vst.msk [vmem:[%s5 + $0x50] sm:$0xff] %vm1587, %v1319
  %1599 = vst.msk [vmem:[%s5 + $0x58] sm:$0xff] %vm1587, %v1324
  %1600 = vst.msk [vmem:[%s5 + $0x60] sm:$0xff] %vm1587, %v1329
  %1601 = vst.msk [vmem:[%s5 + $0x68] sm:$0xff] %vm1587, %v1334
  %1602 = vst.msk [vmem:[%s5 + $0x70] sm:$0xff] %vm1587, %v1339
  %1603 = vst.msk [vmem:[%s5 + $0x78] sm:$0xff] %vm1587, %v1344
  %1604 = vst.msk [vmem:[%s5 + $0x80] sm:$0xff] %vm1587, %v1349
  %1605 = vst.msk [vmem:[%s5 + $0x88] sm:$0xff] %vm1587, %v1354
  %1606 = vst.msk [vmem:[%s5 + $0x90] sm:$0xff] %vm1587, %v1359
  %1607 = vst.msk [vmem:[%s5 + $0x98] sm:$0xff] %vm1587, %v1364
  %1608 = vst.msk [vmem:[%s5 + $0xa0] sm:$0xff] %vm1587, %v1369
  %1609 = vst.msk [vmem:[%s5 + $0xa8] sm:$0xff] %vm1587, %v1374
  %1610 = vst.msk [vmem:[%s5 + $0xb0] sm:$0xff] %vm1587, %v1379
  %1611 = vst.msk [vmem:[%s5 + $0xb8] sm:$0xff] %vm1587, %v1384
  %1612 = vst.msk [vmem:[%s5 + $0xc0] sm:$0xff] %vm1587, %v1389
  %1613 = vst.msk [vmem:[%s5 + $0xc8] sm:$0xff] %vm1587, %v1394
  %1614 = vst.msk [vmem:[%s5 + $0xd0] sm:$0xff] %vm1587, %v1399
  %1615 = vst.msk [vmem:[%s5 + $0xd8] sm:$0xff] %vm1587, %v1404
  %1616 = vst.msk [vmem:[%s5 + $0xe0] sm:$0xff] %vm1587, %v1409
  %1617 = vst.msk [vmem:[%s5 + $0xe8] sm:$0xff] %vm1587, %v1414
  %1618 = vst.msk [vmem:[%s5 + $0xf0] sm:$0xff] %vm1587, %v1419
  %1619 = vst.msk [vmem:[%s5 + $0xf8] sm:$0xff] %vm1587, %v1424
  %1620 = vst.msk [vmem:[%s5 + $0x100] sm:$0xff] %vm1587, %v1429
  %1621 = vst.msk [vmem:[%s5 + $0x108] sm:$0xff] %vm1587, %v1434
  %1622 = vst.msk [vmem:[%s5 + $0x110] sm:$0xff] %vm1587, %v1439
  %1623 = vst.msk [vmem:[%s5 + $0x118] sm:$0xff] %vm1587, %v1444
  %1624 = vst.msk [vmem:[%s5 + $0x120] sm:$0xff] %vm1587, %v1449
  %1625 = vst.msk [vmem:[%s5 + $0x128] sm:$0xff] %vm1587, %v1454
  %1626 = vst.msk [vmem:[%s5 + $0x130] sm:$0xff] %vm1587, %v1459
  %1627 = vst.msk [vmem:[%s5 + $0x138] sm:$0xff] %vm1587, %v1464
  %1628 = vst.msk [vmem:[%s5 + $0x140] sm:$0xff] %vm1587, %v1469
  %1629 = vst.msk [vmem:[%s5 + $0x148] sm:$0xff] %vm1587, %v1474
  %1630 = vst.msk [vmem:[%s5 + $0x150] sm:$0xff] %vm1587, %v1479
  %1631 = vst.msk [vmem:[%s5 + $0x158] sm:$0xff] %vm1587, %v1484
  %1632 = vst.msk [vmem:[%s5 + $0x160] sm:$0xff] %vm1587, %v1489
  %1633 = vst.msk [vmem:[%s5 + $0x168] sm:$0xff] %vm1587, %v1494
  %1634 = vst.msk [vmem:[%s5 + $0x170] sm:$0xff] %vm1587, %v1499
  %1635 = vst.msk [vmem:[%s5 + $0x178] sm:$0xff] %vm1587, %v1504
  %1636 = vst.msk [vmem:[%s5 + $0x180] sm:$0xff] %vm1587, %v1509
  %1637 = vst.msk [vmem:[%s5 + $0x188] sm:$0xff] %vm1587, %v1514
  %1638 = vst.msk [vmem:[%s5 + $0x190] sm:$0xff] %vm1587, %v1519
  %1639 = vst.msk [vmem:[%s5 + $0x198] sm:$0xff] %vm1587, %v1524
  %1640 = vst.msk [vmem:[%s5 + $0x1a0] sm:$0xff] %vm1587, %v1529
  %1641 = vst.msk [vmem:[%s5 + $0x1a8] sm:$0xff] %vm1587, %v1534
  %1642 = vst.msk [vmem:[%s5 + $0x1b0] sm:$0xff] %vm1587, %v1539
  %1643 = vst.msk [vmem:[%s5 + $0x1b8] sm:$0xff] %vm1587, %v1544
  %1644 = vst.msk [vmem:[%s5 + $0x1c0] sm:$0xff] %vm1587, %v1549
  %1645 = vst.msk [vmem:[%s5 + $0x1c8] sm:$0xff] %vm1587, %v1554
  %1646 = vst.msk [vmem:[%s5 + $0x1d0] sm:$0xff] %vm1587, %v1559
  %1647 = vst.msk [vmem:[%s5 + $0x1d8] sm:$0xff] %vm1587, %v1564
  %1648 = vst.msk [vmem:[%s5 + $0x1e0] sm:$0xff] %vm1587, %v1569
  %1649 = vst.msk [vmem:[%s5 + $0x1e8] sm:$0xff] %vm1587, %v1574
  %1650 = vst.msk [vmem:[%s5 + $0x1f0] sm:$0xff] %vm1587, %v1579
  %1651 = vst.msk [vmem:[%s5 + $0x1f8] sm:$0xff] %vm1587, %v1584
  // Predicated region
  $region22: #{fno2d_forward.15} parent=0 // pred_check
    _
  $region23: #{fno2d_forward.15} parent=0 // pred_check_branch
    %1653 = sbr.rel (0) target = $region25
  $region24: #{fno2d_forward.15} parent=0 // pred_region
    _
  $region25: #{fno2d_forward.15} parent=0 // pred_fallthru
    _
  // Predicated region
  $region26: #{fno2d_forward.15} parent=0 // pred_check
    _
  $region27: #{fno2d_forward.15} parent=0 // pred_check_branch
    %1655 = sbr.rel (0) target = $region29
  $region28: #{fno2d_forward.15} parent=0 // pred_region
    _
  $region29: #{fno2d_forward.15} parent=0 // pred_fallthru
    _

</llo_original>
